<compile_context>
chip_gen: v6e
topology: v6e:2x2x1
jax: 0.10.0
libtpu: 0.0.40
codegen_flags: <defaults>
</compile_context>

<pallas_src>
import jax
import jax.numpy as jnp
from jax.experimental import pallas as pl
from jax.experimental.pallas import tpu as pltpu

BOARD = (6, 7)            # (rows, cols) -> policy has 7 actions
CIN = 128                 # fixed by the module (Conv2d(128, ...))
CH_V = 3                  # value conv channels
CH_P = 32                 # policy conv channels
CH_TOT = CH_V + CH_P      # 35 real conv output channels
CONV_N = 128              # conv output lanes padded to 128 (lane-dense matmul)
VALUE_HIDDEN = 32
N_ACT = BOARD[1]          # 7 policy logits
NO = 40                   # packed FC outputs: [value 0:32 | policy 32:39 | pad]
BN_EPS = 1e-5


# ------------------------------ Pallas kernel --------------------------------

def _output_layer_kernel(x_ref, wconv_ref, gamma_ref, beta_ref,
                         wfc_ref, bfc_ref, wv2_ref, bv2_ref,
                         p_ref, v_out_ref):
    """Fused 1x1-conv + BN + ReLU (both heads) + both FC heads.

    x_ref:      (HW*B, 128) bf16  channels-last slab, rows ordered hw-major
    wconv_ref:  (128, 128)  bf16  [value | policy | zero-pad] 1x1-conv weights
    gamma/beta: (1, 128)    f32   BN affine, packed to the same 128 lanes
    wfc_ref:    (HW, 128, NO) bf16  direct (hw, channel) FC weights
    bfc_ref:    (1, NO)     f32   [bv_fc1 | bp_fc | pad]
    wv2/bv2:    (32, 1)/(1, 1) f32 value head second FC
    outputs:    p (B, 7) softmax policy, v (B, 1) tanh value
    """
    n_rows = x_ref.shape[0]           # R = HW * B
    n_batch = p_ref.shape[0]          # B
    hw_total = n_rows // n_batch      # HW

    # --- both 1x1 convs as one lane-dense bf16 MXU matmul (f32 accumulate) ---
    y = jnp.dot(x_ref[...], wconv_ref[...], preferred_element_type=jnp.float32)

    # --- single-pass BatchNorm (train-mode batch stats); moments on the XLU ---
    inv_n = 1.0 / n_rows
    s1 = jnp.sum(y, axis=0, keepdims=True)
    s2 = jnp.sum(y * y, axis=0, keepdims=True)
    mean = s1 * inv_n
    var = s2 * inv_n - mean * mean
    scale = gamma_ref[...] * jax.lax.rsqrt(var + BN_EPS)
    shift = beta_ref[...] - mean * scale
    act = jnp.maximum(y * scale + shift, 0.0)   # (R, 128) f32; lanes >= 35 are 0

    # --- FC heads: direct (hw, channel) contraction, no masks / no selector ---
    # Rows are hw-major, so each spatial position's B rows are contiguous.
    # Accumulate HW static-slice (B,128)@(128,NO) bf16 matmuls in f32.
    fc1 = jnp.zeros((n_batch, NO), jnp.float32)
    for hw in range(hw_total):
        rows = act[hw * n_batch:(hw + 1) * n_batch, :].astype(jnp.bfloat16)
        fc1 = fc1 + jnp.dot(rows, wfc_ref[hw],
                            preferred_element_type=jnp.float32)
    fc1 = fc1 + bfc_ref[...]

    # --- value head: ReLU -> FC -> tanh (tiny, f32) ---
    vh = jnp.maximum(fc1[:, 0:VALUE_HIDDEN], 0.0)
    v = jnp.dot(vh, wv2_ref[...], preferred_element_type=jnp.float32) + bv2_ref[...]
    v_out_ref[...] = jnp.tanh(v)

    # --- policy head: softmax with EUP reciprocal ---
    logits = fc1[:, VALUE_HIDDEN:VALUE_HIDDEN + N_ACT]
    m = jnp.max(logits, axis=1, keepdims=True)
    e = jnp.exp(logits - m)
    denom = jnp.sum(e, axis=1, keepdims=True)
    p_ref[...] = e * pl.reciprocal(denom, approx=True)


# -------------------------------- wrapper -------------------------------------

def output_layer_forward(x_nchw, kp):
    """x_nchw: (B, 128, H, W) f32 -> (p: (B, W), v: (B, 1))."""
    B, C, H, W = x_nchw.shape
    HW = H * W
    R = HW * B
    vmem = pl.BlockSpec(memory_space=pltpu.MemorySpace.VMEM)

    # Input glue: NCHW -> hw-major, channels-last rows (row = (h*W+w)*B + b).
    # bf16 halves the dominant HBM->VMEM DMA; the MXU accumulates in f32.
    x2d = jnp.transpose(x_nchw, (2, 3, 0, 1)).reshape(R, C).astype(jnp.bfloat16)

    # Explicit VMEM budget (v7x has only 64 MiB physical): never below the
    # 32 MiB default, grow with the estimated resident working set.
    need = (R * C * 2                # x2d (bf16)
            + 2 * R * CONV_N * 4     # y + act (f32)
            + HW * CONV_N * NO * 2   # wfc (bf16, lane-padded)
            + CONV_N * CONV_N * 2    # wconv
            + (1 << 20))             # small params / outputs / headroom
    vmem_limit = int(min(64 * 1024 * 1024, max(32 * 1024 * 1024, 2 * need)))

    p, v = pl.pallas_call(
        _output_layer_kernel,
        out_shape=(
            jax.ShapeDtypeStruct((B, W), jnp.float32),
            jax.ShapeDtypeStruct((B, 1), jnp.float32),
        ),
        in_specs=[vmem] * 8,
        out_specs=(vmem, vmem),
        compiler_params=pltpu.CompilerParams(vmem_limit_bytes=vmem_limit),
    )(x2d,
      kp["wconv"], kp["gamma"], kp["beta"],
      kp["wfc"], kp["bfc"], kp["wv_fc2"], kp["bv_fc2"])
    return p, v


# --------------------------- parameter handling --------------------------------

def init_params(key):
    """PyTorch-style (uniform +-1/sqrt(fan_in)) init, module layout."""
    H, W = BOARD
    HW = H * W
    ks = jax.random.split(key, 5)

    def lin(k, fan_in, fan_out):
        bound = 1.0 / float(fan_in) ** 0.5
        kw, kb = jax.random.split(k)
        w = jax.random.uniform(kw, (fan_in, fan_out), jnp.float32, -bound, bound)
        b = jax.random.uniform(kb, (1, fan_out), jnp.float32, -bound, bound)
        return w, b

    wv_conv, bv_conv = lin(ks[0], CIN, CH_V)            # value_conv (1x1)
    wp_conv, bp_conv = lin(ks[1], CIN, CH_P)            # policy_conv (1x1)
    wv_fc1, bv_fc1 = lin(ks[2], CH_V * HW, VALUE_HIDDEN)
    wv_fc2, bv_fc2 = lin(ks[3], VALUE_HIDDEN, 1)
    wp_fc, bp_fc = lin(ks[4], CH_P * HW, W)

    return dict(
        wv_conv=wv_conv, bv_conv=bv_conv,
        gv=jnp.ones((1, CH_V), jnp.float32), betav=jnp.zeros((1, CH_V), jnp.float32),
        wp_conv=wp_conv, bp_conv=bp_conv,
        gp=jnp.ones((1, CH_P), jnp.float32), betap=jnp.zeros((1, CH_P), jnp.float32),
        wv_fc1=wv_fc1, bv_fc1=bv_fc1, wv_fc2=wv_fc2, bv_fc2=bv_fc2,
        wp_fc=wp_fc, bp_fc=bp_fc,
    )


def prepare_kernel_params(params):
    """One-time repack of module weights into kernel-ready, fused layouts."""
    H, W = BOARD
    HW = H * W
    f32 = jnp.float32

    # Combined, 128-lane-padded 1x1-conv weight and BN affine.
    # NOTE: the conv bias is dropped — train-mode BatchNorm subtracts the
    # per-channel batch mean immediately after, so it cancels exactly.
    wconv = jnp.zeros((CIN, CONV_N), f32)
    wconv = wconv.at[:, 0:CH_V].set(params["wv_conv"])
    wconv = wconv.at[:, CH_V:CH_TOT].set(params["wp_conv"])
    gamma = jnp.zeros((1, CONV_N), f32)
    gamma = gamma.at[:, 0:CH_V].set(params["gv"]).at[:, CH_V:CH_TOT].set(params["gp"])
    beta = jnp.zeros((1, CONV_N), f32)
    beta = beta.at[:, 0:CH_V].set(params["betav"]).at[:, CH_V:CH_TOT].set(params["betap"])

    # Direct (hw, channel)-contraction FC weight, K padded to the full 128 conv
    # lanes (zero rows for channels 35..127):  wfc[hw, c, o].
    # PyTorch flattens channel-major (index = c*HW + hw), so remap rows once here.
    wv3 = params["wv_fc1"].reshape(CH_V, HW, VALUE_HIDDEN)   # [c, hw, o]
    wp3 = params["wp_fc"].reshape(CH_P, HW, N_ACT)           # [c, hw, o]
    wfc = jnp.zeros((HW, CONV_N, NO), f32)
    wfc = wfc.at[:, 0:CH_V, 0:VALUE_HIDDEN].set(jnp.transpose(wv3, (1, 0, 2)))
    wfc = wfc.at[:, CH_V:CH_TOT, VALUE_HIDDEN:VALUE_HIDDEN + N_ACT].set(
        jnp.transpose(wp3, (1, 0, 2)))

    bfc = jnp.zeros((1, NO), f32)
    bfc = bfc.at[:, 0:VALUE_HIDDEN].set(params["bv_fc1"])
    bfc = bfc.at[:, VALUE_HIDDEN:VALUE_HIDDEN + N_ACT].set(params["bp_fc"])

    return dict(wconv=wconv.astype(jnp.bfloat16), gamma=gamma, beta=beta,
                wfc=wfc.astype(jnp.bfloat16), bfc=bfc,
                wv_fc2=params["wv_fc2"], bv_fc2=params["bv_fc2"])


# ----------------------------- pure-JAX reference -----------------------------

def reference_forward(x, params):
    B = x.shape[0]
    hp = jax.lax.Precision.HIGHEST

    def head_conv(x, w, b, g, beta):
        y = jnp.einsum("bihw,io->bohw", x, w, precision=hp) + b.reshape(1, -1, 1, 1)
        mean = jnp.mean(y, axis=(0, 2, 3), keepdims=True)
        var = jnp.mean((y - mean) ** 2, axis=(0, 2, 3), keepdims=True)
        y_hat = (y - mean) / jnp.sqrt(var + BN_EPS)
        return jnp.maximum(g.reshape(1, -1, 1, 1) * y_hat + beta.reshape(1, -1, 1, 1), 0.0)

    v = head_conv(x, params["wv_conv"], params["bv_conv"], params["gv"], params["betav"]).reshape(B, -1)
    v = jnp.maximum(jnp.dot(v, params["wv_fc1"], precision=hp) + params["bv_fc1"], 0.0)
    v = jnp.tanh(jnp.dot(v, params["wv_fc2"], precision=hp) + params["bv_fc2"])

    p = head_conv(x, params["wp_conv"], params["bp_conv"], params["gp"], params["betap"]).reshape(B, -1)
    logits = jnp.dot(p, params["wp_fc"], precision=hp) + params["bp_fc"]
    p = jax.nn.softmax(logits, axis=1)
    return p, v


# ----------------------------------- main --------------------------------------

if __name__ == "__main__":
    key = jax.random.PRNGKey(0)
    k_x, k_p = jax.random.split(key)

    B, H, W = 2, BOARD[0], BOARD[1]
    x = jax.random.normal(k_x, (B, CIN, H, W), dtype=jnp.float32)
    params = init_params(k_p)
    kparams = prepare_kernel_params(params)

    p, v = jax.jit(output_layer_forward)(x, kparams)
    p, v = jax.block_until_ready((p, v))

    p_ref, v_ref = reference_forward(x, params)

    assert p.shape == (B, W) and v.shape == (B, 1)
    # bf16 conv / FC matmuls (f32 accumulation) -> ~1e-2 absolute agreement.
    assert jnp.allclose(p, p_ref, rtol=1e-2, atol=1e-2), "policy mismatch"
    assert jnp.allclose(v, v_ref, rtol=1e-2, atol=1e-2), "value mismatch"
    # approx reciprocal in the softmax -> allow ~1e-3 normalization slack
    assert jnp.allclose(jnp.sum(p, axis=1), 1.0, atol=2e-3), "policy not normalized"

    print("KERNEL_OK")
</pallas_src>

<mosaic_0001>
module attributes {stable_mosaic.version = 11 : i64} {
  func.func @_output_layer_kernel(%arg0: memref<84x128xbf16, #tpu.memory_space<vmem>>, %arg1: memref<128x128xbf16, #tpu.memory_space<vmem>>, %arg2: memref<1x128xf32, #tpu.memory_space<vmem>>, %arg3: memref<1x128xf32, #tpu.memory_space<vmem>>, %arg4: memref<42x128x40xbf16, #tpu.memory_space<vmem>>, %arg5: memref<1x40xf32, #tpu.memory_space<vmem>>, %arg6: memref<32x1xf32, #tpu.memory_space<vmem>>, %arg7: memref<1x1xf32, #tpu.memory_space<vmem>>, %arg8: memref<2x7xf32, #tpu.memory_space<vmem>>, %arg9: memref<2x1xf32, #tpu.memory_space<vmem>>) attributes {dimension_semantics = [], scalar_prefetch = 0 : i64, scratch_operands = 0 : i64, tpu.core_type = #tpu.core_type<tc>} {
    %c0 = arith.constant 0 : index
    %c0_0 = arith.constant 0 : index
    %0 = vector.load %arg0[%c0, %c0_0] : memref<84x128xbf16, #tpu.memory_space<vmem>>, vector<84x128xbf16>
    %c0_1 = arith.constant 0 : index
    %c0_2 = arith.constant 0 : index
    %1 = vector.load %arg1[%c0_1, %c0_2] : memref<128x128xbf16, #tpu.memory_space<vmem>>, vector<128x128xbf16>
    %cst = arith.constant dense<0.000000e+00> : vector<84x128xf32>
    %2 = tpu.matmul %0, %1, %cst {dimension_numbers = #tpu.dot_dimension_numbers<[1], [0], [0], [1], [0, 0, 1, 1], [], []>} : vector<84x128xbf16>, vector<128x128xbf16>, vector<84x128xf32> -> vector<84x128xf32>
    %cst_3 = arith.constant dense<0.000000e+00> : vector<128xf32>
    %3 = vector.multi_reduction <add>, %2, %cst_3 [0] : vector<84x128xf32> to vector<128xf32>
    %4 = vector.shape_cast %3 : vector<128xf32> to vector<1x128xf32>
    %5 = arith.mulf %2, %2 : vector<84x128xf32>
    %cst_4 = arith.constant dense<0.000000e+00> : vector<128xf32>
    %6 = vector.multi_reduction <add>, %5, %cst_4 [0] : vector<84x128xf32> to vector<128xf32>
    %7 = vector.shape_cast %6 : vector<128xf32> to vector<1x128xf32>
    %cst_5 = arith.constant 0.0119047621 : f32
    %8 = vector.broadcast %cst_5 : f32 to vector<1x128xf32>
    %9 = arith.mulf %4, %8 : vector<1x128xf32>
    %cst_6 = arith.constant 0.0119047621 : f32
    %10 = vector.broadcast %cst_6 : f32 to vector<1x128xf32>
    %11 = arith.mulf %7, %10 : vector<1x128xf32>
    %12 = arith.mulf %9, %9 : vector<1x128xf32>
    %13 = arith.subf %11, %12 : vector<1x128xf32>
    %c0_7 = arith.constant 0 : index
    %c0_8 = arith.constant 0 : index
    %14 = vector.load %arg2[%c0_7, %c0_8] : memref<1x128xf32, #tpu.memory_space<vmem>>, vector<1x128xf32>
    %cst_9 = arith.constant 9.99999974E-6 : f32
    %15 = vector.broadcast %cst_9 : f32 to vector<1x128xf32>
    %16 = arith.addf %13, %15 : vector<1x128xf32>
    %17 = math.rsqrt %16 : vector<1x128xf32>
    %18 = arith.mulf %14, %17 : vector<1x128xf32>
    %c0_10 = arith.constant 0 : index
    %c0_11 = arith.constant 0 : index
    %19 = vector.load %arg3[%c0_10, %c0_11] : memref<1x128xf32, #tpu.memory_space<vmem>>, vector<1x128xf32>
    %20 = arith.mulf %9, %18 : vector<1x128xf32>
    %21 = arith.subf %19, %20 : vector<1x128xf32>
    %22 = vector.broadcast %18 : vector<1x128xf32> to vector<84x128xf32>
    %23 = arith.mulf %2, %22 : vector<84x128xf32>
    %24 = vector.broadcast %21 : vector<1x128xf32> to vector<84x128xf32>
    %25 = arith.addf %23, %24 : vector<84x128xf32>
    %cst_12 = arith.constant 0.000000e+00 : f32
    %26 = vector.broadcast %cst_12 : f32 to vector<84x128xf32>
    %27 = arith.maximumf %25, %26 : vector<84x128xf32>
    %cst_13 = arith.constant 0.000000e+00 : f32
    %28 = vector.broadcast %cst_13 : f32 to vector<2x40xf32>
    %29 = vector.extract_strided_slice %27 {offsets = [0, 0], sizes = [2, 128], strides = [1, 1]} : vector<84x128xf32> to vector<2x128xf32>
    %30 = arith.truncf %29 : vector<2x128xf32> to vector<2x128xbf16>
    %c0_14 = arith.constant 0 : index
    %c0_15 = arith.constant 0 : index
    %c0_16 = arith.constant 0 : index
    %31 = vector.load %arg4[%c0_14, %c0_15, %c0_16] : memref<42x128x40xbf16, #tpu.memory_space<vmem>>, vector<1x128x40xbf16>
    %32 = vector.shape_cast %31 : vector<1x128x40xbf16> to vector<128x40xbf16>
    %cst_17 = arith.constant dense<0.000000e+00> : vector<2x40xf32>
    %33 = tpu.matmul %30, %32, %cst_17 {dimension_numbers = #tpu.dot_dimension_numbers<[1], [0], [0], [1], [0, 0, 1, 1], [], []>} : vector<2x128xbf16>, vector<128x40xbf16>, vector<2x40xf32> -> vector<2x40xf32>
    %34 = arith.addf %28, %33 : vector<2x40xf32>
    %35 = vector.extract_strided_slice %27 {offsets = [2, 0], sizes = [2, 128], strides = [1, 1]} : vector<84x128xf32> to vector<2x128xf32>
    %36 = arith.truncf %35 : vector<2x128xf32> to vector<2x128xbf16>
    %c1 = arith.constant 1 : index
    %c0_18 = arith.constant 0 : index
    %c0_19 = arith.constant 0 : index
    %37 = vector.load %arg4[%c1, %c0_18, %c0_19] : memref<42x128x40xbf16, #tpu.memory_space<vmem>>, vector<1x128x40xbf16>
    %38 = vector.shape_cast %37 : vector<1x128x40xbf16> to vector<128x40xbf16>
    %cst_20 = arith.constant dense<0.000000e+00> : vector<2x40xf32>
    %39 = tpu.matmul %36, %38, %cst_20 {dimension_numbers = #tpu.dot_dimension_numbers<[1], [0], [0], [1], [0, 0, 1, 1], [], []>} : vector<2x128xbf16>, vector<128x40xbf16>, vector<2x40xf32> -> vector<2x40xf32>
    %40 = arith.addf %34, %39 : vector<2x40xf32>
    %41 = vector.extract_strided_slice %27 {offsets = [4, 0], sizes = [2, 128], strides = [1, 1]} : vector<84x128xf32> to vector<2x128xf32>
    %42 = arith.truncf %41 : vector<2x128xf32> to vector<2x128xbf16>
    %c2 = arith.constant 2 : index
    %c0_21 = arith.constant 0 : index
    %c0_22 = arith.constant 0 : index
    %43 = vector.load %arg4[%c2, %c0_21, %c0_22] : memref<42x128x40xbf16, #tpu.memory_space<vmem>>, vector<1x128x40xbf16>
    %44 = vector.shape_cast %43 : vector<1x128x40xbf16> to vector<128x40xbf16>
    %cst_23 = arith.constant dense<0.000000e+00> : vector<2x40xf32>
    %45 = tpu.matmul %42, %44, %cst_23 {dimension_numbers = #tpu.dot_dimension_numbers<[1], [0], [0], [1], [0, 0, 1, 1], [], []>} : vector<2x128xbf16>, vector<128x40xbf16>, vector<2x40xf32> -> vector<2x40xf32>
    %46 = arith.addf %40, %45 : vector<2x40xf32>
    %47 = vector.extract_strided_slice %27 {offsets = [6, 0], sizes = [2, 128], strides = [1, 1]} : vector<84x128xf32> to vector<2x128xf32>
    %48 = arith.truncf %47 : vector<2x128xf32> to vector<2x128xbf16>
    %c3 = arith.constant 3 : index
    %c0_24 = arith.constant 0 : index
    %c0_25 = arith.constant 0 : index
    %49 = vector.load %arg4[%c3, %c0_24, %c0_25] : memref<42x128x40xbf16, #tpu.memory_space<vmem>>, vector<1x128x40xbf16>
    %50 = vector.shape_cast %49 : vector<1x128x40xbf16> to vector<128x40xbf16>
    %cst_26 = arith.constant dense<0.000000e+00> : vector<2x40xf32>
    %51 = tpu.matmul %48, %50, %cst_26 {dimension_numbers = #tpu.dot_dimension_numbers<[1], [0], [0], [1], [0, 0, 1, 1], [], []>} : vector<2x128xbf16>, vector<128x40xbf16>, vector<2x40xf32> -> vector<2x40xf32>
    %52 = arith.addf %46, %51 : vector<2x40xf32>
    %53 = vector.extract_strided_slice %27 {offsets = [8, 0], sizes = [2, 128], strides = [1, 1]} : vector<84x128xf32> to vector<2x128xf32>
    %54 = arith.truncf %53 : vector<2x128xf32> to vector<2x128xbf16>
    %c4 = arith.constant 4 : index
    %c0_27 = arith.constant 0 : index
    %c0_28 = arith.constant 0 : index
    %55 = vector.load %arg4[%c4, %c0_27, %c0_28] : memref<42x128x40xbf16, #tpu.memory_space<vmem>>, vector<1x128x40xbf16>
    %56 = vector.shape_cast %55 : vector<1x128x40xbf16> to vector<128x40xbf16>
    %cst_29 = arith.constant dense<0.000000e+00> : vector<2x40xf32>
    %57 = tpu.matmul %54, %56, %cst_29 {dimension_numbers = #tpu.dot_dimension_numbers<[1], [0], [0], [1], [0, 0, 1, 1], [], []>} : vector<2x128xbf16>, vector<128x40xbf16>, vector<2x40xf32> -> vector<2x40xf32>
    %58 = arith.addf %52, %57 : vector<2x40xf32>
    %59 = vector.extract_strided_slice %27 {offsets = [10, 0], sizes = [2, 128], strides = [1, 1]} : vector<84x128xf32> to vector<2x128xf32>
    %60 = arith.truncf %59 : vector<2x128xf32> to vector<2x128xbf16>
    %c5 = arith.constant 5 : index
    %c0_30 = arith.constant 0 : index
    %c0_31 = arith.constant 0 : index
    %61 = vector.load %arg4[%c5, %c0_30, %c0_31] : memref<42x128x40xbf16, #tpu.memory_space<vmem>>, vector<1x128x40xbf16>
    %62 = vector.shape_cast %61 : vector<1x128x40xbf16> to vector<128x40xbf16>
    %cst_32 = arith.constant dense<0.000000e+00> : vector<2x40xf32>
    %63 = tpu.matmul %60, %62, %cst_32 {dimension_numbers = #tpu.dot_dimension_numbers<[1], [0], [0], [1], [0, 0, 1, 1], [], []>} : vector<2x128xbf16>, vector<128x40xbf16>, vector<2x40xf32> -> vector<2x40xf32>
    %64 = arith.addf %58, %63 : vector<2x40xf32>
    %65 = vector.extract_strided_slice %27 {offsets = [12, 0], sizes = [2, 128], strides = [1, 1]} : vector<84x128xf32> to vector<2x128xf32>
    %66 = arith.truncf %65 : vector<2x128xf32> to vector<2x128xbf16>
    %c6 = arith.constant 6 : index
    %c0_33 = arith.constant 0 : index
    %c0_34 = arith.constant 0 : index
    %67 = vector.load %arg4[%c6, %c0_33, %c0_34] : memref<42x128x40xbf16, #tpu.memory_space<vmem>>, vector<1x128x40xbf16>
    %68 = vector.shape_cast %67 : vector<1x128x40xbf16> to vector<128x40xbf16>
    %cst_35 = arith.constant dense<0.000000e+00> : vector<2x40xf32>
    %69 = tpu.matmul %66, %68, %cst_35 {dimension_numbers = #tpu.dot_dimension_numbers<[1], [0], [0], [1], [0, 0, 1, 1], [], []>} : vector<2x128xbf16>, vector<128x40xbf16>, vector<2x40xf32> -> vector<2x40xf32>
    %70 = arith.addf %64, %69 : vector<2x40xf32>
    %71 = vector.extract_strided_slice %27 {offsets = [14, 0], sizes = [2, 128], strides = [1, 1]} : vector<84x128xf32> to vector<2x128xf32>
    %72 = arith.truncf %71 : vector<2x128xf32> to vector<2x128xbf16>
    %c7 = arith.constant 7 : index
    %c0_36 = arith.constant 0 : index
    %c0_37 = arith.constant 0 : index
    %73 = vector.load %arg4[%c7, %c0_36, %c0_37] : memref<42x128x40xbf16, #tpu.memory_space<vmem>>, vector<1x128x40xbf16>
    %74 = vector.shape_cast %73 : vector<1x128x40xbf16> to vector<128x40xbf16>
    %cst_38 = arith.constant dense<0.000000e+00> : vector<2x40xf32>
    %75 = tpu.matmul %72, %74, %cst_38 {dimension_numbers = #tpu.dot_dimension_numbers<[1], [0], [0], [1], [0, 0, 1, 1], [], []>} : vector<2x128xbf16>, vector<128x40xbf16>, vector<2x40xf32> -> vector<2x40xf32>
    %76 = arith.addf %70, %75 : vector<2x40xf32>
    %77 = vector.extract_strided_slice %27 {offsets = [16, 0], sizes = [2, 128], strides = [1, 1]} : vector<84x128xf32> to vector<2x128xf32>
    %78 = arith.truncf %77 : vector<2x128xf32> to vector<2x128xbf16>
    %c8 = arith.constant 8 : index
    %c0_39 = arith.constant 0 : index
    %c0_40 = arith.constant 0 : index
    %79 = vector.load %arg4[%c8, %c0_39, %c0_40] : memref<42x128x40xbf16, #tpu.memory_space<vmem>>, vector<1x128x40xbf16>
    %80 = vector.shape_cast %79 : vector<1x128x40xbf16> to vector<128x40xbf16>
    %cst_41 = arith.constant dense<0.000000e+00> : vector<2x40xf32>
    %81 = tpu.matmul %78, %80, %cst_41 {dimension_numbers = #tpu.dot_dimension_numbers<[1], [0], [0], [1], [0, 0, 1, 1], [], []>} : vector<2x128xbf16>, vector<128x40xbf16>, vector<2x40xf32> -> vector<2x40xf32>
    %82 = arith.addf %76, %81 : vector<2x40xf32>
    %83 = vector.extract_strided_slice %27 {offsets = [18, 0], sizes = [2, 128], strides = [1, 1]} : vector<84x128xf32> to vector<2x128xf32>
    %84 = arith.truncf %83 : vector<2x128xf32> to vector<2x128xbf16>
    %c9 = arith.constant 9 : index
    %c0_42 = arith.constant 0 : index
    %c0_43 = arith.constant 0 : index
    %85 = vector.load %arg4[%c9, %c0_42, %c0_43] : memref<42x128x40xbf16, #tpu.memory_space<vmem>>, vector<1x128x40xbf16>
    %86 = vector.shape_cast %85 : vector<1x128x40xbf16> to vector<128x40xbf16>
    %cst_44 = arith.constant dense<0.000000e+00> : vector<2x40xf32>
    %87 = tpu.matmul %84, %86, %cst_44 {dimension_numbers = #tpu.dot_dimension_numbers<[1], [0], [0], [1], [0, 0, 1, 1], [], []>} : vector<2x128xbf16>, vector<128x40xbf16>, vector<2x40xf32> -> vector<2x40xf32>
    %88 = arith.addf %82, %87 : vector<2x40xf32>
    %89 = vector.extract_strided_slice %27 {offsets = [20, 0], sizes = [2, 128], strides = [1, 1]} : vector<84x128xf32> to vector<2x128xf32>
    %90 = arith.truncf %89 : vector<2x128xf32> to vector<2x128xbf16>
    %c10 = arith.constant 10 : index
    %c0_45 = arith.constant 0 : index
    %c0_46 = arith.constant 0 : index
    %91 = vector.load %arg4[%c10, %c0_45, %c0_46] : memref<42x128x40xbf16, #tpu.memory_space<vmem>>, vector<1x128x40xbf16>
    %92 = vector.shape_cast %91 : vector<1x128x40xbf16> to vector<128x40xbf16>
    %cst_47 = arith.constant dense<0.000000e+00> : vector<2x40xf32>
    %93 = tpu.matmul %90, %92, %cst_47 {dimension_numbers = #tpu.dot_dimension_numbers<[1], [0], [0], [1], [0, 0, 1, 1], [], []>} : vector<2x128xbf16>, vector<128x40xbf16>, vector<2x40xf32> -> vector<2x40xf32>
    %94 = arith.addf %88, %93 : vector<2x40xf32>
    %95 = vector.extract_strided_slice %27 {offsets = [22, 0], sizes = [2, 128], strides = [1, 1]} : vector<84x128xf32> to vector<2x128xf32>
    %96 = arith.truncf %95 : vector<2x128xf32> to vector<2x128xbf16>
    %c11 = arith.constant 11 : index
    %c0_48 = arith.constant 0 : index
    %c0_49 = arith.constant 0 : index
    %97 = vector.load %arg4[%c11, %c0_48, %c0_49] : memref<42x128x40xbf16, #tpu.memory_space<vmem>>, vector<1x128x40xbf16>
    %98 = vector.shape_cast %97 : vector<1x128x40xbf16> to vector<128x40xbf16>
    %cst_50 = arith.constant dense<0.000000e+00> : vector<2x40xf32>
    %99 = tpu.matmul %96, %98, %cst_50 {dimension_numbers = #tpu.dot_dimension_numbers<[1], [0], [0], [1], [0, 0, 1, 1], [], []>} : vector<2x128xbf16>, vector<128x40xbf16>, vector<2x40xf32> -> vector<2x40xf32>
    %100 = arith.addf %94, %99 : vector<2x40xf32>
    %101 = vector.extract_strided_slice %27 {offsets = [24, 0], sizes = [2, 128], strides = [1, 1]} : vector<84x128xf32> to vector<2x128xf32>
    %102 = arith.truncf %101 : vector<2x128xf32> to vector<2x128xbf16>
    %c12 = arith.constant 12 : index
    %c0_51 = arith.constant 0 : index
    %c0_52 = arith.constant 0 : index
    %103 = vector.load %arg4[%c12, %c0_51, %c0_52] : memref<42x128x40xbf16, #tpu.memory_space<vmem>>, vector<1x128x40xbf16>
    %104 = vector.shape_cast %103 : vector<1x128x40xbf16> to vector<128x40xbf16>
    %cst_53 = arith.constant dense<0.000000e+00> : vector<2x40xf32>
    %105 = tpu.matmul %102, %104, %cst_53 {dimension_numbers = #tpu.dot_dimension_numbers<[1], [0], [0], [1], [0, 0, 1, 1], [], []>} : vector<2x128xbf16>, vector<128x40xbf16>, vector<2x40xf32> -> vector<2x40xf32>
    %106 = arith.addf %100, %105 : vector<2x40xf32>
    %107 = vector.extract_strided_slice %27 {offsets = [26, 0], sizes = [2, 128], strides = [1, 1]} : vector<84x128xf32> to vector<2x128xf32>
    %108 = arith.truncf %107 : vector<2x128xf32> to vector<2x128xbf16>
    %c13 = arith.constant 13 : index
    %c0_54 = arith.constant 0 : index
    %c0_55 = arith.constant 0 : index
    %109 = vector.load %arg4[%c13, %c0_54, %c0_55] : memref<42x128x40xbf16, #tpu.memory_space<vmem>>, vector<1x128x40xbf16>
    %110 = vector.shape_cast %109 : vector<1x128x40xbf16> to vector<128x40xbf16>
    %cst_56 = arith.constant dense<0.000000e+00> : vector<2x40xf32>
    %111 = tpu.matmul %108, %110, %cst_56 {dimension_numbers = #tpu.dot_dimension_numbers<[1], [0], [0], [1], [0, 0, 1, 1], [], []>} : vector<2x128xbf16>, vector<128x40xbf16>, vector<2x40xf32> -> vector<2x40xf32>
    %112 = arith.addf %106, %111 : vector<2x40xf32>
    %113 = vector.extract_strided_slice %27 {offsets = [28, 0], sizes = [2, 128], strides = [1, 1]} : vector<84x128xf32> to vector<2x128xf32>
    %114 = arith.truncf %113 : vector<2x128xf32> to vector<2x128xbf16>
    %c14 = arith.constant 14 : index
    %c0_57 = arith.constant 0 : index
    %c0_58 = arith.constant 0 : index
    %115 = vector.load %arg4[%c14, %c0_57, %c0_58] : memref<42x128x40xbf16, #tpu.memory_space<vmem>>, vector<1x128x40xbf16>
    %116 = vector.shape_cast %115 : vector<1x128x40xbf16> to vector<128x40xbf16>
    %cst_59 = arith.constant dense<0.000000e+00> : vector<2x40xf32>
    %117 = tpu.matmul %114, %116, %cst_59 {dimension_numbers = #tpu.dot_dimension_numbers<[1], [0], [0], [1], [0, 0, 1, 1], [], []>} : vector<2x128xbf16>, vector<128x40xbf16>, vector<2x40xf32> -> vector<2x40xf32>
    %118 = arith.addf %112, %117 : vector<2x40xf32>
    %119 = vector.extract_strided_slice %27 {offsets = [30, 0], sizes = [2, 128], strides = [1, 1]} : vector<84x128xf32> to vector<2x128xf32>
    %120 = arith.truncf %119 : vector<2x128xf32> to vector<2x128xbf16>
    %c15 = arith.constant 15 : index
    %c0_60 = arith.constant 0 : index
    %c0_61 = arith.constant 0 : index
    %121 = vector.load %arg4[%c15, %c0_60, %c0_61] : memref<42x128x40xbf16, #tpu.memory_space<vmem>>, vector<1x128x40xbf16>
    %122 = vector.shape_cast %121 : vector<1x128x40xbf16> to vector<128x40xbf16>
    %cst_62 = arith.constant dense<0.000000e+00> : vector<2x40xf32>
    %123 = tpu.matmul %120, %122, %cst_62 {dimension_numbers = #tpu.dot_dimension_numbers<[1], [0], [0], [1], [0, 0, 1, 1], [], []>} : vector<2x128xbf16>, vector<128x40xbf16>, vector<2x40xf32> -> vector<2x40xf32>
    %124 = arith.addf %118, %123 : vector<2x40xf32>
    %125 = vector.extract_strided_slice %27 {offsets = [32, 0], sizes = [2, 128], strides = [1, 1]} : vector<84x128xf32> to vector<2x128xf32>
    %126 = arith.truncf %125 : vector<2x128xf32> to vector<2x128xbf16>
    %c16 = arith.constant 16 : index
    %c0_63 = arith.constant 0 : index
    %c0_64 = arith.constant 0 : index
    %127 = vector.load %arg4[%c16, %c0_63, %c0_64] : memref<42x128x40xbf16, #tpu.memory_space<vmem>>, vector<1x128x40xbf16>
    %128 = vector.shape_cast %127 : vector<1x128x40xbf16> to vector<128x40xbf16>
    %cst_65 = arith.constant dense<0.000000e+00> : vector<2x40xf32>
    %129 = tpu.matmul %126, %128, %cst_65 {dimension_numbers = #tpu.dot_dimension_numbers<[1], [0], [0], [1], [0, 0, 1, 1], [], []>} : vector<2x128xbf16>, vector<128x40xbf16>, vector<2x40xf32> -> vector<2x40xf32>
    %130 = arith.addf %124, %129 : vector<2x40xf32>
    %131 = vector.extract_strided_slice %27 {offsets = [34, 0], sizes = [2, 128], strides = [1, 1]} : vector<84x128xf32> to vector<2x128xf32>
    %132 = arith.truncf %131 : vector<2x128xf32> to vector<2x128xbf16>
    %c17 = arith.constant 17 : index
    %c0_66 = arith.constant 0 : index
    %c0_67 = arith.constant 0 : index
    %133 = vector.load %arg4[%c17, %c0_66, %c0_67] : memref<42x128x40xbf16, #tpu.memory_space<vmem>>, vector<1x128x40xbf16>
    %134 = vector.shape_cast %133 : vector<1x128x40xbf16> to vector<128x40xbf16>
    %cst_68 = arith.constant dense<0.000000e+00> : vector<2x40xf32>
    %135 = tpu.matmul %132, %134, %cst_68 {dimension_numbers = #tpu.dot_dimension_numbers<[1], [0], [0], [1], [0, 0, 1, 1], [], []>} : vector<2x128xbf16>, vector<128x40xbf16>, vector<2x40xf32> -> vector<2x40xf32>
    %136 = arith.addf %130, %135 : vector<2x40xf32>
    %137 = vector.extract_strided_slice %27 {offsets = [36, 0], sizes = [2, 128], strides = [1, 1]} : vector<84x128xf32> to vector<2x128xf32>
    %138 = arith.truncf %137 : vector<2x128xf32> to vector<2x128xbf16>
    %c18 = arith.constant 18 : index
    %c0_69 = arith.constant 0 : index
    %c0_70 = arith.constant 0 : index
    %139 = vector.load %arg4[%c18, %c0_69, %c0_70] : memref<42x128x40xbf16, #tpu.memory_space<vmem>>, vector<1x128x40xbf16>
    %140 = vector.shape_cast %139 : vector<1x128x40xbf16> to vector<128x40xbf16>
    %cst_71 = arith.constant dense<0.000000e+00> : vector<2x40xf32>
    %141 = tpu.matmul %138, %140, %cst_71 {dimension_numbers = #tpu.dot_dimension_numbers<[1], [0], [0], [1], [0, 0, 1, 1], [], []>} : vector<2x128xbf16>, vector<128x40xbf16>, vector<2x40xf32> -> vector<2x40xf32>
    %142 = arith.addf %136, %141 : vector<2x40xf32>
    %143 = vector.extract_strided_slice %27 {offsets = [38, 0], sizes = [2, 128], strides = [1, 1]} : vector<84x128xf32> to vector<2x128xf32>
    %144 = arith.truncf %143 : vector<2x128xf32> to vector<2x128xbf16>
    %c19 = arith.constant 19 : index
    %c0_72 = arith.constant 0 : index
    %c0_73 = arith.constant 0 : index
    %145 = vector.load %arg4[%c19, %c0_72, %c0_73] : memref<42x128x40xbf16, #tpu.memory_space<vmem>>, vector<1x128x40xbf16>
    %146 = vector.shape_cast %145 : vector<1x128x40xbf16> to vector<128x40xbf16>
    %cst_74 = arith.constant dense<0.000000e+00> : vector<2x40xf32>
    %147 = tpu.matmul %144, %146, %cst_74 {dimension_numbers = #tpu.dot_dimension_numbers<[1], [0], [0], [1], [0, 0, 1, 1], [], []>} : vector<2x128xbf16>, vector<128x40xbf16>, vector<2x40xf32> -> vector<2x40xf32>
    %148 = arith.addf %142, %147 : vector<2x40xf32>
    %149 = vector.extract_strided_slice %27 {offsets = [40, 0], sizes = [2, 128], strides = [1, 1]} : vector<84x128xf32> to vector<2x128xf32>
    %150 = arith.truncf %149 : vector<2x128xf32> to vector<2x128xbf16>
    %c20 = arith.constant 20 : index
    %c0_75 = arith.constant 0 : index
    %c0_76 = arith.constant 0 : index
    %151 = vector.load %arg4[%c20, %c0_75, %c0_76] : memref<42x128x40xbf16, #tpu.memory_space<vmem>>, vector<1x128x40xbf16>
    %152 = vector.shape_cast %151 : vector<1x128x40xbf16> to vector<128x40xbf16>
    %cst_77 = arith.constant dense<0.000000e+00> : vector<2x40xf32>
    %153 = tpu.matmul %150, %152, %cst_77 {dimension_numbers = #tpu.dot_dimension_numbers<[1], [0], [0], [1], [0, 0, 1, 1], [], []>} : vector<2x128xbf16>, vector<128x40xbf16>, vector<2x40xf32> -> vector<2x40xf32>
    %154 = arith.addf %148, %153 : vector<2x40xf32>
    %155 = vector.extract_strided_slice %27 {offsets = [42, 0], sizes = [2, 128], strides = [1, 1]} : vector<84x128xf32> to vector<2x128xf32>
    %156 = arith.truncf %155 : vector<2x128xf32> to vector<2x128xbf16>
    %c21 = arith.constant 21 : index
    %c0_78 = arith.constant 0 : index
    %c0_79 = arith.constant 0 : index
    %157 = vector.load %arg4[%c21, %c0_78, %c0_79] : memref<42x128x40xbf16, #tpu.memory_space<vmem>>, vector<1x128x40xbf16>
    %158 = vector.shape_cast %157 : vector<1x128x40xbf16> to vector<128x40xbf16>
    %cst_80 = arith.constant dense<0.000000e+00> : vector<2x40xf32>
    %159 = tpu.matmul %156, %158, %cst_80 {dimension_numbers = #tpu.dot_dimension_numbers<[1], [0], [0], [1], [0, 0, 1, 1], [], []>} : vector<2x128xbf16>, vector<128x40xbf16>, vector<2x40xf32> -> vector<2x40xf32>
    %160 = arith.addf %154, %159 : vector<2x40xf32>
    %161 = vector.extract_strided_slice %27 {offsets = [44, 0], sizes = [2, 128], strides = [1, 1]} : vector<84x128xf32> to vector<2x128xf32>
    %162 = arith.truncf %161 : vector<2x128xf32> to vector<2x128xbf16>
    %c22 = arith.constant 22 : index
    %c0_81 = arith.constant 0 : index
    %c0_82 = arith.constant 0 : index
    %163 = vector.load %arg4[%c22, %c0_81, %c0_82] : memref<42x128x40xbf16, #tpu.memory_space<vmem>>, vector<1x128x40xbf16>
    %164 = vector.shape_cast %163 : vector<1x128x40xbf16> to vector<128x40xbf16>
    %cst_83 = arith.constant dense<0.000000e+00> : vector<2x40xf32>
    %165 = tpu.matmul %162, %164, %cst_83 {dimension_numbers = #tpu.dot_dimension_numbers<[1], [0], [0], [1], [0, 0, 1, 1], [], []>} : vector<2x128xbf16>, vector<128x40xbf16>, vector<2x40xf32> -> vector<2x40xf32>
    %166 = arith.addf %160, %165 : vector<2x40xf32>
    %167 = vector.extract_strided_slice %27 {offsets = [46, 0], sizes = [2, 128], strides = [1, 1]} : vector<84x128xf32> to vector<2x128xf32>
    %168 = arith.truncf %167 : vector<2x128xf32> to vector<2x128xbf16>
    %c23 = arith.constant 23 : index
    %c0_84 = arith.constant 0 : index
    %c0_85 = arith.constant 0 : index
    %169 = vector.load %arg4[%c23, %c0_84, %c0_85] : memref<42x128x40xbf16, #tpu.memory_space<vmem>>, vector<1x128x40xbf16>
    %170 = vector.shape_cast %169 : vector<1x128x40xbf16> to vector<128x40xbf16>
    %cst_86 = arith.constant dense<0.000000e+00> : vector<2x40xf32>
    %171 = tpu.matmul %168, %170, %cst_86 {dimension_numbers = #tpu.dot_dimension_numbers<[1], [0], [0], [1], [0, 0, 1, 1], [], []>} : vector<2x128xbf16>, vector<128x40xbf16>, vector<2x40xf32> -> vector<2x40xf32>
    %172 = arith.addf %166, %171 : vector<2x40xf32>
    %173 = vector.extract_strided_slice %27 {offsets = [48, 0], sizes = [2, 128], strides = [1, 1]} : vector<84x128xf32> to vector<2x128xf32>
    %174 = arith.truncf %173 : vector<2x128xf32> to vector<2x128xbf16>
    %c24 = arith.constant 24 : index
    %c0_87 = arith.constant 0 : index
    %c0_88 = arith.constant 0 : index
    %175 = vector.load %arg4[%c24, %c0_87, %c0_88] : memref<42x128x40xbf16, #tpu.memory_space<vmem>>, vector<1x128x40xbf16>
    %176 = vector.shape_cast %175 : vector<1x128x40xbf16> to vector<128x40xbf16>
    %cst_89 = arith.constant dense<0.000000e+00> : vector<2x40xf32>
    %177 = tpu.matmul %174, %176, %cst_89 {dimension_numbers = #tpu.dot_dimension_numbers<[1], [0], [0], [1], [0, 0, 1, 1], [], []>} : vector<2x128xbf16>, vector<128x40xbf16>, vector<2x40xf32> -> vector<2x40xf32>
    %178 = arith.addf %172, %177 : vector<2x40xf32>
    %179 = vector.extract_strided_slice %27 {offsets = [50, 0], sizes = [2, 128], strides = [1, 1]} : vector<84x128xf32> to vector<2x128xf32>
    %180 = arith.truncf %179 : vector<2x128xf32> to vector<2x128xbf16>
    %c25 = arith.constant 25 : index
    %c0_90 = arith.constant 0 : index
    %c0_91 = arith.constant 0 : index
    %181 = vector.load %arg4[%c25, %c0_90, %c0_91] : memref<42x128x40xbf16, #tpu.memory_space<vmem>>, vector<1x128x40xbf16>
    %182 = vector.shape_cast %181 : vector<1x128x40xbf16> to vector<128x40xbf16>
    %cst_92 = arith.constant dense<0.000000e+00> : vector<2x40xf32>
    %183 = tpu.matmul %180, %182, %cst_92 {dimension_numbers = #tpu.dot_dimension_numbers<[1], [0], [0], [1], [0, 0, 1, 1], [], []>} : vector<2x128xbf16>, vector<128x40xbf16>, vector<2x40xf32> -> vector<2x40xf32>
    %184 = arith.addf %178, %183 : vector<2x40xf32>
    %185 = vector.extract_strided_slice %27 {offsets = [52, 0], sizes = [2, 128], strides = [1, 1]} : vector<84x128xf32> to vector<2x128xf32>
    %186 = arith.truncf %185 : vector<2x128xf32> to vector<2x128xbf16>
    %c26 = arith.constant 26 : index
    %c0_93 = arith.constant 0 : index
    %c0_94 = arith.constant 0 : index
    %187 = vector.load %arg4[%c26, %c0_93, %c0_94] : memref<42x128x40xbf16, #tpu.memory_space<vmem>>, vector<1x128x40xbf16>
    %188 = vector.shape_cast %187 : vector<1x128x40xbf16> to vector<128x40xbf16>
    %cst_95 = arith.constant dense<0.000000e+00> : vector<2x40xf32>
    %189 = tpu.matmul %186, %188, %cst_95 {dimension_numbers = #tpu.dot_dimension_numbers<[1], [0], [0], [1], [0, 0, 1, 1], [], []>} : vector<2x128xbf16>, vector<128x40xbf16>, vector<2x40xf32> -> vector<2x40xf32>
    %190 = arith.addf %184, %189 : vector<2x40xf32>
    %191 = vector.extract_strided_slice %27 {offsets = [54, 0], sizes = [2, 128], strides = [1, 1]} : vector<84x128xf32> to vector<2x128xf32>
    %192 = arith.truncf %191 : vector<2x128xf32> to vector<2x128xbf16>
    %c27 = arith.constant 27 : index
    %c0_96 = arith.constant 0 : index
    %c0_97 = arith.constant 0 : index
    %193 = vector.load %arg4[%c27, %c0_96, %c0_97] : memref<42x128x40xbf16, #tpu.memory_space<vmem>>, vector<1x128x40xbf16>
    %194 = vector.shape_cast %193 : vector<1x128x40xbf16> to vector<128x40xbf16>
    %cst_98 = arith.constant dense<0.000000e+00> : vector<2x40xf32>
    %195 = tpu.matmul %192, %194, %cst_98 {dimension_numbers = #tpu.dot_dimension_numbers<[1], [0], [0], [1], [0, 0, 1, 1], [], []>} : vector<2x128xbf16>, vector<128x40xbf16>, vector<2x40xf32> -> vector<2x40xf32>
    %196 = arith.addf %190, %195 : vector<2x40xf32>
    %197 = vector.extract_strided_slice %27 {offsets = [56, 0], sizes = [2, 128], strides = [1, 1]} : vector<84x128xf32> to vector<2x128xf32>
    %198 = arith.truncf %197 : vector<2x128xf32> to vector<2x128xbf16>
    %c28 = arith.constant 28 : index
    %c0_99 = arith.constant 0 : index
    %c0_100 = arith.constant 0 : index
    %199 = vector.load %arg4[%c28, %c0_99, %c0_100] : memref<42x128x40xbf16, #tpu.memory_space<vmem>>, vector<1x128x40xbf16>
    %200 = vector.shape_cast %199 : vector<1x128x40xbf16> to vector<128x40xbf16>
    %cst_101 = arith.constant dense<0.000000e+00> : vector<2x40xf32>
    %201 = tpu.matmul %198, %200, %cst_101 {dimension_numbers = #tpu.dot_dimension_numbers<[1], [0], [0], [1], [0, 0, 1, 1], [], []>} : vector<2x128xbf16>, vector<128x40xbf16>, vector<2x40xf32> -> vector<2x40xf32>
    %202 = arith.addf %196, %201 : vector<2x40xf32>
    %203 = vector.extract_strided_slice %27 {offsets = [58, 0], sizes = [2, 128], strides = [1, 1]} : vector<84x128xf32> to vector<2x128xf32>
    %204 = arith.truncf %203 : vector<2x128xf32> to vector<2x128xbf16>
    %c29 = arith.constant 29 : index
    %c0_102 = arith.constant 0 : index
    %c0_103 = arith.constant 0 : index
    %205 = vector.load %arg4[%c29, %c0_102, %c0_103] : memref<42x128x40xbf16, #tpu.memory_space<vmem>>, vector<1x128x40xbf16>
    %206 = vector.shape_cast %205 : vector<1x128x40xbf16> to vector<128x40xbf16>
    %cst_104 = arith.constant dense<0.000000e+00> : vector<2x40xf32>
    %207 = tpu.matmul %204, %206, %cst_104 {dimension_numbers = #tpu.dot_dimension_numbers<[1], [0], [0], [1], [0, 0, 1, 1], [], []>} : vector<2x128xbf16>, vector<128x40xbf16>, vector<2x40xf32> -> vector<2x40xf32>
    %208 = arith.addf %202, %207 : vector<2x40xf32>
    %209 = vector.extract_strided_slice %27 {offsets = [60, 0], sizes = [2, 128], strides = [1, 1]} : vector<84x128xf32> to vector<2x128xf32>
    %210 = arith.truncf %209 : vector<2x128xf32> to vector<2x128xbf16>
    %c30 = arith.constant 30 : index
    %c0_105 = arith.constant 0 : index
    %c0_106 = arith.constant 0 : index
    %211 = vector.load %arg4[%c30, %c0_105, %c0_106] : memref<42x128x40xbf16, #tpu.memory_space<vmem>>, vector<1x128x40xbf16>
    %212 = vector.shape_cast %211 : vector<1x128x40xbf16> to vector<128x40xbf16>
    %cst_107 = arith.constant dense<0.000000e+00> : vector<2x40xf32>
    %213 = tpu.matmul %210, %212, %cst_107 {dimension_numbers = #tpu.dot_dimension_numbers<[1], [0], [0], [1], [0, 0, 1, 1], [], []>} : vector<2x128xbf16>, vector<128x40xbf16>, vector<2x40xf32> -> vector<2x40xf32>
    %214 = arith.addf %208, %213 : vector<2x40xf32>
    %215 = vector.extract_strided_slice %27 {offsets = [62, 0], sizes = [2, 128], strides = [1, 1]} : vector<84x128xf32> to vector<2x128xf32>
    %216 = arith.truncf %215 : vector<2x128xf32> to vector<2x128xbf16>
    %c31 = arith.constant 31 : index
    %c0_108 = arith.constant 0 : index
    %c0_109 = arith.constant 0 : index
    %217 = vector.load %arg4[%c31, %c0_108, %c0_109] : memref<42x128x40xbf16, #tpu.memory_space<vmem>>, vector<1x128x40xbf16>
    %218 = vector.shape_cast %217 : vector<1x128x40xbf16> to vector<128x40xbf16>
    %cst_110 = arith.constant dense<0.000000e+00> : vector<2x40xf32>
    %219 = tpu.matmul %216, %218, %cst_110 {dimension_numbers = #tpu.dot_dimension_numbers<[1], [0], [0], [1], [0, 0, 1, 1], [], []>} : vector<2x128xbf16>, vector<128x40xbf16>, vector<2x40xf32> -> vector<2x40xf32>
    %220 = arith.addf %214, %219 : vector<2x40xf32>
    %221 = vector.extract_strided_slice %27 {offsets = [64, 0], sizes = [2, 128], strides = [1, 1]} : vector<84x128xf32> to vector<2x128xf32>
    %222 = arith.truncf %221 : vector<2x128xf32> to vector<2x128xbf16>
    %c32 = arith.constant 32 : index
    %c0_111 = arith.constant 0 : index
    %c0_112 = arith.constant 0 : index
    %223 = vector.load %arg4[%c32, %c0_111, %c0_112] : memref<42x128x40xbf16, #tpu.memory_space<vmem>>, vector<1x128x40xbf16>
    %224 = vector.shape_cast %223 : vector<1x128x40xbf16> to vector<128x40xbf16>
    %cst_113 = arith.constant dense<0.000000e+00> : vector<2x40xf32>
    %225 = tpu.matmul %222, %224, %cst_113 {dimension_numbers = #tpu.dot_dimension_numbers<[1], [0], [0], [1], [0, 0, 1, 1], [], []>} : vector<2x128xbf16>, vector<128x40xbf16>, vector<2x40xf32> -> vector<2x40xf32>
    %226 = arith.addf %220, %225 : vector<2x40xf32>
    %227 = vector.extract_strided_slice %27 {offsets = [66, 0], sizes = [2, 128], strides = [1, 1]} : vector<84x128xf32> to vector<2x128xf32>
    %228 = arith.truncf %227 : vector<2x128xf32> to vector<2x128xbf16>
    %c33 = arith.constant 33 : index
    %c0_114 = arith.constant 0 : index
    %c0_115 = arith.constant 0 : index
    %229 = vector.load %arg4[%c33, %c0_114, %c0_115] : memref<42x128x40xbf16, #tpu.memory_space<vmem>>, vector<1x128x40xbf16>
    %230 = vector.shape_cast %229 : vector<1x128x40xbf16> to vector<128x40xbf16>
    %cst_116 = arith.constant dense<0.000000e+00> : vector<2x40xf32>
    %231 = tpu.matmul %228, %230, %cst_116 {dimension_numbers = #tpu.dot_dimension_numbers<[1], [0], [0], [1], [0, 0, 1, 1], [], []>} : vector<2x128xbf16>, vector<128x40xbf16>, vector<2x40xf32> -> vector<2x40xf32>
    %232 = arith.addf %226, %231 : vector<2x40xf32>
    %233 = vector.extract_strided_slice %27 {offsets = [68, 0], sizes = [2, 128], strides = [1, 1]} : vector<84x128xf32> to vector<2x128xf32>
    %234 = arith.truncf %233 : vector<2x128xf32> to vector<2x128xbf16>
    %c34 = arith.constant 34 : index
    %c0_117 = arith.constant 0 : index
    %c0_118 = arith.constant 0 : index
    %235 = vector.load %arg4[%c34, %c0_117, %c0_118] : memref<42x128x40xbf16, #tpu.memory_space<vmem>>, vector<1x128x40xbf16>
    %236 = vector.shape_cast %235 : vector<1x128x40xbf16> to vector<128x40xbf16>
    %cst_119 = arith.constant dense<0.000000e+00> : vector<2x40xf32>
    %237 = tpu.matmul %234, %236, %cst_119 {dimension_numbers = #tpu.dot_dimension_numbers<[1], [0], [0], [1], [0, 0, 1, 1], [], []>} : vector<2x128xbf16>, vector<128x40xbf16>, vector<2x40xf32> -> vector<2x40xf32>
    %238 = arith.addf %232, %237 : vector<2x40xf32>
    %239 = vector.extract_strided_slice %27 {offsets = [70, 0], sizes = [2, 128], strides = [1, 1]} : vector<84x128xf32> to vector<2x128xf32>
    %240 = arith.truncf %239 : vector<2x128xf32> to vector<2x128xbf16>
    %c35 = arith.constant 35 : index
    %c0_120 = arith.constant 0 : index
    %c0_121 = arith.constant 0 : index
    %241 = vector.load %arg4[%c35, %c0_120, %c0_121] : memref<42x128x40xbf16, #tpu.memory_space<vmem>>, vector<1x128x40xbf16>
    %242 = vector.shape_cast %241 : vector<1x128x40xbf16> to vector<128x40xbf16>
    %cst_122 = arith.constant dense<0.000000e+00> : vector<2x40xf32>
    %243 = tpu.matmul %240, %242, %cst_122 {dimension_numbers = #tpu.dot_dimension_numbers<[1], [0], [0], [1], [0, 0, 1, 1], [], []>} : vector<2x128xbf16>, vector<128x40xbf16>, vector<2x40xf32> -> vector<2x40xf32>
    %244 = arith.addf %238, %243 : vector<2x40xf32>
    %245 = vector.extract_strided_slice %27 {offsets = [72, 0], sizes = [2, 128], strides = [1, 1]} : vector<84x128xf32> to vector<2x128xf32>
    %246 = arith.truncf %245 : vector<2x128xf32> to vector<2x128xbf16>
    %c36 = arith.constant 36 : index
    %c0_123 = arith.constant 0 : index
    %c0_124 = arith.constant 0 : index
    %247 = vector.load %arg4[%c36, %c0_123, %c0_124] : memref<42x128x40xbf16, #tpu.memory_space<vmem>>, vector<1x128x40xbf16>
    %248 = vector.shape_cast %247 : vector<1x128x40xbf16> to vector<128x40xbf16>
    %cst_125 = arith.constant dense<0.000000e+00> : vector<2x40xf32>
    %249 = tpu.matmul %246, %248, %cst_125 {dimension_numbers = #tpu.dot_dimension_numbers<[1], [0], [0], [1], [0, 0, 1, 1], [], []>} : vector<2x128xbf16>, vector<128x40xbf16>, vector<2x40xf32> -> vector<2x40xf32>
    %250 = arith.addf %244, %249 : vector<2x40xf32>
    %251 = vector.extract_strided_slice %27 {offsets = [74, 0], sizes = [2, 128], strides = [1, 1]} : vector<84x128xf32> to vector<2x128xf32>
    %252 = arith.truncf %251 : vector<2x128xf32> to vector<2x128xbf16>
    %c37 = arith.constant 37 : index
    %c0_126 = arith.constant 0 : index
    %c0_127 = arith.constant 0 : index
    %253 = vector.load %arg4[%c37, %c0_126, %c0_127] : memref<42x128x40xbf16, #tpu.memory_space<vmem>>, vector<1x128x40xbf16>
    %254 = vector.shape_cast %253 : vector<1x128x40xbf16> to vector<128x40xbf16>
    %cst_128 = arith.constant dense<0.000000e+00> : vector<2x40xf32>
    %255 = tpu.matmul %252, %254, %cst_128 {dimension_numbers = #tpu.dot_dimension_numbers<[1], [0], [0], [1], [0, 0, 1, 1], [], []>} : vector<2x128xbf16>, vector<128x40xbf16>, vector<2x40xf32> -> vector<2x40xf32>
    %256 = arith.addf %250, %255 : vector<2x40xf32>
    %257 = vector.extract_strided_slice %27 {offsets = [76, 0], sizes = [2, 128], strides = [1, 1]} : vector<84x128xf32> to vector<2x128xf32>
    %258 = arith.truncf %257 : vector<2x128xf32> to vector<2x128xbf16>
    %c38 = arith.constant 38 : index
    %c0_129 = arith.constant 0 : index
    %c0_130 = arith.constant 0 : index
    %259 = vector.load %arg4[%c38, %c0_129, %c0_130] : memref<42x128x40xbf16, #tpu.memory_space<vmem>>, vector<1x128x40xbf16>
    %260 = vector.shape_cast %259 : vector<1x128x40xbf16> to vector<128x40xbf16>
    %cst_131 = arith.constant dense<0.000000e+00> : vector<2x40xf32>
    %261 = tpu.matmul %258, %260, %cst_131 {dimension_numbers = #tpu.dot_dimension_numbers<[1], [0], [0], [1], [0, 0, 1, 1], [], []>} : vector<2x128xbf16>, vector<128x40xbf16>, vector<2x40xf32> -> vector<2x40xf32>
    %262 = arith.addf %256, %261 : vector<2x40xf32>
    %263 = vector.extract_strided_slice %27 {offsets = [78, 0], sizes = [2, 128], strides = [1, 1]} : vector<84x128xf32> to vector<2x128xf32>
    %264 = arith.truncf %263 : vector<2x128xf32> to vector<2x128xbf16>
    %c39 = arith.constant 39 : index
    %c0_132 = arith.constant 0 : index
    %c0_133 = arith.constant 0 : index
    %265 = vector.load %arg4[%c39, %c0_132, %c0_133] : memref<42x128x40xbf16, #tpu.memory_space<vmem>>, vector<1x128x40xbf16>
    %266 = vector.shape_cast %265 : vector<1x128x40xbf16> to vector<128x40xbf16>
    %cst_134 = arith.constant dense<0.000000e+00> : vector<2x40xf32>
    %267 = tpu.matmul %264, %266, %cst_134 {dimension_numbers = #tpu.dot_dimension_numbers<[1], [0], [0], [1], [0, 0, 1, 1], [], []>} : vector<2x128xbf16>, vector<128x40xbf16>, vector<2x40xf32> -> vector<2x40xf32>
    %268 = arith.addf %262, %267 : vector<2x40xf32>
    %269 = vector.extract_strided_slice %27 {offsets = [80, 0], sizes = [2, 128], strides = [1, 1]} : vector<84x128xf32> to vector<2x128xf32>
    %270 = arith.truncf %269 : vector<2x128xf32> to vector<2x128xbf16>
    %c40 = arith.constant 40 : index
    %c0_135 = arith.constant 0 : index
    %c0_136 = arith.constant 0 : index
    %271 = vector.load %arg4[%c40, %c0_135, %c0_136] : memref<42x128x40xbf16, #tpu.memory_space<vmem>>, vector<1x128x40xbf16>
    %272 = vector.shape_cast %271 : vector<1x128x40xbf16> to vector<128x40xbf16>
    %cst_137 = arith.constant dense<0.000000e+00> : vector<2x40xf32>
    %273 = tpu.matmul %270, %272, %cst_137 {dimension_numbers = #tpu.dot_dimension_numbers<[1], [0], [0], [1], [0, 0, 1, 1], [], []>} : vector<2x128xbf16>, vector<128x40xbf16>, vector<2x40xf32> -> vector<2x40xf32>
    %274 = arith.addf %268, %273 : vector<2x40xf32>
    %275 = vector.extract_strided_slice %27 {offsets = [82, 0], sizes = [2, 128], strides = [1, 1]} : vector<84x128xf32> to vector<2x128xf32>
    %276 = arith.truncf %275 : vector<2x128xf32> to vector<2x128xbf16>
    %c41 = arith.constant 41 : index
    %c0_138 = arith.constant 0 : index
    %c0_139 = arith.constant 0 : index
    %277 = vector.load %arg4[%c41, %c0_138, %c0_139] : memref<42x128x40xbf16, #tpu.memory_space<vmem>>, vector<1x128x40xbf16>
    %278 = vector.shape_cast %277 : vector<1x128x40xbf16> to vector<128x40xbf16>
    %cst_140 = arith.constant dense<0.000000e+00> : vector<2x40xf32>
    %279 = tpu.matmul %276, %278, %cst_140 {dimension_numbers = #tpu.dot_dimension_numbers<[1], [0], [0], [1], [0, 0, 1, 1], [], []>} : vector<2x128xbf16>, vector<128x40xbf16>, vector<2x40xf32> -> vector<2x40xf32>
    %280 = arith.addf %274, %279 : vector<2x40xf32>
    %c0_141 = arith.constant 0 : index
    %c0_142 = arith.constant 0 : index
    %281 = vector.load %arg5[%c0_141, %c0_142] : memref<1x40xf32, #tpu.memory_space<vmem>>, vector<1x40xf32>
    %282 = vector.broadcast %281 : vector<1x40xf32> to vector<2x40xf32>
    %283 = arith.addf %280, %282 : vector<2x40xf32>
    %284 = vector.extract_strided_slice %283 {offsets = [0, 0], sizes = [2, 32], strides = [1, 1]} : vector<2x40xf32> to vector<2x32xf32>
    %cst_143 = arith.constant 0.000000e+00 : f32
    %285 = vector.broadcast %cst_143 : f32 to vector<2x32xf32>
    %286 = arith.maximumf %284, %285 : vector<2x32xf32>
    %c0_144 = arith.constant 0 : index
    %c0_145 = arith.constant 0 : index
    %287 = vector.load %arg6[%c0_144, %c0_145] : memref<32x1xf32, #tpu.memory_space<vmem>>, vector<32x1xf32>
    %cst_146 = arith.constant dense<0.000000e+00> : vector<2x1xf32>
    %288 = tpu.matmul %286, %287, %cst_146 {dimension_numbers = #tpu.dot_dimension_numbers<[1], [0], [0], [1], [0, 0, 1, 1], [], []>} : vector<2x32xf32>, vector<32x1xf32>, vector<2x1xf32> -> vector<2x1xf32>
    %c0_147 = arith.constant 0 : index
    %c0_148 = arith.constant 0 : index
    %289 = vector.load %arg7[%c0_147, %c0_148] : memref<1x1xf32, #tpu.memory_space<vmem>>, vector<1x1xf32>
    %290 = vector.broadcast %289 : vector<1x1xf32> to vector<2x1xf32>
    %291 = arith.addf %288, %290 : vector<2x1xf32>
    %292 = math.tanh %291 : vector<2x1xf32>
    %c0_149 = arith.constant 0 : index
    %c0_150 = arith.constant 0 : index
    %293 = vector.load %arg9[%c0_149, %c0_150] : memref<2x1xf32, #tpu.memory_space<vmem>>, vector<2x1xf32>
    tpu.vector_store %arg9[%c0_149, %c0_150], %292 {strides = array<i32>} : memref<2x1xf32, #tpu.memory_space<vmem>>, vector<2x1xf32>,
    %294 = vector.extract_strided_slice %283 {offsets = [0, 32], sizes = [2, 7], strides = [1, 1]} : vector<2x40xf32> to vector<2x7xf32>
    %cst_151 = arith.constant dense<0xFF800000> : vector<2xf32>
    %295 = vector.multi_reduction <maximumf>, %294, %cst_151 [1] : vector<2x7xf32> to vector<2xf32>
    %296 = vector.shape_cast %295 : vector<2xf32> to vector<2x1xf32>
    %297 = vector.broadcast %296 : vector<2x1xf32> to vector<2x7xf32>
    %298 = arith.subf %294, %297 : vector<2x7xf32>
    %299 = math.exp %298 : vector<2x7xf32>
    %cst_152 = arith.constant dense<0.000000e+00> : vector<2xf32>
    %300 = vector.multi_reduction <add>, %299, %cst_152 [1] : vector<2x7xf32> to vector<2xf32>
    %301 = vector.shape_cast %300 : vector<2xf32> to vector<2x1xf32>
    %302 = tpu.reciprocal %301 {approx = true} : vector<2x1xf32> -> vector<2x1xf32>
    %303 = vector.broadcast %302 : vector<2x1xf32> to vector<2x7xf32>
    %304 = arith.mulf %299, %303 : vector<2x7xf32>
    %c0_153 = arith.constant 0 : index
    %c0_154 = arith.constant 0 : index
    %305 = vector.load %arg8[%c0_153, %c0_154] : memref<2x7xf32, #tpu.memory_space<vmem>>, vector<2x7xf32>
    tpu.vector_store %arg8[%c0_153, %c0_154], %304 {strides = array<i32>} : memref<2x7xf32, #tpu.memory_space<vmem>>, vector<2x7xf32>,
    return
  }
}

</mosaic_0001>

<llo_original>
// kernel: output_layer_forward.1
$region0: #{output_layer_forward.1}
  #allocation0 [shape = 'u32[]', space=smem, size = 0x4, offset = 0x4, fixed_abs, tag = 'smem constant byte address 0x4 - core index']
  #allocation1 [shape = 'u32[144,128]{1,0:T(1,128)}', space=vmem, size = 0x12000, scoped, tag = 'internal scratch']
  #allocation2 [shape = 'f32[1,1]{1,0:T(1,128)S(1)}', space=vmem, size = 0x200, scoped, tag = 'scoped memory for output_layer_forward.1']
  %s0 = inlined_call_operand.vmem [shape: bf16[84,128], index: 0, kind: input, shape index: {}]
  %s1 = inlined_call_operand.vmem [shape: bf16[128,128], index: 1, kind: input, shape index: {}]
  %s2 = inlined_call_operand.vmem [shape: f32[1,128], index: 2, kind: input, shape index: {}]
  %s3 = inlined_call_operand.vmem [shape: f32[1,128], index: 3, kind: input, shape index: {}]
  %s4 = inlined_call_operand.vmem [shape: bf16[42,128,40], index: 4, kind: input, shape index: {}]
  %s5 = inlined_call_operand.vmem [shape: f32[1,40], index: 5, kind: input, shape index: {}]
  %s6 = inlined_call_operand.vmem [shape: f32[32,1], index: 6, kind: input, shape index: {}]
  %s7 = inlined_call_operand.<no memory space> [shape: f32[1,1], index: 7, kind: input, shape index: {}]
  %s8 = inlined_call_operand.hbm [shape: f32[2,7], index: 8, kind: output, shape index: {0}]
  %s9 = inlined_call_operand.vmem [shape: f32[2,1], index: 9, kind: output, shape index: {1}]
  %10 = xla_tuple %s8, %s9
  %s11 = sld [smem:[#allocation0]]
  $region50: #{output_layer_forward.1} parent=0
    _
  %s13 = ssub.s32 1, %s11
  %s14 = scalar_select 0, %s13, %s11
  %v15 = vstv %s7
  %16 = vst [vmem:[#allocation2] sm:$0x1] %v15
  $region1: #{output_layer_forward.1} parent=0
    #allocation3 [shape = 'u8[1024]{0}', space=vmem, size = 0x400, scoped, tag = 'output window, operand 0, single buffered']
    #allocation4 [shape = 's32[1]{0}', space=sflag, size = 0x4, scoped, tag = 'scoped memory for output_layer_forward.1']
    %17 = vsyncpa [#allocation4], 0
    // Predicated region
    $region2: #{output_layer_forward.1} parent=1 // pred_check
      _
    $region3: #{output_layer_forward.1} parent=1 // pred_check_branch
      %19 = sbr.rel (0) target = $region5
    $region4: #{output_layer_forward.1} parent=1 // pred_region
      _
    $region5: #{output_layer_forward.1} parent=1 // pred_fallthru
      _
    // Predicated region
    $region6: #{output_layer_forward.1} parent=1 // pred_check
      _
    $region7: #{output_layer_forward.1} parent=1 // pred_check_branch
      %21 = sbr.rel (0) target = $region9
    $region8: #{output_layer_forward.1} parent=1 // pred_region
      _
    $region9: #{output_layer_forward.1} parent=1 // pred_fallthru
      _
    // Predicated region
    $region10: #{output_layer_forward.1} parent=1 // pred_check
      _
    $region11: #{output_layer_forward.1} parent=1 // pred_check_branch
      %23 = sbr.rel (0) target = $region13
    $region12: #{output_layer_forward.1} parent=1 // pred_region
      _
    $region13: #{output_layer_forward.1} parent=1 // pred_fallthru
      _
    // Predicated region
    $region14: #{output_layer_forward.1} parent=1 // pred_check
      _
    $region15: #{output_layer_forward.1} parent=1 // pred_check_branch
      %25 = sbr.rel (0) target = $region17
    $region16: #{output_layer_forward.1} parent=1 // pred_region
      _
    $region17: #{output_layer_forward.1} parent=1 // pred_fallthru
      _
    // Predicated region
    $region18: #{output_layer_forward.1} parent=1 // pred_check
      _
    $region19: #{output_layer_forward.1} parent=1 // pred_check_branch
      %27 = sbr.rel (0) target = $region21
    $region20: #{output_layer_forward.1} parent=1 // pred_region
      _
    $region21: #{output_layer_forward.1} parent=1 // pred_fallthru
      _
    // Predicated region
    $region22: #{output_layer_forward.1} parent=1 // pred_check
      _
    $region23: #{output_layer_forward.1} parent=1 // pred_check_branch
      %29 = sbr.rel (0) target = $region25
    $region24: #{output_layer_forward.1} parent=1 // pred_region
      _
    $region25: #{output_layer_forward.1} parent=1 // pred_fallthru
      _
    // Predicated region
    $region26: #{output_layer_forward.1} parent=1 // pred_check
      _
    $region27: #{output_layer_forward.1} parent=1 // pred_check_branch
      %31 = sbr.rel (0) target = $region29
    $region28: #{output_layer_forward.1} parent=1 // pred_region
      _
    $region29: #{output_layer_forward.1} parent=1 // pred_fallthru
      _
    // Predicated region
    $region30: #{output_layer_forward.1} parent=1 // pred_check
      _
    $region31: #{output_layer_forward.1} parent=1 // pred_check_branch
      %33 = sbr.rel (0) target = $region33
    $region32: #{output_layer_forward.1} parent=1 // pred_region
      _
    $region33: #{output_layer_forward.1} parent=1 // pred_fallthru
      _
    %v35 = vld [vmem:[%s0] sm:$0xf]
    %v36 = vld [vmem:[%s0 + $0x4] sm:$0xf]
    %v37 = vld [vmem:[%s0 + $0x8] sm:$0xf]
    %v38 = vld [vmem:[%s0 + $0xc] sm:$0xf]
    %v39 = vld [vmem:[%s0 + $0x10] sm:$0xf]
    %v40 = vld [vmem:[%s0 + $0x14] sm:$0xf]
    %v41 = vld [vmem:[%s0 + $0x18] sm:$0xf]
    %v42 = vld [vmem:[%s0 + $0x1c] sm:$0xf]
    %v43 = vld [vmem:[%s0 + $0x20] sm:$0xf]
    %v44 = vld [vmem:[%s0 + $0x24] sm:$0xf]
    %v45 = vld [vmem:[%s0 + $0x28] sm:$0x3]
    %v46 = vld [vmem:[%s1] sm:$0xf]
    %v47 = vld [vmem:[%s1 + $0x4] sm:$0xf]
    %v48 = vld [vmem:[%s1 + $0x8] sm:$0xf]
    %v49 = vld [vmem:[%s1 + $0xc] sm:$0xf]
    %v50 = vld [vmem:[%s1 + $0x10] sm:$0xf]
    %v51 = vld [vmem:[%s1 + $0x14] sm:$0xf]
    %v52 = vld [vmem:[%s1 + $0x18] sm:$0xf]
    %v53 = vld [vmem:[%s1 + $0x1c] sm:$0xf]
    %v54 = vld [vmem:[%s1 + $0x20] sm:$0xf]
    %v55 = vld [vmem:[%s1 + $0x24] sm:$0xf]
    %v56 = vld [vmem:[%s1 + $0x28] sm:$0xf]
    %v57 = vld [vmem:[%s1 + $0x2c] sm:$0xf]
    %v58 = vld [vmem:[%s1 + $0x30] sm:$0xf]
    %v59 = vld [vmem:[%s1 + $0x34] sm:$0xf]
    %v60 = vld [vmem:[%s1 + $0x38] sm:$0xf]
    %v61 = vld [vmem:[%s1 + $0x3c] sm:$0xf]
    %v73 = vunpack.c.l.b16 %v35
    %v74 = vunpack.c.l.b16 %v36
    %v75 = vunpack.c.l.b16 %v37
    %v76 = vunpack.c.l.b16 %v38
    %v77 = vunpack.c.l.b16 %v39
    %v78 = vunpack.c.l.b16 %v40
    %v79 = vunpack.c.l.b16 %v41
    %v80 = vunpack.c.l.b16 %v42
    %v81 = vunpack.c.l.b16 %v43
    %v82 = vunpack.c.l.b16 %v44
    %v83 = vunpack.c.l.b16 %v45
    %v84 = vpack.c.b16 %v74, %v73
    %v85 = vpack.c.b16 %v76, %v75
    %v86 = vpack.c.b16 %v78, %v77
    %v87 = vpack.c.b16 %v80, %v79
    %v88 = vpack.c.b16 %v82, %v81
    %v89 = vpack.c.b16 %v83, %v83
    %v112 = vunpack.c.l.b16 %v46
    %v113 = vunpack.c.l.b16 %v47
    %v114 = vunpack.c.l.b16 %v48
    %v115 = vunpack.c.l.b16 %v49
    %v116 = vunpack.c.l.b16 %v50
    %v117 = vunpack.c.l.b16 %v51
    %v118 = vunpack.c.l.b16 %v52
    %v119 = vunpack.c.l.b16 %v53
    %v120 = vunpack.c.l.b16 %v54
    %v121 = vunpack.c.l.b16 %v55
    %v122 = vunpack.c.l.b16 %v56
    %v123 = vunpack.c.l.b16 %v57
    %v124 = vunpack.c.l.b16 %v58
    %v125 = vunpack.c.l.b16 %v59
    %v126 = vunpack.c.l.b16 %v60
    %v127 = vunpack.c.l.b16 %v61
    %v128 = vpack.c.b16 %v113, %v112
    %v129 = vpack.c.b16 %v115, %v114
    %v130 = vpack.c.b16 %v117, %v116
    %v131 = vpack.c.b16 %v119, %v118
    %v132 = vpack.c.b16 %v121, %v120
    %v133 = vpack.c.b16 %v123, %v122
    %v134 = vpack.c.b16 %v125, %v124
    %v135 = vpack.c.b16 %v127, %v126
    %144 = vmatprep.subr.bf16.mxu0 0
    %145 = vmatpush1.bf16.msra.mxu0 %v135
    %146 = vmatprep.subr.bf16.mxu0 0
    %147 = vmatpush1.bf16.msra.mxu0 %v134
    %148 = vmatprep.subr.bf16.mxu0 0
    %149 = vmatpush1.bf16.msra.mxu0 %v133
    %150 = vmatprep.subr.bf16.mxu0 0
    %151 = vmatpush1.bf16.msra.mxu0 %v132
    %152 = vmatprep.subr.bf16.mxu0 0
    %153 = vmatpush1.bf16.msra.mxu0 %v131
    %154 = vmatprep.subr.bf16.mxu0 0
    %155 = vmatpush1.bf16.msra.mxu0 %v130
    %156 = vmatprep.subr.bf16.mxu0 0
    %157 = vmatpush1.bf16.msra.mxu0 %v129
    %158 = vmatprep.subr.bf16.mxu0 0
    %159 = vmatpush1.bf16.msra.mxu0 %v128
    %160 = vmatprep.subr.bf16.mxu0 0
    %161 = vmatpush2.bf16.msra.mxu0 0
    %162 = vmatprep.subr.bf16.mxu0 0
    %163 = vmatpush2.bf16.msra.mxu0 0
    %164 = vmatprep.subr.bf16.mxu0 0
    %165 = vmatpush2.bf16.msra.mxu0 0
    %166 = vmatprep.subr.bf16.mxu0 0
    %167 = vmatpush2.bf16.msra.mxu0 0
    %168 = vmatprep.subr.bf16.mxu0 0
    %169 = vmatpush2.bf16.msra.mxu0 0
    %170 = vmatprep.subr.bf16.mxu0 0
    %171 = vmatpush2.bf16.msra.mxu0 0
    %172 = vmatprep.subr.bf16.mxu0 0
    %173 = vmatpush2.bf16.msra.mxu0 0
    %174 = vmatprep.subr.bf16.mxu0 0
    %175 = vmatpush2.bf16.msra.mxu0 0
    %176 = vmatprep.mubr.bf16.mxu0 0
    %177 = vmatmul.mubr.bf16.gmra.mxu0 %v84
    %v178 = vpop.f32.mrf.mxu0
    %v179 = vadd.f32 0.0, %v178
    %v180 = vpop.f32.mrf.mxu0
    %v181 = vpop.f32.mrf.mxu0
    %v182 = vadd.f32 0.0, %v181
    %v183 = vpop.f32.mrf.mxu0
    %184 = vmatprep.mubr.bf16.mxu0 0
    %185 = vmatmul.mubr.bf16.gmra.mxu0 %v85
    %v186 = vpop.f32.mrf.mxu0
    %v187 = vadd.f32 0.0, %v186
    %v188 = vpop.f32.mrf.mxu0
    %v189 = vpop.f32.mrf.mxu0
    %v190 = vadd.f32 0.0, %v189
    %v191 = vpop.f32.mrf.mxu0
    %192 = vmatprep.mubr.bf16.mxu0 0
    %193 = vmatmul.mubr.bf16.gmra.mxu0 %v86
    %v194 = vpop.f32.mrf.mxu0
    %v195 = vadd.f32 0.0, %v194
    %v196 = vpop.f32.mrf.mxu0
    %v197 = vpop.f32.mrf.mxu0
    %v198 = vadd.f32 0.0, %v197
    %v199 = vpop.f32.mrf.mxu0
    %200 = vmatprep.mubr.bf16.mxu0 0
    %201 = vmatmul.mubr.bf16.gmra.mxu0 %v87
    %v202 = vpop.f32.mrf.mxu0
    %v203 = vadd.f32 0.0, %v202
    %v204 = vpop.f32.mrf.mxu0
    %v205 = vpop.f32.mrf.mxu0
    %v206 = vadd.f32 0.0, %v205
    %v207 = vpop.f32.mrf.mxu0
    %208 = vmatprep.mubr.bf16.mxu0 0
    %209 = vmatmul.mubr.bf16.gmra.mxu0 %v88
    %v210 = vpop.f32.mrf.mxu0
    %v211 = vadd.f32 0.0, %v210
    %v212 = vpop.f32.mrf.mxu0
    %v213 = vpop.f32.mrf.mxu0
    %v214 = vadd.f32 0.0, %v213
    %v215 = vpop.f32.mrf.mxu0
    %216 = vmatprep.mubr.bf16.mxu0 0
    %217 = vmatmul.mubr.bf16.gmra.mxu0 %v89
    %v218 = vpop.f32.mrf.mxu0
    %v219 = vadd.f32 0.0, %v218
    %v220 = vpop.f32.mrf.mxu0
    %v221 = vpop.f32.mrf.mxu0
    %v222 = vpop.f32.mrf.mxu0
    %223 = vdwg.mxu0
    %v224 = vadd.f32 %v179, %v182
    %v225 = vadd.f32 %v224, %v187
    %v226 = vadd.f32 %v225, %v190
    %v227 = vadd.f32 %v226, %v195
    %v228 = vadd.f32 %v227, %v198
    %v229 = vadd.f32 %v228, %v203
    %v230 = vadd.f32 %v229, %v206
    %v231 = vadd.f32 %v230, %v211
    %v232 = vadd.f32 %v231, %v214
    %vm233 = vcmask 1043456
    %v234 = vsel %vm233, %v219, 0.0
    %v235 = vadd.f32 %v232, %v234
    %v236 = vrot.slane %v235, 4
    %v237 = vadd.f32 %v235, %v236
    %v238 = vrot.slane %v237, 2
    %v239 = vadd.f32 %v237, %v238
    %v240 = vrot.slane %v239, 1
    %v241 = vadd.f32 %v239, %v240
    %v242 = vmul.f32 %v179, %v179
    %v243 = vmul.f32 %v182, %v182
    %v244 = vmul.f32 %v187, %v187
    %v245 = vmul.f32 %v190, %v190
    %v246 = vmul.f32 %v195, %v195
    %v247 = vmul.f32 %v198, %v198
    %v248 = vmul.f32 %v203, %v203
    %v249 = vmul.f32 %v206, %v206
    %v250 = vmul.f32 %v211, %v211
    %v251 = vmul.f32 %v214, %v214
    %v252 = vmul.f32 %v219, %v219
    %v253 = vadd.f32 %v242, %v243
    %v254 = vadd.f32 %v253, %v244
    %v255 = vadd.f32 %v254, %v245
    %v256 = vadd.f32 %v255, %v246
    %v257 = vadd.f32 %v256, %v247
    %v258 = vadd.f32 %v257, %v248
    %v259 = vadd.f32 %v258, %v249
    %v260 = vadd.f32 %v259, %v250
    %v261 = vadd.f32 %v260, %v251
    %v262 = vsel %vm233, %v252, 0.0
    %v263 = vadd.f32 %v261, %v262
    %v264 = vrot.slane %v263, 4
    %v265 = vadd.f32 %v263, %v264
    %v266 = vrot.slane %v265, 2
    %v267 = vadd.f32 %v265, %v266
    %v268 = vrot.slane %v267, 1
    %v269 = vadd.f32 %v267, %v268
    %v270 = vmul.f32 %v241, 0.011904762
    %v271 = vmul.f32 %v269, 0.011904762
    %v272 = vmul.f32 %v270, %v270
    %v273 = vsub.f32 %v271, %v272
    %v274 = vld [vmem:[%s2] sm:$0x1]
    %v275 = vadd.f32 %v273, 1e-05
    %v276 = vrsqrt.pop %v275
    %v277 = vmul.f32 %v274, %v276
    %v278 = vld [vmem:[%s3] sm:$0x1]
    %v279 = vmul.f32 %v270, %v277
    %v280 = vsub.f32 %v278, %v279
    %v282 = vlaneseq
    %v283 = vshrl.u32 %v282, 7
    %v284 = vsub.s32 0, %v283
    %v285 = vrot.slane %v277, %v284
    %v287 = vmul.f32 %v179, %v285
    %v288 = vmul.f32 %v182, %v285
    %v289 = vmul.f32 %v187, %v285
    %v290 = vmul.f32 %v190, %v285
    %v291 = vmul.f32 %v195, %v285
    %v292 = vmul.f32 %v198, %v285
    %v293 = vmul.f32 %v203, %v285
    %v294 = vmul.f32 %v206, %v285
    %v295 = vmul.f32 %v211, %v285
    %v296 = vmul.f32 %v214, %v285
    %v297 = vmul.f32 %v219, %v285
    %v299 = vlaneseq
    %v300 = vshrl.u32 %v299, 7
    %v301 = vsub.s32 0, %v300
    %v302 = vrot.slane %v280, %v301
    %v304 = vadd.f32 %v287, %v302
    %v305 = vadd.f32 %v288, %v302
    %v306 = vadd.f32 %v289, %v302
    %v307 = vadd.f32 %v290, %v302
    %v308 = vadd.f32 %v291, %v302
    %v309 = vadd.f32 %v292, %v302
    %v310 = vadd.f32 %v293, %v302
    %v311 = vadd.f32 %v294, %v302
    %v312 = vadd.f32 %v295, %v302
    %v313 = vadd.f32 %v296, %v302
    %v314 = vadd.f32 %v297, %v302
    %v315 = vmax.f32 %v304, 0.0
    %v316 = vmax.f32 %v305, 0.0
    %v317 = vmax.f32 %v306, 0.0
    %v318 = vmax.f32 %v307, 0.0
    %v319 = vmax.f32 %v308, 0.0
    %v320 = vmax.f32 %v309, 0.0
    %v321 = vmax.f32 %v310, 0.0
    %v322 = vmax.f32 %v311, 0.0
    %v323 = vmax.f32 %v312, 0.0
    %v324 = vmax.f32 %v313, 0.0
    %v325 = vmax.f32 %v314, 0.0
    %v326 = vpack.c.bf16 %v315, %v315
    %v327 = vld [vmem:[%s4] sm:$0xf]
    %v328 = vld [vmem:[%s4 + $0x4] sm:$0xf]
    %v329 = vld [vmem:[%s4 + $0x8] sm:$0xf]
    %v330 = vld [vmem:[%s4 + $0xc] sm:$0xf]
    %v331 = vld [vmem:[%s4 + $0x10] sm:$0xf]
    %v332 = vld [vmem:[%s4 + $0x14] sm:$0xf]
    %v333 = vld [vmem:[%s4 + $0x18] sm:$0xf]
    %v334 = vld [vmem:[%s4 + $0x1c] sm:$0xf]
    %v335 = vld [vmem:[%s4 + $0x20] sm:$0xf]
    %v336 = vld [vmem:[%s4 + $0x24] sm:$0xf]
    %v337 = vld [vmem:[%s4 + $0x28] sm:$0xf]
    %v338 = vld [vmem:[%s4 + $0x2c] sm:$0xf]
    %v339 = vld [vmem:[%s4 + $0x30] sm:$0xf]
    %v340 = vld [vmem:[%s4 + $0x34] sm:$0xf]
    %v341 = vld [vmem:[%s4 + $0x38] sm:$0xf]
    %v342 = vld [vmem:[%s4 + $0x3c] sm:$0xf]
    %s343 = scalar_lea.vmem %s4, 64
    %v344 = vld [vmem:[%s343] sm:$0xf]
    %v345 = vld [vmem:[%s343 + $0x4] sm:$0xf]
    %v346 = vld [vmem:[%s343 + $0x8] sm:$0xf]
    %v347 = vld [vmem:[%s343 + $0xc] sm:$0xf]
    %v348 = vld [vmem:[%s343 + $0x10] sm:$0xf]
    %v349 = vld [vmem:[%s343 + $0x14] sm:$0xf]
    %v350 = vld [vmem:[%s343 + $0x18] sm:$0xf]
    %v351 = vld [vmem:[%s343 + $0x1c] sm:$0xf]
    %v352 = vld [vmem:[%s343 + $0x20] sm:$0xf]
    %v353 = vld [vmem:[%s343 + $0x24] sm:$0xf]
    %v354 = vld [vmem:[%s343 + $0x28] sm:$0xf]
    %v355 = vld [vmem:[%s343 + $0x2c] sm:$0xf]
    %v356 = vld [vmem:[%s343 + $0x30] sm:$0xf]
    %v357 = vld [vmem:[%s343 + $0x34] sm:$0xf]
    %v358 = vld [vmem:[%s343 + $0x38] sm:$0xf]
    %v359 = vld [vmem:[%s343 + $0x3c] sm:$0xf]
    %v361 = vrot.slane %v326, 1
    %v379 = vunpack.c.l.b16 %v344
    %v380 = vunpack.c.l.b16 %v345
    %v381 = vunpack.c.l.b16 %v346
    %v382 = vunpack.c.l.b16 %v347
    %v383 = vunpack.c.l.b16 %v348
    %v384 = vunpack.c.l.b16 %v349
    %v385 = vunpack.c.l.b16 %v350
    %v386 = vunpack.c.l.b16 %v351
    %v387 = vunpack.c.l.b16 %v352
    %v388 = vunpack.c.l.b16 %v353
    %v389 = vunpack.c.l.b16 %v354
    %v390 = vunpack.c.l.b16 %v355
    %v391 = vunpack.c.l.b16 %v356
    %v392 = vunpack.c.l.b16 %v357
    %v393 = vunpack.c.l.b16 %v358
    %v394 = vunpack.c.l.b16 %v359
    %v395 = vpack.c.b16 %v380, %v379
    %v396 = vpack.c.b16 %v382, %v381
    %v397 = vpack.c.b16 %v384, %v383
    %v398 = vpack.c.b16 %v386, %v385
    %v399 = vpack.c.b16 %v388, %v387
    %v400 = vpack.c.b16 %v390, %v389
    %v401 = vpack.c.b16 %v392, %v391
    %v402 = vpack.c.b16 %v394, %v393
    %411 = vmatprep.subr.bf16.mxu0 0
    %412 = vmatpush1.bf16.msra.mxu0 %v402
    %413 = vmatprep.subr.bf16.mxu0 0
    %414 = vmatpush1.bf16.msra.mxu0 %v401
    %415 = vmatprep.subr.bf16.mxu0 0
    %416 = vmatpush1.bf16.msra.mxu0 %v400
    %417 = vmatprep.subr.bf16.mxu0 0
    %418 = vmatpush1.bf16.msra.mxu0 %v399
    %419 = vmatprep.subr.bf16.mxu0 0
    %420 = vmatpush1.bf16.msra.mxu0 %v398
    %421 = vmatprep.subr.bf16.mxu0 0
    %422 = vmatpush1.bf16.msra.mxu0 %v397
    %423 = vmatprep.subr.bf16.mxu0 0
    %424 = vmatpush1.bf16.msra.mxu0 %v396
    %425 = vmatprep.subr.bf16.mxu0 0
    %426 = vmatpush1.bf16.msra.mxu0 %v395
    %427 = vmatprep.subr.bf16.mxu0 0
    %428 = vmatpush2.bf16.msra.mxu0 0
    %429 = vmatprep.subr.bf16.mxu0 0
    %430 = vmatpush2.bf16.msra.mxu0 0
    %431 = vmatprep.subr.bf16.mxu0 0
    %432 = vmatpush2.bf16.msra.mxu0 0
    %433 = vmatprep.subr.bf16.mxu0 0
    %434 = vmatpush2.bf16.msra.mxu0 0
    %435 = vmatprep.subr.bf16.mxu0 0
    %436 = vmatpush2.bf16.msra.mxu0 0
    %437 = vmatprep.subr.bf16.mxu0 0
    %438 = vmatpush2.bf16.msra.mxu0 0
    %439 = vmatprep.subr.bf16.mxu0 0
    %440 = vmatpush2.bf16.msra.mxu0 0
    %441 = vmatprep.subr.bf16.mxu0 0
    %442 = vmatpush2.bf16.msra.mxu0 0
    %443 = vmatprep.mubr.bf16.mxu0 0
    %444 = vmatmul.mubr.bf16.gmra.mxu0 %v361
    %v445 = vpop.f32.mrf.mxu0
    %v446 = vadd.f32 0.0, %v445
    %v447 = vpop.f32.mrf.mxu0
    %v448 = vpop.f32.mrf.mxu0
    %v449 = vpop.f32.mrf.mxu0
    %450 = vdwg.mxu0
    %v467 = vunpack.c.l.b16 %v327
    %v468 = vunpack.c.l.b16 %v328
    %v469 = vunpack.c.l.b16 %v329
    %v470 = vunpack.c.l.b16 %v330
    %v471 = vunpack.c.l.b16 %v331
    %v472 = vunpack.c.l.b16 %v332
    %v473 = vunpack.c.l.b16 %v333
    %v474 = vunpack.c.l.b16 %v334
    %v475 = vunpack.c.l.b16 %v335
    %v476 = vunpack.c.l.b16 %v336
    %v477 = vunpack.c.l.b16 %v337
    %v478 = vunpack.c.l.b16 %v338
    %v479 = vunpack.c.l.b16 %v339
    %v480 = vunpack.c.l.b16 %v340
    %v481 = vunpack.c.l.b16 %v341
    %v482 = vunpack.c.l.b16 %v342
    %v483 = vpack.c.b16 %v468, %v467
    %v484 = vpack.c.b16 %v470, %v469
    %v485 = vpack.c.b16 %v472, %v471
    %v486 = vpack.c.b16 %v474, %v473
    %v487 = vpack.c.b16 %v476, %v475
    %v488 = vpack.c.b16 %v478, %v477
    %v489 = vpack.c.b16 %v480, %v479
    %v490 = vpack.c.b16 %v482, %v481
    %499 = vmatprep.subr.bf16.mxu0 0
    %500 = vmatpush1.bf16.msra.mxu0 %v490
    %501 = vmatprep.subr.bf16.mxu0 0
    %502 = vmatpush1.bf16.msra.mxu0 %v489
    %503 = vmatprep.subr.bf16.mxu0 0
    %504 = vmatpush1.bf16.msra.mxu0 %v488
    %505 = vmatprep.subr.bf16.mxu0 0
    %506 = vmatpush1.bf16.msra.mxu0 %v487
    %507 = vmatprep.subr.bf16.mxu0 0
    %508 = vmatpush1.bf16.msra.mxu0 %v486
    %509 = vmatprep.subr.bf16.mxu0 0
    %510 = vmatpush1.bf16.msra.mxu0 %v485
    %511 = vmatprep.subr.bf16.mxu0 0
    %512 = vmatpush1.bf16.msra.mxu0 %v484
    %513 = vmatprep.subr.bf16.mxu0 0
    %514 = vmatpush1.bf16.msra.mxu0 %v483
    %515 = vmatprep.subr.bf16.mxu0 0
    %516 = vmatpush2.bf16.msra.mxu0 0
    %517 = vmatprep.subr.bf16.mxu0 0
    %518 = vmatpush2.bf16.msra.mxu0 0
    %519 = vmatprep.subr.bf16.mxu0 0
    %520 = vmatpush2.bf16.msra.mxu0 0
    %521 = vmatprep.subr.bf16.mxu0 0
    %522 = vmatpush2.bf16.msra.mxu0 0
    %523 = vmatprep.subr.bf16.mxu0 0
    %524 = vmatpush2.bf16.msra.mxu0 0
    %525 = vmatprep.subr.bf16.mxu0 0
    %526 = vmatpush2.bf16.msra.mxu0 0
    %527 = vmatprep.subr.bf16.mxu0 0
    %528 = vmatpush2.bf16.msra.mxu0 0
    %529 = vmatprep.subr.bf16.mxu0 0
    %530 = vmatpush2.bf16.msra.mxu0 0
    %531 = vmatprep.mubr.bf16.mxu0 0
    %532 = vmatmul.mubr.bf16.gmra.mxu0 %v326
    %v533 = vpop.f32.mrf.mxu0
    %v534 = vadd.f32 %v446, %v533
    %v535 = vpop.f32.mrf.mxu0
    %v536 = vpop.f32.mrf.mxu0
    %v537 = vpop.f32.mrf.mxu0
    %538 = vdwg.mxu0
    %s539 = scalar_lea.vmem %s4, 128
    %v540 = vld [vmem:[%s539] sm:$0xf]
    %v541 = vld [vmem:[%s539 + $0x4] sm:$0xf]
    %v542 = vld [vmem:[%s539 + $0x8] sm:$0xf]
    %v543 = vld [vmem:[%s539 + $0xc] sm:$0xf]
    %v544 = vld [vmem:[%s539 + $0x10] sm:$0xf]
    %v545 = vld [vmem:[%s539 + $0x14] sm:$0xf]
    %v546 = vld [vmem:[%s539 + $0x18] sm:$0xf]
    %v547 = vld [vmem:[%s539 + $0x1c] sm:$0xf]
    %v548 = vld [vmem:[%s539 + $0x20] sm:$0xf]
    %v549 = vld [vmem:[%s539 + $0x24] sm:$0xf]
    %v550 = vld [vmem:[%s539 + $0x28] sm:$0xf]
    %v551 = vld [vmem:[%s539 + $0x2c] sm:$0xf]
    %v552 = vld [vmem:[%s539 + $0x30] sm:$0xf]
    %v553 = vld [vmem:[%s539 + $0x34] sm:$0xf]
    %v554 = vld [vmem:[%s539 + $0x38] sm:$0xf]
    %v555 = vld [vmem:[%s539 + $0x3c] sm:$0xf]
    %v556 = vrot.slane %v326, 2
    %v574 = vunpack.c.l.b16 %v540
    %v575 = vunpack.c.l.b16 %v541
    %v576 = vunpack.c.l.b16 %v542
    %v577 = vunpack.c.l.b16 %v543
    %v578 = vunpack.c.l.b16 %v544
    %v579 = vunpack.c.l.b16 %v545
    %v580 = vunpack.c.l.b16 %v546
    %v581 = vunpack.c.l.b16 %v547
    %v582 = vunpack.c.l.b16 %v548
    %v583 = vunpack.c.l.b16 %v549
    %v584 = vunpack.c.l.b16 %v550
    %v585 = vunpack.c.l.b16 %v551
    %v586 = vunpack.c.l.b16 %v552
    %v587 = vunpack.c.l.b16 %v553
    %v588 = vunpack.c.l.b16 %v554
    %v589 = vunpack.c.l.b16 %v555
    %v590 = vpack.c.b16 %v575, %v574
    %v591 = vpack.c.b16 %v577, %v576
    %v592 = vpack.c.b16 %v579, %v578
    %v593 = vpack.c.b16 %v581, %v580
    %v594 = vpack.c.b16 %v583, %v582
    %v595 = vpack.c.b16 %v585, %v584
    %v596 = vpack.c.b16 %v587, %v586
    %v597 = vpack.c.b16 %v589, %v588
    %606 = vmatprep.subr.bf16.mxu0 0
    %607 = vmatpush1.bf16.msra.mxu0 %v597
    %608 = vmatprep.subr.bf16.mxu0 0
    %609 = vmatpush1.bf16.msra.mxu0 %v596
    %610 = vmatprep.subr.bf16.mxu0 0
    %611 = vmatpush1.bf16.msra.mxu0 %v595
    %612 = vmatprep.subr.bf16.mxu0 0
    %613 = vmatpush1.bf16.msra.mxu0 %v594
    %614 = vmatprep.subr.bf16.mxu0 0
    %615 = vmatpush1.bf16.msra.mxu0 %v593
    %616 = vmatprep.subr.bf16.mxu0 0
    %617 = vmatpush1.bf16.msra.mxu0 %v592
    %618 = vmatprep.subr.bf16.mxu0 0
    %619 = vmatpush1.bf16.msra.mxu0 %v591
    %620 = vmatprep.subr.bf16.mxu0 0
    %621 = vmatpush1.bf16.msra.mxu0 %v590
    %622 = vmatprep.subr.bf16.mxu0 0
    %623 = vmatpush2.bf16.msra.mxu0 0
    %624 = vmatprep.subr.bf16.mxu0 0
    %625 = vmatpush2.bf16.msra.mxu0 0
    %626 = vmatprep.subr.bf16.mxu0 0
    %627 = vmatpush2.bf16.msra.mxu0 0
    %628 = vmatprep.subr.bf16.mxu0 0
    %629 = vmatpush2.bf16.msra.mxu0 0
    %630 = vmatprep.subr.bf16.mxu0 0
    %631 = vmatpush2.bf16.msra.mxu0 0
    %632 = vmatprep.subr.bf16.mxu0 0
    %633 = vmatpush2.bf16.msra.mxu0 0
    %634 = vmatprep.subr.bf16.mxu0 0
    %635 = vmatpush2.bf16.msra.mxu0 0
    %636 = vmatprep.subr.bf16.mxu0 0
    %637 = vmatpush2.bf16.msra.mxu0 0
    %638 = vmatprep.mubr.bf16.mxu0 0
    %639 = vmatmul.mubr.bf16.gmra.mxu0 %v556
    %v640 = vpop.f32.mrf.mxu0
    %v641 = vadd.f32 0.0, %v640
    %v642 = vpop.f32.mrf.mxu0
    %v643 = vpop.f32.mrf.mxu0
    %v644 = vpop.f32.mrf.mxu0
    %645 = vdwg.mxu0
    %v646 = vadd.f32 %v534, %v641
    %s647 = scalar_lea.vmem %s4, 192
    %v648 = vld [vmem:[%s647] sm:$0xf]
    %v649 = vld [vmem:[%s647 + $0x4] sm:$0xf]
    %v650 = vld [vmem:[%s647 + $0x8] sm:$0xf]
    %v651 = vld [vmem:[%s647 + $0xc] sm:$0xf]
    %v652 = vld [vmem:[%s647 + $0x10] sm:$0xf]
    %v653 = vld [vmem:[%s647 + $0x14] sm:$0xf]
    %v654 = vld [vmem:[%s647 + $0x18] sm:$0xf]
    %v655 = vld [vmem:[%s647 + $0x1c] sm:$0xf]
    %v656 = vld [vmem:[%s647 + $0x20] sm:$0xf]
    %v657 = vld [vmem:[%s647 + $0x24] sm:$0xf]
    %v658 = vld [vmem:[%s647 + $0x28] sm:$0xf]
    %v659 = vld [vmem:[%s647 + $0x2c] sm:$0xf]
    %v660 = vld [vmem:[%s647 + $0x30] sm:$0xf]
    %v661 = vld [vmem:[%s647 + $0x34] sm:$0xf]
    %v662 = vld [vmem:[%s647 + $0x38] sm:$0xf]
    %v663 = vld [vmem:[%s647 + $0x3c] sm:$0xf]
    %v664 = vrot.slane %v326, 3
    %v682 = vunpack.c.l.b16 %v648
    %v683 = vunpack.c.l.b16 %v649
    %v684 = vunpack.c.l.b16 %v650
    %v685 = vunpack.c.l.b16 %v651
    %v686 = vunpack.c.l.b16 %v652
    %v687 = vunpack.c.l.b16 %v653
    %v688 = vunpack.c.l.b16 %v654
    %v689 = vunpack.c.l.b16 %v655
    %v690 = vunpack.c.l.b16 %v656
    %v691 = vunpack.c.l.b16 %v657
    %v692 = vunpack.c.l.b16 %v658
    %v693 = vunpack.c.l.b16 %v659
    %v694 = vunpack.c.l.b16 %v660
    %v695 = vunpack.c.l.b16 %v661
    %v696 = vunpack.c.l.b16 %v662
    %v697 = vunpack.c.l.b16 %v663
    %v698 = vpack.c.b16 %v683, %v682
    %v699 = vpack.c.b16 %v685, %v684
    %v700 = vpack.c.b16 %v687, %v686
    %v701 = vpack.c.b16 %v689, %v688
    %v702 = vpack.c.b16 %v691, %v690
    %v703 = vpack.c.b16 %v693, %v692
    %v704 = vpack.c.b16 %v695, %v694
    %v705 = vpack.c.b16 %v697, %v696
    %714 = vmatprep.subr.bf16.mxu0 0
    %715 = vmatpush1.bf16.msra.mxu0 %v705
    %716 = vmatprep.subr.bf16.mxu0 0
    %717 = vmatpush1.bf16.msra.mxu0 %v704
    %718 = vmatprep.subr.bf16.mxu0 0
    %719 = vmatpush1.bf16.msra.mxu0 %v703
    %720 = vmatprep.subr.bf16.mxu0 0
    %721 = vmatpush1.bf16.msra.mxu0 %v702
    %722 = vmatprep.subr.bf16.mxu0 0
    %723 = vmatpush1.bf16.msra.mxu0 %v701
    %724 = vmatprep.subr.bf16.mxu0 0
    %725 = vmatpush1.bf16.msra.mxu0 %v700
    %726 = vmatprep.subr.bf16.mxu0 0
    %727 = vmatpush1.bf16.msra.mxu0 %v699
    %728 = vmatprep.subr.bf16.mxu0 0
    %729 = vmatpush1.bf16.msra.mxu0 %v698
    %730 = vmatprep.subr.bf16.mxu0 0
    %731 = vmatpush2.bf16.msra.mxu0 0
    %732 = vmatprep.subr.bf16.mxu0 0
    %733 = vmatpush2.bf16.msra.mxu0 0
    %734 = vmatprep.subr.bf16.mxu0 0
    %735 = vmatpush2.bf16.msra.mxu0 0
    %736 = vmatprep.subr.bf16.mxu0 0
    %737 = vmatpush2.bf16.msra.mxu0 0
    %738 = vmatprep.subr.bf16.mxu0 0
    %739 = vmatpush2.bf16.msra.mxu0 0
    %740 = vmatprep.subr.bf16.mxu0 0
    %741 = vmatpush2.bf16.msra.mxu0 0
    %742 = vmatprep.subr.bf16.mxu0 0
    %743 = vmatpush2.bf16.msra.mxu0 0
    %744 = vmatprep.subr.bf16.mxu0 0
    %745 = vmatpush2.bf16.msra.mxu0 0
    %746 = vmatprep.mubr.bf16.mxu0 0
    %747 = vmatmul.mubr.bf16.gmra.mxu0 %v664
    %v748 = vpop.f32.mrf.mxu0
    %v749 = vadd.f32 0.0, %v748
    %v750 = vpop.f32.mrf.mxu0
    %v751 = vpop.f32.mrf.mxu0
    %v752 = vpop.f32.mrf.mxu0
    %753 = vdwg.mxu0
    %v754 = vadd.f32 %v646, %v749
    %v755 = vpack.c.bf16 %v316, %v316
    %s756 = scalar_lea.vmem %s4, 256
    %v757 = vld [vmem:[%s756] sm:$0xf]
    %v758 = vld [vmem:[%s756 + $0x4] sm:$0xf]
    %v759 = vld [vmem:[%s756 + $0x8] sm:$0xf]
    %v760 = vld [vmem:[%s756 + $0xc] sm:$0xf]
    %v761 = vld [vmem:[%s756 + $0x10] sm:$0xf]
    %v762 = vld [vmem:[%s756 + $0x14] sm:$0xf]
    %v763 = vld [vmem:[%s756 + $0x18] sm:$0xf]
    %v764 = vld [vmem:[%s756 + $0x1c] sm:$0xf]
    %v765 = vld [vmem:[%s756 + $0x20] sm:$0xf]
    %v766 = vld [vmem:[%s756 + $0x24] sm:$0xf]
    %v767 = vld [vmem:[%s756 + $0x28] sm:$0xf]
    %v768 = vld [vmem:[%s756 + $0x2c] sm:$0xf]
    %v769 = vld [vmem:[%s756 + $0x30] sm:$0xf]
    %v770 = vld [vmem:[%s756 + $0x34] sm:$0xf]
    %v771 = vld [vmem:[%s756 + $0x38] sm:$0xf]
    %v772 = vld [vmem:[%s756 + $0x3c] sm:$0xf]
    %v789 = vunpack.c.l.b16 %v757
    %v790 = vunpack.c.l.b16 %v758
    %v791 = vunpack.c.l.b16 %v759
    %v792 = vunpack.c.l.b16 %v760
    %v793 = vunpack.c.l.b16 %v761
    %v794 = vunpack.c.l.b16 %v762
    %v795 = vunpack.c.l.b16 %v763
    %v796 = vunpack.c.l.b16 %v764
    %v797 = vunpack.c.l.b16 %v765
    %v798 = vunpack.c.l.b16 %v766
    %v799 = vunpack.c.l.b16 %v767
    %v800 = vunpack.c.l.b16 %v768
    %v801 = vunpack.c.l.b16 %v769
    %v802 = vunpack.c.l.b16 %v770
    %v803 = vunpack.c.l.b16 %v771
    %v804 = vunpack.c.l.b16 %v772
    %v805 = vpack.c.b16 %v790, %v789
    %v806 = vpack.c.b16 %v792, %v791
    %v807 = vpack.c.b16 %v794, %v793
    %v808 = vpack.c.b16 %v796, %v795
    %v809 = vpack.c.b16 %v798, %v797
    %v810 = vpack.c.b16 %v800, %v799
    %v811 = vpack.c.b16 %v802, %v801
    %v812 = vpack.c.b16 %v804, %v803
    %821 = vmatprep.subr.bf16.mxu0 0
    %822 = vmatpush1.bf16.msra.mxu0 %v812
    %823 = vmatprep.subr.bf16.mxu0 0
    %824 = vmatpush1.bf16.msra.mxu0 %v811
    %825 = vmatprep.subr.bf16.mxu0 0
    %826 = vmatpush1.bf16.msra.mxu0 %v810
    %827 = vmatprep.subr.bf16.mxu0 0
    %828 = vmatpush1.bf16.msra.mxu0 %v809
    %829 = vmatprep.subr.bf16.mxu0 0
    %830 = vmatpush1.bf16.msra.mxu0 %v808
    %831 = vmatprep.subr.bf16.mxu0 0
    %832 = vmatpush1.bf16.msra.mxu0 %v807
    %833 = vmatprep.subr.bf16.mxu0 0
    %834 = vmatpush1.bf16.msra.mxu0 %v806
    %835 = vmatprep.subr.bf16.mxu0 0
    %836 = vmatpush1.bf16.msra.mxu0 %v805
    %837 = vmatprep.subr.bf16.mxu0 0
    %838 = vmatpush2.bf16.msra.mxu0 0
    %839 = vmatprep.subr.bf16.mxu0 0
    %840 = vmatpush2.bf16.msra.mxu0 0
    %841 = vmatprep.subr.bf16.mxu0 0
    %842 = vmatpush2.bf16.msra.mxu0 0
    %843 = vmatprep.subr.bf16.mxu0 0
    %844 = vmatpush2.bf16.msra.mxu0 0
    %845 = vmatprep.subr.bf16.mxu0 0
    %846 = vmatpush2.bf16.msra.mxu0 0
    %847 = vmatprep.subr.bf16.mxu0 0
    %848 = vmatpush2.bf16.msra.mxu0 0
    %849 = vmatprep.subr.bf16.mxu0 0
    %850 = vmatpush2.bf16.msra.mxu0 0
    %851 = vmatprep.subr.bf16.mxu0 0
    %852 = vmatpush2.bf16.msra.mxu0 0
    %853 = vmatprep.mubr.bf16.mxu0 0
    %854 = vmatmul.mubr.bf16.gmra.mxu0 %v755
    %v855 = vpop.f32.mrf.mxu0
    %v856 = vadd.f32 0.0, %v855
    %v857 = vpop.f32.mrf.mxu0
    %v858 = vpop.f32.mrf.mxu0
    %v859 = vpop.f32.mrf.mxu0
    %860 = vdwg.mxu0
    %v861 = vadd.f32 %v754, %v856
    %s862 = scalar_lea.vmem %s4, 320
    %v863 = vld [vmem:[%s862] sm:$0xf]
    %v864 = vld [vmem:[%s862 + $0x4] sm:$0xf]
    %v865 = vld [vmem:[%s862 + $0x8] sm:$0xf]
    %v866 = vld [vmem:[%s862 + $0xc] sm:$0xf]
    %v867 = vld [vmem:[%s862 + $0x10] sm:$0xf]
    %v868 = vld [vmem:[%s862 + $0x14] sm:$0xf]
    %v869 = vld [vmem:[%s862 + $0x18] sm:$0xf]
    %v870 = vld [vmem:[%s862 + $0x1c] sm:$0xf]
    %v871 = vld [vmem:[%s862 + $0x20] sm:$0xf]
    %v872 = vld [vmem:[%s862 + $0x24] sm:$0xf]
    %v873 = vld [vmem:[%s862 + $0x28] sm:$0xf]
    %v874 = vld [vmem:[%s862 + $0x2c] sm:$0xf]
    %v875 = vld [vmem:[%s862 + $0x30] sm:$0xf]
    %v876 = vld [vmem:[%s862 + $0x34] sm:$0xf]
    %v877 = vld [vmem:[%s862 + $0x38] sm:$0xf]
    %v878 = vld [vmem:[%s862 + $0x3c] sm:$0xf]
    %v880 = vrot.slane %v755, 1
    %v898 = vunpack.c.l.b16 %v863
    %v899 = vunpack.c.l.b16 %v864
    %v900 = vunpack.c.l.b16 %v865
    %v901 = vunpack.c.l.b16 %v866
    %v902 = vunpack.c.l.b16 %v867
    %v903 = vunpack.c.l.b16 %v868
    %v904 = vunpack.c.l.b16 %v869
    %v905 = vunpack.c.l.b16 %v870
    %v906 = vunpack.c.l.b16 %v871
    %v907 = vunpack.c.l.b16 %v872
    %v908 = vunpack.c.l.b16 %v873
    %v909 = vunpack.c.l.b16 %v874
    %v910 = vunpack.c.l.b16 %v875
    %v911 = vunpack.c.l.b16 %v876
    %v912 = vunpack.c.l.b16 %v877
    %v913 = vunpack.c.l.b16 %v878
    %v914 = vpack.c.b16 %v899, %v898
    %v915 = vpack.c.b16 %v901, %v900
    %v916 = vpack.c.b16 %v903, %v902
    %v917 = vpack.c.b16 %v905, %v904
    %v918 = vpack.c.b16 %v907, %v906
    %v919 = vpack.c.b16 %v909, %v908
    %v920 = vpack.c.b16 %v911, %v910
    %v921 = vpack.c.b16 %v913, %v912
    %930 = vmatprep.subr.bf16.mxu0 0
    %931 = vmatpush1.bf16.msra.mxu0 %v921
    %932 = vmatprep.subr.bf16.mxu0 0
    %933 = vmatpush1.bf16.msra.mxu0 %v920
    %934 = vmatprep.subr.bf16.mxu0 0
    %935 = vmatpush1.bf16.msra.mxu0 %v919
    %936 = vmatprep.subr.bf16.mxu0 0
    %937 = vmatpush1.bf16.msra.mxu0 %v918
    %938 = vmatprep.subr.bf16.mxu0 0
    %939 = vmatpush1.bf16.msra.mxu0 %v917
    %940 = vmatprep.subr.bf16.mxu0 0
    %941 = vmatpush1.bf16.msra.mxu0 %v916
    %942 = vmatprep.subr.bf16.mxu0 0
    %943 = vmatpush1.bf16.msra.mxu0 %v915
    %944 = vmatprep.subr.bf16.mxu0 0
    %945 = vmatpush1.bf16.msra.mxu0 %v914
    %946 = vmatprep.subr.bf16.mxu0 0
    %947 = vmatpush2.bf16.msra.mxu0 0
    %948 = vmatprep.subr.bf16.mxu0 0
    %949 = vmatpush2.bf16.msra.mxu0 0
    %950 = vmatprep.subr.bf16.mxu0 0
    %951 = vmatpush2.bf16.msra.mxu0 0
    %952 = vmatprep.subr.bf16.mxu0 0
    %953 = vmatpush2.bf16.msra.mxu0 0
    %954 = vmatprep.subr.bf16.mxu0 0
    %955 = vmatpush2.bf16.msra.mxu0 0
    %956 = vmatprep.subr.bf16.mxu0 0
    %957 = vmatpush2.bf16.msra.mxu0 0
    %958 = vmatprep.subr.bf16.mxu0 0
    %959 = vmatpush2.bf16.msra.mxu0 0
    %960 = vmatprep.subr.bf16.mxu0 0
    %961 = vmatpush2.bf16.msra.mxu0 0
    %962 = vmatprep.mubr.bf16.mxu0 0
    %963 = vmatmul.mubr.bf16.gmra.mxu0 %v880
    %v964 = vpop.f32.mrf.mxu0
    %v965 = vadd.f32 0.0, %v964
    %v966 = vpop.f32.mrf.mxu0
    %v967 = vpop.f32.mrf.mxu0
    %v968 = vpop.f32.mrf.mxu0
    %969 = vdwg.mxu0
    %v970 = vadd.f32 %v861, %v965
    %s971 = scalar_lea.vmem %s4, 384
    %v972 = vld [vmem:[%s971] sm:$0xf]
    %v973 = vld [vmem:[%s971 + $0x4] sm:$0xf]
    %v974 = vld [vmem:[%s971 + $0x8] sm:$0xf]
    %v975 = vld [vmem:[%s971 + $0xc] sm:$0xf]
    %v976 = vld [vmem:[%s971 + $0x10] sm:$0xf]
    %v977 = vld [vmem:[%s971 + $0x14] sm:$0xf]
    %v978 = vld [vmem:[%s971 + $0x18] sm:$0xf]
    %v979 = vld [vmem:[%s971 + $0x1c] sm:$0xf]
    %v980 = vld [vmem:[%s971 + $0x20] sm:$0xf]
    %v981 = vld [vmem:[%s971 + $0x24] sm:$0xf]
    %v982 = vld [vmem:[%s971 + $0x28] sm:$0xf]
    %v983 = vld [vmem:[%s971 + $0x2c] sm:$0xf]
    %v984 = vld [vmem:[%s971 + $0x30] sm:$0xf]
    %v985 = vld [vmem:[%s971 + $0x34] sm:$0xf]
    %v986 = vld [vmem:[%s971 + $0x38] sm:$0xf]
    %v987 = vld [vmem:[%s971 + $0x3c] sm:$0xf]
    %v988 = vrot.slane %v755, 2
    %v1006 = vunpack.c.l.b16 %v972
    %v1007 = vunpack.c.l.b16 %v973
    %v1008 = vunpack.c.l.b16 %v974
    %v1009 = vunpack.c.l.b16 %v975
    %v1010 = vunpack.c.l.b16 %v976
    %v1011 = vunpack.c.l.b16 %v977
    %v1012 = vunpack.c.l.b16 %v978
    %v1013 = vunpack.c.l.b16 %v979
    %v1014 = vunpack.c.l.b16 %v980
    %v1015 = vunpack.c.l.b16 %v981
    %v1016 = vunpack.c.l.b16 %v982
    %v1017 = vunpack.c.l.b16 %v983
    %v1018 = vunpack.c.l.b16 %v984
    %v1019 = vunpack.c.l.b16 %v985
    %v1020 = vunpack.c.l.b16 %v986
    %v1021 = vunpack.c.l.b16 %v987
    %v1022 = vpack.c.b16 %v1007, %v1006
    %v1023 = vpack.c.b16 %v1009, %v1008
    %v1024 = vpack.c.b16 %v1011, %v1010
    %v1025 = vpack.c.b16 %v1013, %v1012
    %v1026 = vpack.c.b16 %v1015, %v1014
    %v1027 = vpack.c.b16 %v1017, %v1016
    %v1028 = vpack.c.b16 %v1019, %v1018
    %v1029 = vpack.c.b16 %v1021, %v1020
    %1038 = vmatprep.subr.bf16.mxu0 0
    %1039 = vmatpush1.bf16.msra.mxu0 %v1029
    %1040 = vmatprep.subr.bf16.mxu0 0
    %1041 = vmatpush1.bf16.msra.mxu0 %v1028
    %1042 = vmatprep.subr.bf16.mxu0 0
    %1043 = vmatpush1.bf16.msra.mxu0 %v1027
    %1044 = vmatprep.subr.bf16.mxu0 0
    %1045 = vmatpush1.bf16.msra.mxu0 %v1026
    %1046 = vmatprep.subr.bf16.mxu0 0
    %1047 = vmatpush1.bf16.msra.mxu0 %v1025
    %1048 = vmatprep.subr.bf16.mxu0 0
    %1049 = vmatpush1.bf16.msra.mxu0 %v1024
    %1050 = vmatprep.subr.bf16.mxu0 0
    %1051 = vmatpush1.bf16.msra.mxu0 %v1023
    %1052 = vmatprep.subr.bf16.mxu0 0
    %1053 = vmatpush1.bf16.msra.mxu0 %v1022
    %1054 = vmatprep.subr.bf16.mxu0 0
    %1055 = vmatpush2.bf16.msra.mxu0 0
    %1056 = vmatprep.subr.bf16.mxu0 0
    %1057 = vmatpush2.bf16.msra.mxu0 0
    %1058 = vmatprep.subr.bf16.mxu0 0
    %1059 = vmatpush2.bf16.msra.mxu0 0
    %1060 = vmatprep.subr.bf16.mxu0 0
    %1061 = vmatpush2.bf16.msra.mxu0 0
    %1062 = vmatprep.subr.bf16.mxu0 0
    %1063 = vmatpush2.bf16.msra.mxu0 0
    %1064 = vmatprep.subr.bf16.mxu0 0
    %1065 = vmatpush2.bf16.msra.mxu0 0
    %1066 = vmatprep.subr.bf16.mxu0 0
    %1067 = vmatpush2.bf16.msra.mxu0 0
    %1068 = vmatprep.subr.bf16.mxu0 0
    %1069 = vmatpush2.bf16.msra.mxu0 0
    %1070 = vmatprep.mubr.bf16.mxu0 0
    %1071 = vmatmul.mubr.bf16.gmra.mxu0 %v988
    %v1072 = vpop.f32.mrf.mxu0
    %v1073 = vadd.f32 0.0, %v1072
    %v1074 = vpop.f32.mrf.mxu0
    %v1075 = vpop.f32.mrf.mxu0
    %v1076 = vpop.f32.mrf.mxu0
    %1077 = vdwg.mxu0
    %v1078 = vadd.f32 %v970, %v1073
    %s1079 = scalar_lea.vmem %s4, 448
    %v1080 = vld [vmem:[%s1079] sm:$0xf]
    %v1081 = vld [vmem:[%s1079 + $0x4] sm:$0xf]
    %v1082 = vld [vmem:[%s1079 + $0x8] sm:$0xf]
    %v1083 = vld [vmem:[%s1079 + $0xc] sm:$0xf]
    %v1084 = vld [vmem:[%s1079 + $0x10] sm:$0xf]
    %v1085 = vld [vmem:[%s1079 + $0x14] sm:$0xf]
    %v1086 = vld [vmem:[%s1079 + $0x18] sm:$0xf]
    %v1087 = vld [vmem:[%s1079 + $0x1c] sm:$0xf]
    %v1088 = vld [vmem:[%s1079 + $0x20] sm:$0xf]
    %v1089 = vld [vmem:[%s1079 + $0x24] sm:$0xf]
    %v1090 = vld [vmem:[%s1079 + $0x28] sm:$0xf]
    %v1091 = vld [vmem:[%s1079 + $0x2c] sm:$0xf]
    %v1092 = vld [vmem:[%s1079 + $0x30] sm:$0xf]
    %v1093 = vld [vmem:[%s1079 + $0x34] sm:$0xf]
    %v1094 = vld [vmem:[%s1079 + $0x38] sm:$0xf]
    %v1095 = vld [vmem:[%s1079 + $0x3c] sm:$0xf]
    %v1096 = vrot.slane %v755, 3
    %v1114 = vunpack.c.l.b16 %v1080
    %v1115 = vunpack.c.l.b16 %v1081
    %v1116 = vunpack.c.l.b16 %v1082
    %v1117 = vunpack.c.l.b16 %v1083
    %v1118 = vunpack.c.l.b16 %v1084
    %v1119 = vunpack.c.l.b16 %v1085
    %v1120 = vunpack.c.l.b16 %v1086
    %v1121 = vunpack.c.l.b16 %v1087
    %v1122 = vunpack.c.l.b16 %v1088
    %v1123 = vunpack.c.l.b16 %v1089
    %v1124 = vunpack.c.l.b16 %v1090
    %v1125 = vunpack.c.l.b16 %v1091
    %v1126 = vunpack.c.l.b16 %v1092
    %v1127 = vunpack.c.l.b16 %v1093
    %v1128 = vunpack.c.l.b16 %v1094
    %v1129 = vunpack.c.l.b16 %v1095
    %v1130 = vpack.c.b16 %v1115, %v1114
    %v1131 = vpack.c.b16 %v1117, %v1116
    %v1132 = vpack.c.b16 %v1119, %v1118
    %v1133 = vpack.c.b16 %v1121, %v1120
    %v1134 = vpack.c.b16 %v1123, %v1122
    %v1135 = vpack.c.b16 %v1125, %v1124
    %v1136 = vpack.c.b16 %v1127, %v1126
    %v1137 = vpack.c.b16 %v1129, %v1128
    %1146 = vmatprep.subr.bf16.mxu0 0
    %1147 = vmatpush1.bf16.msra.mxu0 %v1137
    %1148 = vmatprep.subr.bf16.mxu0 0
    %1149 = vmatpush1.bf16.msra.mxu0 %v1136
    %1150 = vmatprep.subr.bf16.mxu0 0
    %1151 = vmatpush1.bf16.msra.mxu0 %v1135
    %1152 = vmatprep.subr.bf16.mxu0 0
    %1153 = vmatpush1.bf16.msra.mxu0 %v1134
    %1154 = vmatprep.subr.bf16.mxu0 0
    %1155 = vmatpush1.bf16.msra.mxu0 %v1133
    %1156 = vmatprep.subr.bf16.mxu0 0
    %1157 = vmatpush1.bf16.msra.mxu0 %v1132
    %1158 = vmatprep.subr.bf16.mxu0 0
    %1159 = vmatpush1.bf16.msra.mxu0 %v1131
    %1160 = vmatprep.subr.bf16.mxu0 0
    %1161 = vmatpush1.bf16.msra.mxu0 %v1130
    %1162 = vmatprep.subr.bf16.mxu0 0
    %1163 = vmatpush2.bf16.msra.mxu0 0
    %1164 = vmatprep.subr.bf16.mxu0 0
    %1165 = vmatpush2.bf16.msra.mxu0 0
    %1166 = vmatprep.subr.bf16.mxu0 0
    %1167 = vmatpush2.bf16.msra.mxu0 0
    %1168 = vmatprep.subr.bf16.mxu0 0
    %1169 = vmatpush2.bf16.msra.mxu0 0
    %1170 = vmatprep.subr.bf16.mxu0 0
    %1171 = vmatpush2.bf16.msra.mxu0 0
    %1172 = vmatprep.subr.bf16.mxu0 0
    %1173 = vmatpush2.bf16.msra.mxu0 0
    %1174 = vmatprep.subr.bf16.mxu0 0
    %1175 = vmatpush2.bf16.msra.mxu0 0
    %1176 = vmatprep.subr.bf16.mxu0 0
    %1177 = vmatpush2.bf16.msra.mxu0 0
    %1178 = vmatprep.mubr.bf16.mxu0 0
    %1179 = vmatmul.mubr.bf16.gmra.mxu0 %v1096
    %v1180 = vpop.f32.mrf.mxu0
    %v1181 = vadd.f32 0.0, %v1180
    %v1182 = vpop.f32.mrf.mxu0
    %v1183 = vpop.f32.mrf.mxu0
    %v1184 = vpop.f32.mrf.mxu0
    %1185 = vdwg.mxu0
    %v1186 = vadd.f32 %v1078, %v1181
    %v1187 = vpack.c.bf16 %v317, %v317
    %s1188 = scalar_lea.vmem %s4, 512
    %v1189 = vld [vmem:[%s1188] sm:$0xf]
    %v1190 = vld [vmem:[%s1188 + $0x4] sm:$0xf]
    %v1191 = vld [vmem:[%s1188 + $0x8] sm:$0xf]
    %v1192 = vld [vmem:[%s1188 + $0xc] sm:$0xf]
    %v1193 = vld [vmem:[%s1188 + $0x10] sm:$0xf]
    %v1194 = vld [vmem:[%s1188 + $0x14] sm:$0xf]
    %v1195 = vld [vmem:[%s1188 + $0x18] sm:$0xf]
    %v1196 = vld [vmem:[%s1188 + $0x1c] sm:$0xf]
    %v1197 = vld [vmem:[%s1188 + $0x20] sm:$0xf]
    %v1198 = vld [vmem:[%s1188 + $0x24] sm:$0xf]
    %v1199 = vld [vmem:[%s1188 + $0x28] sm:$0xf]
    %v1200 = vld [vmem:[%s1188 + $0x2c] sm:$0xf]
    %v1201 = vld [vmem:[%s1188 + $0x30] sm:$0xf]
    %v1202 = vld [vmem:[%s1188 + $0x34] sm:$0xf]
    %v1203 = vld [vmem:[%s1188 + $0x38] sm:$0xf]
    %v1204 = vld [vmem:[%s1188 + $0x3c] sm:$0xf]
    %v1221 = vunpack.c.l.b16 %v1189
    %v1222 = vunpack.c.l.b16 %v1190
    %v1223 = vunpack.c.l.b16 %v1191
    %v1224 = vunpack.c.l.b16 %v1192
    %v1225 = vunpack.c.l.b16 %v1193
    %v1226 = vunpack.c.l.b16 %v1194
    %v1227 = vunpack.c.l.b16 %v1195
    %v1228 = vunpack.c.l.b16 %v1196
    %v1229 = vunpack.c.l.b16 %v1197
    %v1230 = vunpack.c.l.b16 %v1198
    %v1231 = vunpack.c.l.b16 %v1199
    %v1232 = vunpack.c.l.b16 %v1200
    %v1233 = vunpack.c.l.b16 %v1201
    %v1234 = vunpack.c.l.b16 %v1202
    %v1235 = vunpack.c.l.b16 %v1203
    %v1236 = vunpack.c.l.b16 %v1204
    %v1237 = vpack.c.b16 %v1222, %v1221
    %v1238 = vpack.c.b16 %v1224, %v1223
    %v1239 = vpack.c.b16 %v1226, %v1225
    %v1240 = vpack.c.b16 %v1228, %v1227
    %v1241 = vpack.c.b16 %v1230, %v1229
    %v1242 = vpack.c.b16 %v1232, %v1231
    %v1243 = vpack.c.b16 %v1234, %v1233
    %v1244 = vpack.c.b16 %v1236, %v1235
    %1253 = vmatprep.subr.bf16.mxu0 0
    %1254 = vmatpush1.bf16.msra.mxu0 %v1244
    %1255 = vmatprep.subr.bf16.mxu0 0
    %1256 = vmatpush1.bf16.msra.mxu0 %v1243
    %1257 = vmatprep.subr.bf16.mxu0 0
    %1258 = vmatpush1.bf16.msra.mxu0 %v1242
    %1259 = vmatprep.subr.bf16.mxu0 0
    %1260 = vmatpush1.bf16.msra.mxu0 %v1241
    %1261 = vmatprep.subr.bf16.mxu0 0
    %1262 = vmatpush1.bf16.msra.mxu0 %v1240
    %1263 = vmatprep.subr.bf16.mxu0 0
    %1264 = vmatpush1.bf16.msra.mxu0 %v1239
    %1265 = vmatprep.subr.bf16.mxu0 0
    %1266 = vmatpush1.bf16.msra.mxu0 %v1238
    %1267 = vmatprep.subr.bf16.mxu0 0
    %1268 = vmatpush1.bf16.msra.mxu0 %v1237
    %1269 = vmatprep.subr.bf16.mxu0 0
    %1270 = vmatpush2.bf16.msra.mxu0 0
    %1271 = vmatprep.subr.bf16.mxu0 0
    %1272 = vmatpush2.bf16.msra.mxu0 0
    %1273 = vmatprep.subr.bf16.mxu0 0
    %1274 = vmatpush2.bf16.msra.mxu0 0
    %1275 = vmatprep.subr.bf16.mxu0 0
    %1276 = vmatpush2.bf16.msra.mxu0 0
    %1277 = vmatprep.subr.bf16.mxu0 0
    %1278 = vmatpush2.bf16.msra.mxu0 0
    %1279 = vmatprep.subr.bf16.mxu0 0
    %1280 = vmatpush2.bf16.msra.mxu0 0
    %1281 = vmatprep.subr.bf16.mxu0 0
    %1282 = vmatpush2.bf16.msra.mxu0 0
    %1283 = vmatprep.subr.bf16.mxu0 0
    %1284 = vmatpush2.bf16.msra.mxu0 0
    %1285 = vmatprep.mubr.bf16.mxu0 0
    %1286 = vmatmul.mubr.bf16.gmra.mxu0 %v1187
    %v1287 = vpop.f32.mrf.mxu0
    %v1288 = vadd.f32 0.0, %v1287
    %v1289 = vpop.f32.mrf.mxu0
    %v1290 = vpop.f32.mrf.mxu0
    %v1291 = vpop.f32.mrf.mxu0
    %1292 = vdwg.mxu0
    %v1293 = vadd.f32 %v1186, %v1288
    %s1294 = scalar_lea.vmem %s4, 576
    %v1295 = vld [vmem:[%s1294] sm:$0xf]
    %v1296 = vld [vmem:[%s1294 + $0x4] sm:$0xf]
    %v1297 = vld [vmem:[%s1294 + $0x8] sm:$0xf]
    %v1298 = vld [vmem:[%s1294 + $0xc] sm:$0xf]
    %v1299 = vld [vmem:[%s1294 + $0x10] sm:$0xf]
    %v1300 = vld [vmem:[%s1294 + $0x14] sm:$0xf]
    %v1301 = vld [vmem:[%s1294 + $0x18] sm:$0xf]
    %v1302 = vld [vmem:[%s1294 + $0x1c] sm:$0xf]
    %v1303 = vld [vmem:[%s1294 + $0x20] sm:$0xf]
    %v1304 = vld [vmem:[%s1294 + $0x24] sm:$0xf]
    %v1305 = vld [vmem:[%s1294 + $0x28] sm:$0xf]
    %v1306 = vld [vmem:[%s1294 + $0x2c] sm:$0xf]
    %v1307 = vld [vmem:[%s1294 + $0x30] sm:$0xf]
    %v1308 = vld [vmem:[%s1294 + $0x34] sm:$0xf]
    %v1309 = vld [vmem:[%s1294 + $0x38] sm:$0xf]
    %v1310 = vld [vmem:[%s1294 + $0x3c] sm:$0xf]
    %v1312 = vrot.slane %v1187, 1
    %v1330 = vunpack.c.l.b16 %v1295
    %v1331 = vunpack.c.l.b16 %v1296
    %v1332 = vunpack.c.l.b16 %v1297
    %v1333 = vunpack.c.l.b16 %v1298
    %v1334 = vunpack.c.l.b16 %v1299
    %v1335 = vunpack.c.l.b16 %v1300
    %v1336 = vunpack.c.l.b16 %v1301
    %v1337 = vunpack.c.l.b16 %v1302
    %v1338 = vunpack.c.l.b16 %v1303
    %v1339 = vunpack.c.l.b16 %v1304
    %v1340 = vunpack.c.l.b16 %v1305
    %v1341 = vunpack.c.l.b16 %v1306
    %v1342 = vunpack.c.l.b16 %v1307
    %v1343 = vunpack.c.l.b16 %v1308
    %v1344 = vunpack.c.l.b16 %v1309
    %v1345 = vunpack.c.l.b16 %v1310
    %v1346 = vpack.c.b16 %v1331, %v1330
    %v1347 = vpack.c.b16 %v1333, %v1332
    %v1348 = vpack.c.b16 %v1335, %v1334
    %v1349 = vpack.c.b16 %v1337, %v1336
    %v1350 = vpack.c.b16 %v1339, %v1338
    %v1351 = vpack.c.b16 %v1341, %v1340
    %v1352 = vpack.c.b16 %v1343, %v1342
    %v1353 = vpack.c.b16 %v1345, %v1344
    %1362 = vmatprep.subr.bf16.mxu0 0
    %1363 = vmatpush1.bf16.msra.mxu0 %v1353
    %1364 = vmatprep.subr.bf16.mxu0 0
    %1365 = vmatpush1.bf16.msra.mxu0 %v1352
    %1366 = vmatprep.subr.bf16.mxu0 0
    %1367 = vmatpush1.bf16.msra.mxu0 %v1351
    %1368 = vmatprep.subr.bf16.mxu0 0
    %1369 = vmatpush1.bf16.msra.mxu0 %v1350
    %1370 = vmatprep.subr.bf16.mxu0 0
    %1371 = vmatpush1.bf16.msra.mxu0 %v1349
    %1372 = vmatprep.subr.bf16.mxu0 0
    %1373 = vmatpush1.bf16.msra.mxu0 %v1348
    %1374 = vmatprep.subr.bf16.mxu0 0
    %1375 = vmatpush1.bf16.msra.mxu0 %v1347
    %1376 = vmatprep.subr.bf16.mxu0 0
    %1377 = vmatpush1.bf16.msra.mxu0 %v1346
    %1378 = vmatprep.subr.bf16.mxu0 0
    %1379 = vmatpush2.bf16.msra.mxu0 0
    %1380 = vmatprep.subr.bf16.mxu0 0
    %1381 = vmatpush2.bf16.msra.mxu0 0
    %1382 = vmatprep.subr.bf16.mxu0 0
    %1383 = vmatpush2.bf16.msra.mxu0 0
    %1384 = vmatprep.subr.bf16.mxu0 0
    %1385 = vmatpush2.bf16.msra.mxu0 0
    %1386 = vmatprep.subr.bf16.mxu0 0
    %1387 = vmatpush2.bf16.msra.mxu0 0
    %1388 = vmatprep.subr.bf16.mxu0 0
    %1389 = vmatpush2.bf16.msra.mxu0 0
    %1390 = vmatprep.subr.bf16.mxu0 0
    %1391 = vmatpush2.bf16.msra.mxu0 0
    %1392 = vmatprep.subr.bf16.mxu0 0
    %1393 = vmatpush2.bf16.msra.mxu0 0
    %1394 = vmatprep.mubr.bf16.mxu0 0
    %1395 = vmatmul.mubr.bf16.gmra.mxu0 %v1312
    %v1396 = vpop.f32.mrf.mxu0
    %v1397 = vadd.f32 0.0, %v1396
    %v1398 = vpop.f32.mrf.mxu0
    %v1399 = vpop.f32.mrf.mxu0
    %v1400 = vpop.f32.mrf.mxu0
    %1401 = vdwg.mxu0
    %v1402 = vadd.f32 %v1293, %v1397
    %s1403 = scalar_lea.vmem %s4, 640
    %v1404 = vld [vmem:[%s1403] sm:$0xf]
    %v1405 = vld [vmem:[%s1403 + $0x4] sm:$0xf]
    %v1406 = vld [vmem:[%s1403 + $0x8] sm:$0xf]
    %v1407 = vld [vmem:[%s1403 + $0xc] sm:$0xf]
    %v1408 = vld [vmem:[%s1403 + $0x10] sm:$0xf]
    %v1409 = vld [vmem:[%s1403 + $0x14] sm:$0xf]
    %v1410 = vld [vmem:[%s1403 + $0x18] sm:$0xf]
    %v1411 = vld [vmem:[%s1403 + $0x1c] sm:$0xf]
    %v1412 = vld [vmem:[%s1403 + $0x20] sm:$0xf]
    %v1413 = vld [vmem:[%s1403 + $0x24] sm:$0xf]
    %v1414 = vld [vmem:[%s1403 + $0x28] sm:$0xf]
    %v1415 = vld [vmem:[%s1403 + $0x2c] sm:$0xf]
    %v1416 = vld [vmem:[%s1403 + $0x30] sm:$0xf]
    %v1417 = vld [vmem:[%s1403 + $0x34] sm:$0xf]
    %v1418 = vld [vmem:[%s1403 + $0x38] sm:$0xf]
    %v1419 = vld [vmem:[%s1403 + $0x3c] sm:$0xf]
    %v1420 = vrot.slane %v1187, 2
    %v1438 = vunpack.c.l.b16 %v1404
    %v1439 = vunpack.c.l.b16 %v1405
    %v1440 = vunpack.c.l.b16 %v1406
    %v1441 = vunpack.c.l.b16 %v1407
    %v1442 = vunpack.c.l.b16 %v1408
    %v1443 = vunpack.c.l.b16 %v1409
    %v1444 = vunpack.c.l.b16 %v1410
    %v1445 = vunpack.c.l.b16 %v1411
    %v1446 = vunpack.c.l.b16 %v1412
    %v1447 = vunpack.c.l.b16 %v1413
    %v1448 = vunpack.c.l.b16 %v1414
    %v1449 = vunpack.c.l.b16 %v1415
    %v1450 = vunpack.c.l.b16 %v1416
    %v1451 = vunpack.c.l.b16 %v1417
    %v1452 = vunpack.c.l.b16 %v1418
    %v1453 = vunpack.c.l.b16 %v1419
    %v1454 = vpack.c.b16 %v1439, %v1438
    %v1455 = vpack.c.b16 %v1441, %v1440
    %v1456 = vpack.c.b16 %v1443, %v1442
    %v1457 = vpack.c.b16 %v1445, %v1444
    %v1458 = vpack.c.b16 %v1447, %v1446
    %v1459 = vpack.c.b16 %v1449, %v1448
    %v1460 = vpack.c.b16 %v1451, %v1450
    %v1461 = vpack.c.b16 %v1453, %v1452
    %1470 = vmatprep.subr.bf16.mxu0 0
    %1471 = vmatpush1.bf16.msra.mxu0 %v1461
    %1472 = vmatprep.subr.bf16.mxu0 0
    %1473 = vmatpush1.bf16.msra.mxu0 %v1460
    %1474 = vmatprep.subr.bf16.mxu0 0
    %1475 = vmatpush1.bf16.msra.mxu0 %v1459
    %1476 = vmatprep.subr.bf16.mxu0 0
    %1477 = vmatpush1.bf16.msra.mxu0 %v1458
    %1478 = vmatprep.subr.bf16.mxu0 0
    %1479 = vmatpush1.bf16.msra.mxu0 %v1457
    %1480 = vmatprep.subr.bf16.mxu0 0
    %1481 = vmatpush1.bf16.msra.mxu0 %v1456
    %1482 = vmatprep.subr.bf16.mxu0 0
    %1483 = vmatpush1.bf16.msra.mxu0 %v1455
    %1484 = vmatprep.subr.bf16.mxu0 0
    %1485 = vmatpush1.bf16.msra.mxu0 %v1454
    %1486 = vmatprep.subr.bf16.mxu0 0
    %1487 = vmatpush2.bf16.msra.mxu0 0
    %1488 = vmatprep.subr.bf16.mxu0 0
    %1489 = vmatpush2.bf16.msra.mxu0 0
    %1490 = vmatprep.subr.bf16.mxu0 0
    %1491 = vmatpush2.bf16.msra.mxu0 0
    %1492 = vmatprep.subr.bf16.mxu0 0
    %1493 = vmatpush2.bf16.msra.mxu0 0
    %1494 = vmatprep.subr.bf16.mxu0 0
    %1495 = vmatpush2.bf16.msra.mxu0 0
    %1496 = vmatprep.subr.bf16.mxu0 0
    %1497 = vmatpush2.bf16.msra.mxu0 0
    %1498 = vmatprep.subr.bf16.mxu0 0
    %1499 = vmatpush2.bf16.msra.mxu0 0
    %1500 = vmatprep.subr.bf16.mxu0 0
    %1501 = vmatpush2.bf16.msra.mxu0 0
    %1502 = vmatprep.mubr.bf16.mxu0 0
    %1503 = vmatmul.mubr.bf16.gmra.mxu0 %v1420
    %v1504 = vpop.f32.mrf.mxu0
    %v1505 = vadd.f32 0.0, %v1504
    %v1506 = vpop.f32.mrf.mxu0
    %v1507 = vpop.f32.mrf.mxu0
    %v1508 = vpop.f32.mrf.mxu0
    %1509 = vdwg.mxu0
    %v1510 = vadd.f32 %v1402, %v1505
    %s1511 = scalar_lea.vmem %s4, 704
    %v1512 = vld [vmem:[%s1511] sm:$0xf]
    %v1513 = vld [vmem:[%s1511 + $0x4] sm:$0xf]
    %v1514 = vld [vmem:[%s1511 + $0x8] sm:$0xf]
    %v1515 = vld [vmem:[%s1511 + $0xc] sm:$0xf]
    %v1516 = vld [vmem:[%s1511 + $0x10] sm:$0xf]
    %v1517 = vld [vmem:[%s1511 + $0x14] sm:$0xf]
    %v1518 = vld [vmem:[%s1511 + $0x18] sm:$0xf]
    %v1519 = vld [vmem:[%s1511 + $0x1c] sm:$0xf]
    %v1520 = vld [vmem:[%s1511 + $0x20] sm:$0xf]
    %v1521 = vld [vmem:[%s1511 + $0x24] sm:$0xf]
    %v1522 = vld [vmem:[%s1511 + $0x28] sm:$0xf]
    %v1523 = vld [vmem:[%s1511 + $0x2c] sm:$0xf]
    %v1524 = vld [vmem:[%s1511 + $0x30] sm:$0xf]
    %v1525 = vld [vmem:[%s1511 + $0x34] sm:$0xf]
    %v1526 = vld [vmem:[%s1511 + $0x38] sm:$0xf]
    %v1527 = vld [vmem:[%s1511 + $0x3c] sm:$0xf]
    %v1528 = vrot.slane %v1187, 3
    %v1546 = vunpack.c.l.b16 %v1512
    %v1547 = vunpack.c.l.b16 %v1513
    %v1548 = vunpack.c.l.b16 %v1514
    %v1549 = vunpack.c.l.b16 %v1515
    %v1550 = vunpack.c.l.b16 %v1516
    %v1551 = vunpack.c.l.b16 %v1517
    %v1552 = vunpack.c.l.b16 %v1518
    %v1553 = vunpack.c.l.b16 %v1519
    %v1554 = vunpack.c.l.b16 %v1520
    %v1555 = vunpack.c.l.b16 %v1521
    %v1556 = vunpack.c.l.b16 %v1522
    %v1557 = vunpack.c.l.b16 %v1523
    %v1558 = vunpack.c.l.b16 %v1524
    %v1559 = vunpack.c.l.b16 %v1525
    %v1560 = vunpack.c.l.b16 %v1526
    %v1561 = vunpack.c.l.b16 %v1527
    %v1562 = vpack.c.b16 %v1547, %v1546
    %v1563 = vpack.c.b16 %v1549, %v1548
    %v1564 = vpack.c.b16 %v1551, %v1550
    %v1565 = vpack.c.b16 %v1553, %v1552
    %v1566 = vpack.c.b16 %v1555, %v1554
    %v1567 = vpack.c.b16 %v1557, %v1556
    %v1568 = vpack.c.b16 %v1559, %v1558
    %v1569 = vpack.c.b16 %v1561, %v1560
    %1578 = vmatprep.subr.bf16.mxu0 0
    %1579 = vmatpush1.bf16.msra.mxu0 %v1569
    %1580 = vmatprep.subr.bf16.mxu0 0
    %1581 = vmatpush1.bf16.msra.mxu0 %v1568
    %1582 = vmatprep.subr.bf16.mxu0 0
    %1583 = vmatpush1.bf16.msra.mxu0 %v1567
    %1584 = vmatprep.subr.bf16.mxu0 0
    %1585 = vmatpush1.bf16.msra.mxu0 %v1566
    %1586 = vmatprep.subr.bf16.mxu0 0
    %1587 = vmatpush1.bf16.msra.mxu0 %v1565
    %1588 = vmatprep.subr.bf16.mxu0 0
    %1589 = vmatpush1.bf16.msra.mxu0 %v1564
    %1590 = vmatprep.subr.bf16.mxu0 0
    %1591 = vmatpush1.bf16.msra.mxu0 %v1563
    %1592 = vmatprep.subr.bf16.mxu0 0
    %1593 = vmatpush1.bf16.msra.mxu0 %v1562
    %1594 = vmatprep.subr.bf16.mxu0 0
    %1595 = vmatpush2.bf16.msra.mxu0 0
    %1596 = vmatprep.subr.bf16.mxu0 0
    %1597 = vmatpush2.bf16.msra.mxu0 0
    %1598 = vmatprep.subr.bf16.mxu0 0
    %1599 = vmatpush2.bf16.msra.mxu0 0
    %1600 = vmatprep.subr.bf16.mxu0 0
    %1601 = vmatpush2.bf16.msra.mxu0 0
    %1602 = vmatprep.subr.bf16.mxu0 0
    %1603 = vmatpush2.bf16.msra.mxu0 0
    %1604 = vmatprep.subr.bf16.mxu0 0
    %1605 = vmatpush2.bf16.msra.mxu0 0
    %1606 = vmatprep.subr.bf16.mxu0 0
    %1607 = vmatpush2.bf16.msra.mxu0 0
    %1608 = vmatprep.subr.bf16.mxu0 0
    %1609 = vmatpush2.bf16.msra.mxu0 0
    %1610 = vmatprep.mubr.bf16.mxu0 0
    %1611 = vmatmul.mubr.bf16.gmra.mxu0 %v1528
    %v1612 = vpop.f32.mrf.mxu0
    %v1613 = vadd.f32 0.0, %v1612
    %v1614 = vpop.f32.mrf.mxu0
    %v1615 = vpop.f32.mrf.mxu0
    %v1616 = vpop.f32.mrf.mxu0
    %1617 = vdwg.mxu0
    %v1618 = vadd.f32 %v1510, %v1613
    %v1619 = vpack.c.bf16 %v318, %v318
    %s1620 = scalar_lea.vmem %s4, 768
    %v1621 = vld [vmem:[%s1620] sm:$0xf]
    %v1622 = vld [vmem:[%s1620 + $0x4] sm:$0xf]
    %v1623 = vld [vmem:[%s1620 + $0x8] sm:$0xf]
    %v1624 = vld [vmem:[%s1620 + $0xc] sm:$0xf]
    %v1625 = vld [vmem:[%s1620 + $0x10] sm:$0xf]
    %v1626 = vld [vmem:[%s1620 + $0x14] sm:$0xf]
    %v1627 = vld [vmem:[%s1620 + $0x18] sm:$0xf]
    %v1628 = vld [vmem:[%s1620 + $0x1c] sm:$0xf]
    %v1629 = vld [vmem:[%s1620 + $0x20] sm:$0xf]
    %v1630 = vld [vmem:[%s1620 + $0x24] sm:$0xf]
    %v1631 = vld [vmem:[%s1620 + $0x28] sm:$0xf]
    %v1632 = vld [vmem:[%s1620 + $0x2c] sm:$0xf]
    %v1633 = vld [vmem:[%s1620 + $0x30] sm:$0xf]
    %v1634 = vld [vmem:[%s1620 + $0x34] sm:$0xf]
    %v1635 = vld [vmem:[%s1620 + $0x38] sm:$0xf]
    %v1636 = vld [vmem:[%s1620 + $0x3c] sm:$0xf]
    %v1653 = vunpack.c.l.b16 %v1621
    %v1654 = vunpack.c.l.b16 %v1622
    %v1655 = vunpack.c.l.b16 %v1623
    %v1656 = vunpack.c.l.b16 %v1624
    %v1657 = vunpack.c.l.b16 %v1625
    %v1658 = vunpack.c.l.b16 %v1626
    %v1659 = vunpack.c.l.b16 %v1627
    %v1660 = vunpack.c.l.b16 %v1628
    %v1661 = vunpack.c.l.b16 %v1629
    %v1662 = vunpack.c.l.b16 %v1630
    %v1663 = vunpack.c.l.b16 %v1631
    %v1664 = vunpack.c.l.b16 %v1632
    %v1665 = vunpack.c.l.b16 %v1633
    %v1666 = vunpack.c.l.b16 %v1634
    %v1667 = vunpack.c.l.b16 %v1635
    %v1668 = vunpack.c.l.b16 %v1636
    %v1669 = vpack.c.b16 %v1654, %v1653
    %v1670 = vpack.c.b16 %v1656, %v1655
    %v1671 = vpack.c.b16 %v1658, %v1657
    %v1672 = vpack.c.b16 %v1660, %v1659
    %v1673 = vpack.c.b16 %v1662, %v1661
    %v1674 = vpack.c.b16 %v1664, %v1663
    %v1675 = vpack.c.b16 %v1666, %v1665
    %v1676 = vpack.c.b16 %v1668, %v1667
    %1685 = vmatprep.subr.bf16.mxu0 0
    %1686 = vmatpush1.bf16.msra.mxu0 %v1676
    %1687 = vmatprep.subr.bf16.mxu0 0
    %1688 = vmatpush1.bf16.msra.mxu0 %v1675
    %1689 = vmatprep.subr.bf16.mxu0 0
    %1690 = vmatpush1.bf16.msra.mxu0 %v1674
    %1691 = vmatprep.subr.bf16.mxu0 0
    %1692 = vmatpush1.bf16.msra.mxu0 %v1673
    %1693 = vmatprep.subr.bf16.mxu0 0
    %1694 = vmatpush1.bf16.msra.mxu0 %v1672
    %1695 = vmatprep.subr.bf16.mxu0 0
    %1696 = vmatpush1.bf16.msra.mxu0 %v1671
    %1697 = vmatprep.subr.bf16.mxu0 0
    %1698 = vmatpush1.bf16.msra.mxu0 %v1670
    %1699 = vmatprep.subr.bf16.mxu0 0
    %1700 = vmatpush1.bf16.msra.mxu0 %v1669
    %1701 = vmatprep.subr.bf16.mxu0 0
    %1702 = vmatpush2.bf16.msra.mxu0 0
    %1703 = vmatprep.subr.bf16.mxu0 0
    %1704 = vmatpush2.bf16.msra.mxu0 0
    %1705 = vmatprep.subr.bf16.mxu0 0
    %1706 = vmatpush2.bf16.msra.mxu0 0
    %1707 = vmatprep.subr.bf16.mxu0 0
    %1708 = vmatpush2.bf16.msra.mxu0 0
    %1709 = vmatprep.subr.bf16.mxu0 0
    %1710 = vmatpush2.bf16.msra.mxu0 0
    %1711 = vmatprep.subr.bf16.mxu0 0
    %1712 = vmatpush2.bf16.msra.mxu0 0
    %1713 = vmatprep.subr.bf16.mxu0 0
    %1714 = vmatpush2.bf16.msra.mxu0 0
    %1715 = vmatprep.subr.bf16.mxu0 0
    %1716 = vmatpush2.bf16.msra.mxu0 0
    %1717 = vmatprep.mubr.bf16.mxu0 0
    %1718 = vmatmul.mubr.bf16.gmra.mxu0 %v1619
    %v1719 = vpop.f32.mrf.mxu0
    %v1720 = vadd.f32 0.0, %v1719
    %v1721 = vpop.f32.mrf.mxu0
    %v1722 = vpop.f32.mrf.mxu0
    %v1723 = vpop.f32.mrf.mxu0
    %1724 = vdwg.mxu0
    %v1725 = vadd.f32 %v1618, %v1720
    %s1726 = scalar_lea.vmem %s4, 832
    %v1727 = vld [vmem:[%s1726] sm:$0xf]
    %v1728 = vld [vmem:[%s1726 + $0x4] sm:$0xf]
    %v1729 = vld [vmem:[%s1726 + $0x8] sm:$0xf]
    %v1730 = vld [vmem:[%s1726 + $0xc] sm:$0xf]
    %v1731 = vld [vmem:[%s1726 + $0x10] sm:$0xf]
    %v1732 = vld [vmem:[%s1726 + $0x14] sm:$0xf]
    %v1733 = vld [vmem:[%s1726 + $0x18] sm:$0xf]
    %v1734 = vld [vmem:[%s1726 + $0x1c] sm:$0xf]
    %v1735 = vld [vmem:[%s1726 + $0x20] sm:$0xf]
    %v1736 = vld [vmem:[%s1726 + $0x24] sm:$0xf]
    %v1737 = vld [vmem:[%s1726 + $0x28] sm:$0xf]
    %v1738 = vld [vmem:[%s1726 + $0x2c] sm:$0xf]
    %v1739 = vld [vmem:[%s1726 + $0x30] sm:$0xf]
    %v1740 = vld [vmem:[%s1726 + $0x34] sm:$0xf]
    %v1741 = vld [vmem:[%s1726 + $0x38] sm:$0xf]
    %v1742 = vld [vmem:[%s1726 + $0x3c] sm:$0xf]
    %v1744 = vrot.slane %v1619, 1
    %v1762 = vunpack.c.l.b16 %v1727
    %v1763 = vunpack.c.l.b16 %v1728
    %v1764 = vunpack.c.l.b16 %v1729
    %v1765 = vunpack.c.l.b16 %v1730
    %v1766 = vunpack.c.l.b16 %v1731
    %v1767 = vunpack.c.l.b16 %v1732
    %v1768 = vunpack.c.l.b16 %v1733
    %v1769 = vunpack.c.l.b16 %v1734
    %v1770 = vunpack.c.l.b16 %v1735
    %v1771 = vunpack.c.l.b16 %v1736
    %v1772 = vunpack.c.l.b16 %v1737
    %v1773 = vunpack.c.l.b16 %v1738
    %v1774 = vunpack.c.l.b16 %v1739
    %v1775 = vunpack.c.l.b16 %v1740
    %v1776 = vunpack.c.l.b16 %v1741
    %v1777 = vunpack.c.l.b16 %v1742
    %v1778 = vpack.c.b16 %v1763, %v1762
    %v1779 = vpack.c.b16 %v1765, %v1764
    %v1780 = vpack.c.b16 %v1767, %v1766
    %v1781 = vpack.c.b16 %v1769, %v1768
    %v1782 = vpack.c.b16 %v1771, %v1770
    %v1783 = vpack.c.b16 %v1773, %v1772
    %v1784 = vpack.c.b16 %v1775, %v1774
    %v1785 = vpack.c.b16 %v1777, %v1776
    %1794 = vmatprep.subr.bf16.mxu0 0
    %1795 = vmatpush1.bf16.msra.mxu0 %v1785
    %1796 = vmatprep.subr.bf16.mxu0 0
    %1797 = vmatpush1.bf16.msra.mxu0 %v1784
    %1798 = vmatprep.subr.bf16.mxu0 0
    %1799 = vmatpush1.bf16.msra.mxu0 %v1783
    %1800 = vmatprep.subr.bf16.mxu0 0
    %1801 = vmatpush1.bf16.msra.mxu0 %v1782
    %1802 = vmatprep.subr.bf16.mxu0 0
    %1803 = vmatpush1.bf16.msra.mxu0 %v1781
    %1804 = vmatprep.subr.bf16.mxu0 0
    %1805 = vmatpush1.bf16.msra.mxu0 %v1780
    %1806 = vmatprep.subr.bf16.mxu0 0
    %1807 = vmatpush1.bf16.msra.mxu0 %v1779
    %1808 = vmatprep.subr.bf16.mxu0 0
    %1809 = vmatpush1.bf16.msra.mxu0 %v1778
    %1810 = vmatprep.subr.bf16.mxu0 0
    %1811 = vmatpush2.bf16.msra.mxu0 0
    %1812 = vmatprep.subr.bf16.mxu0 0
    %1813 = vmatpush2.bf16.msra.mxu0 0
    %1814 = vmatprep.subr.bf16.mxu0 0
    %1815 = vmatpush2.bf16.msra.mxu0 0
    %1816 = vmatprep.subr.bf16.mxu0 0
    %1817 = vmatpush2.bf16.msra.mxu0 0
    %1818 = vmatprep.subr.bf16.mxu0 0
    %1819 = vmatpush2.bf16.msra.mxu0 0
    %1820 = vmatprep.subr.bf16.mxu0 0
    %1821 = vmatpush2.bf16.msra.mxu0 0
    %1822 = vmatprep.subr.bf16.mxu0 0
    %1823 = vmatpush2.bf16.msra.mxu0 0
    %1824 = vmatprep.subr.bf16.mxu0 0
    %1825 = vmatpush2.bf16.msra.mxu0 0
    %1826 = vmatprep.mubr.bf16.mxu0 0
    %1827 = vmatmul.mubr.bf16.gmra.mxu0 %v1744
    %v1828 = vpop.f32.mrf.mxu0
    %v1829 = vadd.f32 0.0, %v1828
    %v1830 = vpop.f32.mrf.mxu0
    %v1831 = vpop.f32.mrf.mxu0
    %v1832 = vpop.f32.mrf.mxu0
    %1833 = vdwg.mxu0
    %v1834 = vadd.f32 %v1725, %v1829
    %s1835 = scalar_lea.vmem %s4, 896
    %v1836 = vld [vmem:[%s1835] sm:$0xf]
    %v1837 = vld [vmem:[%s1835 + $0x4] sm:$0xf]
    %v1838 = vld [vmem:[%s1835 + $0x8] sm:$0xf]
    %v1839 = vld [vmem:[%s1835 + $0xc] sm:$0xf]
    %v1840 = vld [vmem:[%s1835 + $0x10] sm:$0xf]
    %v1841 = vld [vmem:[%s1835 + $0x14] sm:$0xf]
    %v1842 = vld [vmem:[%s1835 + $0x18] sm:$0xf]
    %v1843 = vld [vmem:[%s1835 + $0x1c] sm:$0xf]
    %v1844 = vld [vmem:[%s1835 + $0x20] sm:$0xf]
    %v1845 = vld [vmem:[%s1835 + $0x24] sm:$0xf]
    %v1846 = vld [vmem:[%s1835 + $0x28] sm:$0xf]
    %v1847 = vld [vmem:[%s1835 + $0x2c] sm:$0xf]
    %v1848 = vld [vmem:[%s1835 + $0x30] sm:$0xf]
    %v1849 = vld [vmem:[%s1835 + $0x34] sm:$0xf]
    %v1850 = vld [vmem:[%s1835 + $0x38] sm:$0xf]
    %v1851 = vld [vmem:[%s1835 + $0x3c] sm:$0xf]
    %v1852 = vrot.slane %v1619, 2
    %v1870 = vunpack.c.l.b16 %v1836
    %v1871 = vunpack.c.l.b16 %v1837
    %v1872 = vunpack.c.l.b16 %v1838
    %v1873 = vunpack.c.l.b16 %v1839
    %v1874 = vunpack.c.l.b16 %v1840
    %v1875 = vunpack.c.l.b16 %v1841
    %v1876 = vunpack.c.l.b16 %v1842
    %v1877 = vunpack.c.l.b16 %v1843
    %v1878 = vunpack.c.l.b16 %v1844
    %v1879 = vunpack.c.l.b16 %v1845
    %v1880 = vunpack.c.l.b16 %v1846
    %v1881 = vunpack.c.l.b16 %v1847
    %v1882 = vunpack.c.l.b16 %v1848
    %v1883 = vunpack.c.l.b16 %v1849
    %v1884 = vunpack.c.l.b16 %v1850
    %v1885 = vunpack.c.l.b16 %v1851
    %v1886 = vpack.c.b16 %v1871, %v1870
    %v1887 = vpack.c.b16 %v1873, %v1872
    %v1888 = vpack.c.b16 %v1875, %v1874
    %v1889 = vpack.c.b16 %v1877, %v1876
    %v1890 = vpack.c.b16 %v1879, %v1878
    %v1891 = vpack.c.b16 %v1881, %v1880
    %v1892 = vpack.c.b16 %v1883, %v1882
    %v1893 = vpack.c.b16 %v1885, %v1884
    %1902 = vmatprep.subr.bf16.mxu0 0
    %1903 = vmatpush1.bf16.msra.mxu0 %v1893
    %1904 = vmatprep.subr.bf16.mxu0 0
    %1905 = vmatpush1.bf16.msra.mxu0 %v1892
    %1906 = vmatprep.subr.bf16.mxu0 0
    %1907 = vmatpush1.bf16.msra.mxu0 %v1891
    %1908 = vmatprep.subr.bf16.mxu0 0
    %1909 = vmatpush1.bf16.msra.mxu0 %v1890
    %1910 = vmatprep.subr.bf16.mxu0 0
    %1911 = vmatpush1.bf16.msra.mxu0 %v1889
    %1912 = vmatprep.subr.bf16.mxu0 0
    %1913 = vmatpush1.bf16.msra.mxu0 %v1888
    %1914 = vmatprep.subr.bf16.mxu0 0
    %1915 = vmatpush1.bf16.msra.mxu0 %v1887
    %1916 = vmatprep.subr.bf16.mxu0 0
    %1917 = vmatpush1.bf16.msra.mxu0 %v1886
    %1918 = vmatprep.subr.bf16.mxu0 0
    %1919 = vmatpush2.bf16.msra.mxu0 0
    %1920 = vmatprep.subr.bf16.mxu0 0
    %1921 = vmatpush2.bf16.msra.mxu0 0
    %1922 = vmatprep.subr.bf16.mxu0 0
    %1923 = vmatpush2.bf16.msra.mxu0 0
    %1924 = vmatprep.subr.bf16.mxu0 0
    %1925 = vmatpush2.bf16.msra.mxu0 0
    %1926 = vmatprep.subr.bf16.mxu0 0
    %1927 = vmatpush2.bf16.msra.mxu0 0
    %1928 = vmatprep.subr.bf16.mxu0 0
    %1929 = vmatpush2.bf16.msra.mxu0 0
    %1930 = vmatprep.subr.bf16.mxu0 0
    %1931 = vmatpush2.bf16.msra.mxu0 0
    %1932 = vmatprep.subr.bf16.mxu0 0
    %1933 = vmatpush2.bf16.msra.mxu0 0
    %1934 = vmatprep.mubr.bf16.mxu0 0
    %1935 = vmatmul.mubr.bf16.gmra.mxu0 %v1852
    %v1936 = vpop.f32.mrf.mxu0
    %v1937 = vadd.f32 0.0, %v1936
    %v1938 = vpop.f32.mrf.mxu0
    %v1939 = vpop.f32.mrf.mxu0
    %v1940 = vpop.f32.mrf.mxu0
    %1941 = vdwg.mxu0
    %v1942 = vadd.f32 %v1834, %v1937
    %s1943 = scalar_lea.vmem %s4, 960
    %v1944 = vld [vmem:[%s1943] sm:$0xf]
    %v1945 = vld [vmem:[%s1943 + $0x4] sm:$0xf]
    %v1946 = vld [vmem:[%s1943 + $0x8] sm:$0xf]
    %v1947 = vld [vmem:[%s1943 + $0xc] sm:$0xf]
    %v1948 = vld [vmem:[%s1943 + $0x10] sm:$0xf]
    %v1949 = vld [vmem:[%s1943 + $0x14] sm:$0xf]
    %v1950 = vld [vmem:[%s1943 + $0x18] sm:$0xf]
    %v1951 = vld [vmem:[%s1943 + $0x1c] sm:$0xf]
    %v1952 = vld [vmem:[%s1943 + $0x20] sm:$0xf]
    %v1953 = vld [vmem:[%s1943 + $0x24] sm:$0xf]
    %v1954 = vld [vmem:[%s1943 + $0x28] sm:$0xf]
    %v1955 = vld [vmem:[%s1943 + $0x2c] sm:$0xf]
    %v1956 = vld [vmem:[%s1943 + $0x30] sm:$0xf]
    %v1957 = vld [vmem:[%s1943 + $0x34] sm:$0xf]
    %v1958 = vld [vmem:[%s1943 + $0x38] sm:$0xf]
    %v1959 = vld [vmem:[%s1943 + $0x3c] sm:$0xf]
    %v1960 = vrot.slane %v1619, 3
    %v1978 = vunpack.c.l.b16 %v1944
    %v1979 = vunpack.c.l.b16 %v1945
    %v1980 = vunpack.c.l.b16 %v1946
    %v1981 = vunpack.c.l.b16 %v1947
    %v1982 = vunpack.c.l.b16 %v1948
    %v1983 = vunpack.c.l.b16 %v1949
    %v1984 = vunpack.c.l.b16 %v1950
    %v1985 = vunpack.c.l.b16 %v1951
    %v1986 = vunpack.c.l.b16 %v1952
    %v1987 = vunpack.c.l.b16 %v1953
    %v1988 = vunpack.c.l.b16 %v1954
    %v1989 = vunpack.c.l.b16 %v1955
    %v1990 = vunpack.c.l.b16 %v1956
    %v1991 = vunpack.c.l.b16 %v1957
    %v1992 = vunpack.c.l.b16 %v1958
    %v1993 = vunpack.c.l.b16 %v1959
    %v1994 = vpack.c.b16 %v1979, %v1978
    %v1995 = vpack.c.b16 %v1981, %v1980
    %v1996 = vpack.c.b16 %v1983, %v1982
    %v1997 = vpack.c.b16 %v1985, %v1984
    %v1998 = vpack.c.b16 %v1987, %v1986
    %v1999 = vpack.c.b16 %v1989, %v1988
    %v2000 = vpack.c.b16 %v1991, %v1990
    %v2001 = vpack.c.b16 %v1993, %v1992
    %2010 = vmatprep.subr.bf16.mxu0 0
    %2011 = vmatpush1.bf16.msra.mxu0 %v2001
    %2012 = vmatprep.subr.bf16.mxu0 0
    %2013 = vmatpush1.bf16.msra.mxu0 %v2000
    %2014 = vmatprep.subr.bf16.mxu0 0
    %2015 = vmatpush1.bf16.msra.mxu0 %v1999
    %2016 = vmatprep.subr.bf16.mxu0 0
    %2017 = vmatpush1.bf16.msra.mxu0 %v1998
    %2018 = vmatprep.subr.bf16.mxu0 0
    %2019 = vmatpush1.bf16.msra.mxu0 %v1997
    %2020 = vmatprep.subr.bf16.mxu0 0
    %2021 = vmatpush1.bf16.msra.mxu0 %v1996
    %2022 = vmatprep.subr.bf16.mxu0 0
    %2023 = vmatpush1.bf16.msra.mxu0 %v1995
    %2024 = vmatprep.subr.bf16.mxu0 0
    %2025 = vmatpush1.bf16.msra.mxu0 %v1994
    %2026 = vmatprep.subr.bf16.mxu0 0
    %2027 = vmatpush2.bf16.msra.mxu0 0
    %2028 = vmatprep.subr.bf16.mxu0 0
    %2029 = vmatpush2.bf16.msra.mxu0 0
    %2030 = vmatprep.subr.bf16.mxu0 0
    %2031 = vmatpush2.bf16.msra.mxu0 0
    %2032 = vmatprep.subr.bf16.mxu0 0
    %2033 = vmatpush2.bf16.msra.mxu0 0
    %2034 = vmatprep.subr.bf16.mxu0 0
    %2035 = vmatpush2.bf16.msra.mxu0 0
    %2036 = vmatprep.subr.bf16.mxu0 0
    %2037 = vmatpush2.bf16.msra.mxu0 0
    %2038 = vmatprep.subr.bf16.mxu0 0
    %2039 = vmatpush2.bf16.msra.mxu0 0
    %2040 = vmatprep.subr.bf16.mxu0 0
    %2041 = vmatpush2.bf16.msra.mxu0 0
    %2042 = vmatprep.mubr.bf16.mxu0 0
    %2043 = vmatmul.mubr.bf16.gmra.mxu0 %v1960
    %v2044 = vpop.f32.mrf.mxu0
    %v2045 = vadd.f32 0.0, %v2044
    %v2046 = vpop.f32.mrf.mxu0
    %v2047 = vpop.f32.mrf.mxu0
    %v2048 = vpop.f32.mrf.mxu0
    %2049 = vdwg.mxu0
    %v2050 = vadd.f32 %v1942, %v2045
    %v2051 = vpack.c.bf16 %v319, %v319
    %s2052 = scalar_lea.vmem %s4, 1024
    %v2053 = vld [vmem:[%s2052] sm:$0xf]
    %v2054 = vld [vmem:[%s2052 + $0x4] sm:$0xf]
    %v2055 = vld [vmem:[%s2052 + $0x8] sm:$0xf]
    %v2056 = vld [vmem:[%s2052 + $0xc] sm:$0xf]
    %v2057 = vld [vmem:[%s2052 + $0x10] sm:$0xf]
    %v2058 = vld [vmem:[%s2052 + $0x14] sm:$0xf]
    %v2059 = vld [vmem:[%s2052 + $0x18] sm:$0xf]
    %v2060 = vld [vmem:[%s2052 + $0x1c] sm:$0xf]
    %v2061 = vld [vmem:[%s2052 + $0x20] sm:$0xf]
    %v2062 = vld [vmem:[%s2052 + $0x24] sm:$0xf]
    %v2063 = vld [vmem:[%s2052 + $0x28] sm:$0xf]
    %v2064 = vld [vmem:[%s2052 + $0x2c] sm:$0xf]
    %v2065 = vld [vmem:[%s2052 + $0x30] sm:$0xf]
    %v2066 = vld [vmem:[%s2052 + $0x34] sm:$0xf]
    %v2067 = vld [vmem:[%s2052 + $0x38] sm:$0xf]
    %v2068 = vld [vmem:[%s2052 + $0x3c] sm:$0xf]
    %v2085 = vunpack.c.l.b16 %v2053
    %v2086 = vunpack.c.l.b16 %v2054
    %v2087 = vunpack.c.l.b16 %v2055
    %v2088 = vunpack.c.l.b16 %v2056
    %v2089 = vunpack.c.l.b16 %v2057
    %v2090 = vunpack.c.l.b16 %v2058
    %v2091 = vunpack.c.l.b16 %v2059
    %v2092 = vunpack.c.l.b16 %v2060
    %v2093 = vunpack.c.l.b16 %v2061
    %v2094 = vunpack.c.l.b16 %v2062
    %v2095 = vunpack.c.l.b16 %v2063
    %v2096 = vunpack.c.l.b16 %v2064
    %v2097 = vunpack.c.l.b16 %v2065
    %v2098 = vunpack.c.l.b16 %v2066
    %v2099 = vunpack.c.l.b16 %v2067
    %v2100 = vunpack.c.l.b16 %v2068
    %v2101 = vpack.c.b16 %v2086, %v2085
    %v2102 = vpack.c.b16 %v2088, %v2087
    %v2103 = vpack.c.b16 %v2090, %v2089
    %v2104 = vpack.c.b16 %v2092, %v2091
    %v2105 = vpack.c.b16 %v2094, %v2093
    %v2106 = vpack.c.b16 %v2096, %v2095
    %v2107 = vpack.c.b16 %v2098, %v2097
    %v2108 = vpack.c.b16 %v2100, %v2099
    %2117 = vmatprep.subr.bf16.mxu0 0
    %2118 = vmatpush1.bf16.msra.mxu0 %v2108
    %2119 = vmatprep.subr.bf16.mxu0 0
    %2120 = vmatpush1.bf16.msra.mxu0 %v2107
    %2121 = vmatprep.subr.bf16.mxu0 0
    %2122 = vmatpush1.bf16.msra.mxu0 %v2106
    %2123 = vmatprep.subr.bf16.mxu0 0
    %2124 = vmatpush1.bf16.msra.mxu0 %v2105
    %2125 = vmatprep.subr.bf16.mxu0 0
    %2126 = vmatpush1.bf16.msra.mxu0 %v2104
    %2127 = vmatprep.subr.bf16.mxu0 0
    %2128 = vmatpush1.bf16.msra.mxu0 %v2103
    %2129 = vmatprep.subr.bf16.mxu0 0
    %2130 = vmatpush1.bf16.msra.mxu0 %v2102
    %2131 = vmatprep.subr.bf16.mxu0 0
    %2132 = vmatpush1.bf16.msra.mxu0 %v2101
    %2133 = vmatprep.subr.bf16.mxu0 0
    %2134 = vmatpush2.bf16.msra.mxu0 0
    %2135 = vmatprep.subr.bf16.mxu0 0
    %2136 = vmatpush2.bf16.msra.mxu0 0
    %2137 = vmatprep.subr.bf16.mxu0 0
    %2138 = vmatpush2.bf16.msra.mxu0 0
    %2139 = vmatprep.subr.bf16.mxu0 0
    %2140 = vmatpush2.bf16.msra.mxu0 0
    %2141 = vmatprep.subr.bf16.mxu0 0
    %2142 = vmatpush2.bf16.msra.mxu0 0
    %2143 = vmatprep.subr.bf16.mxu0 0
    %2144 = vmatpush2.bf16.msra.mxu0 0
    %2145 = vmatprep.subr.bf16.mxu0 0
    %2146 = vmatpush2.bf16.msra.mxu0 0
    %2147 = vmatprep.subr.bf16.mxu0 0
    %2148 = vmatpush2.bf16.msra.mxu0 0
    %2149 = vmatprep.mubr.bf16.mxu0 0
    %2150 = vmatmul.mubr.bf16.gmra.mxu0 %v2051
    %v2151 = vpop.f32.mrf.mxu0
    %v2152 = vadd.f32 0.0, %v2151
    %v2153 = vpop.f32.mrf.mxu0
    %v2154 = vpop.f32.mrf.mxu0
    %v2155 = vpop.f32.mrf.mxu0
    %2156 = vdwg.mxu0
    %v2157 = vadd.f32 %v2050, %v2152
    %s2158 = scalar_lea.vmem %s4, 1088
    %v2159 = vld [vmem:[%s2158] sm:$0xf]
    %v2160 = vld [vmem:[%s2158 + $0x4] sm:$0xf]
    %v2161 = vld [vmem:[%s2158 + $0x8] sm:$0xf]
    %v2162 = vld [vmem:[%s2158 + $0xc] sm:$0xf]
    %v2163 = vld [vmem:[%s2158 + $0x10] sm:$0xf]
    %v2164 = vld [vmem:[%s2158 + $0x14] sm:$0xf]
    %v2165 = vld [vmem:[%s2158 + $0x18] sm:$0xf]
    %v2166 = vld [vmem:[%s2158 + $0x1c] sm:$0xf]
    %v2167 = vld [vmem:[%s2158 + $0x20] sm:$0xf]
    %v2168 = vld [vmem:[%s2158 + $0x24] sm:$0xf]
    %v2169 = vld [vmem:[%s2158 + $0x28] sm:$0xf]
    %v2170 = vld [vmem:[%s2158 + $0x2c] sm:$0xf]
    %v2171 = vld [vmem:[%s2158 + $0x30] sm:$0xf]
    %v2172 = vld [vmem:[%s2158 + $0x34] sm:$0xf]
    %v2173 = vld [vmem:[%s2158 + $0x38] sm:$0xf]
    %v2174 = vld [vmem:[%s2158 + $0x3c] sm:$0xf]
    %v2176 = vrot.slane %v2051, 1
    %v2194 = vunpack.c.l.b16 %v2159
    %v2195 = vunpack.c.l.b16 %v2160
    %v2196 = vunpack.c.l.b16 %v2161
    %v2197 = vunpack.c.l.b16 %v2162
    %v2198 = vunpack.c.l.b16 %v2163
    %v2199 = vunpack.c.l.b16 %v2164
    %v2200 = vunpack.c.l.b16 %v2165
    %v2201 = vunpack.c.l.b16 %v2166
    %v2202 = vunpack.c.l.b16 %v2167
    %v2203 = vunpack.c.l.b16 %v2168
    %v2204 = vunpack.c.l.b16 %v2169
    %v2205 = vunpack.c.l.b16 %v2170
    %v2206 = vunpack.c.l.b16 %v2171
    %v2207 = vunpack.c.l.b16 %v2172
    %v2208 = vunpack.c.l.b16 %v2173
    %v2209 = vunpack.c.l.b16 %v2174
    %v2210 = vpack.c.b16 %v2195, %v2194
    %v2211 = vpack.c.b16 %v2197, %v2196
    %v2212 = vpack.c.b16 %v2199, %v2198
    %v2213 = vpack.c.b16 %v2201, %v2200
    %v2214 = vpack.c.b16 %v2203, %v2202
    %v2215 = vpack.c.b16 %v2205, %v2204
    %v2216 = vpack.c.b16 %v2207, %v2206
    %v2217 = vpack.c.b16 %v2209, %v2208
    %2226 = vmatprep.subr.bf16.mxu0 0
    %2227 = vmatpush1.bf16.msra.mxu0 %v2217
    %2228 = vmatprep.subr.bf16.mxu0 0
    %2229 = vmatpush1.bf16.msra.mxu0 %v2216
    %2230 = vmatprep.subr.bf16.mxu0 0
    %2231 = vmatpush1.bf16.msra.mxu0 %v2215
    %2232 = vmatprep.subr.bf16.mxu0 0
    %2233 = vmatpush1.bf16.msra.mxu0 %v2214
    %2234 = vmatprep.subr.bf16.mxu0 0
    %2235 = vmatpush1.bf16.msra.mxu0 %v2213
    %2236 = vmatprep.subr.bf16.mxu0 0
    %2237 = vmatpush1.bf16.msra.mxu0 %v2212
    %2238 = vmatprep.subr.bf16.mxu0 0
    %2239 = vmatpush1.bf16.msra.mxu0 %v2211
    %2240 = vmatprep.subr.bf16.mxu0 0
    %2241 = vmatpush1.bf16.msra.mxu0 %v2210
    %2242 = vmatprep.subr.bf16.mxu0 0
    %2243 = vmatpush2.bf16.msra.mxu0 0
    %2244 = vmatprep.subr.bf16.mxu0 0
    %2245 = vmatpush2.bf16.msra.mxu0 0
    %2246 = vmatprep.subr.bf16.mxu0 0
    %2247 = vmatpush2.bf16.msra.mxu0 0
    %2248 = vmatprep.subr.bf16.mxu0 0
    %2249 = vmatpush2.bf16.msra.mxu0 0
    %2250 = vmatprep.subr.bf16.mxu0 0
    %2251 = vmatpush2.bf16.msra.mxu0 0
    %2252 = vmatprep.subr.bf16.mxu0 0
    %2253 = vmatpush2.bf16.msra.mxu0 0
    %2254 = vmatprep.subr.bf16.mxu0 0
    %2255 = vmatpush2.bf16.msra.mxu0 0
    %2256 = vmatprep.subr.bf16.mxu0 0
    %2257 = vmatpush2.bf16.msra.mxu0 0
    %2258 = vmatprep.mubr.bf16.mxu0 0
    %2259 = vmatmul.mubr.bf16.gmra.mxu0 %v2176
    %v2260 = vpop.f32.mrf.mxu0
    %v2261 = vadd.f32 0.0, %v2260
    %v2262 = vpop.f32.mrf.mxu0
    %v2263 = vpop.f32.mrf.mxu0
    %v2264 = vpop.f32.mrf.mxu0
    %2265 = vdwg.mxu0
    %v2266 = vadd.f32 %v2157, %v2261
    %s2267 = scalar_lea.vmem %s4, 1152
    %v2268 = vld [vmem:[%s2267] sm:$0xf]
    %v2269 = vld [vmem:[%s2267 + $0x4] sm:$0xf]
    %v2270 = vld [vmem:[%s2267 + $0x8] sm:$0xf]
    %v2271 = vld [vmem:[%s2267 + $0xc] sm:$0xf]
    %v2272 = vld [vmem:[%s2267 + $0x10] sm:$0xf]
    %v2273 = vld [vmem:[%s2267 + $0x14] sm:$0xf]
    %v2274 = vld [vmem:[%s2267 + $0x18] sm:$0xf]
    %v2275 = vld [vmem:[%s2267 + $0x1c] sm:$0xf]
    %v2276 = vld [vmem:[%s2267 + $0x20] sm:$0xf]
    %v2277 = vld [vmem:[%s2267 + $0x24] sm:$0xf]
    %v2278 = vld [vmem:[%s2267 + $0x28] sm:$0xf]
    %v2279 = vld [vmem:[%s2267 + $0x2c] sm:$0xf]
    %v2280 = vld [vmem:[%s2267 + $0x30] sm:$0xf]
    %v2281 = vld [vmem:[%s2267 + $0x34] sm:$0xf]
    %v2282 = vld [vmem:[%s2267 + $0x38] sm:$0xf]
    %v2283 = vld [vmem:[%s2267 + $0x3c] sm:$0xf]
    %v2284 = vrot.slane %v2051, 2
    %v2302 = vunpack.c.l.b16 %v2268
    %v2303 = vunpack.c.l.b16 %v2269
    %v2304 = vunpack.c.l.b16 %v2270
    %v2305 = vunpack.c.l.b16 %v2271
    %v2306 = vunpack.c.l.b16 %v2272
    %v2307 = vunpack.c.l.b16 %v2273
    %v2308 = vunpack.c.l.b16 %v2274
    %v2309 = vunpack.c.l.b16 %v2275
    %v2310 = vunpack.c.l.b16 %v2276
    %v2311 = vunpack.c.l.b16 %v2277
    %v2312 = vunpack.c.l.b16 %v2278
    %v2313 = vunpack.c.l.b16 %v2279
    %v2314 = vunpack.c.l.b16 %v2280
    %v2315 = vunpack.c.l.b16 %v2281
    %v2316 = vunpack.c.l.b16 %v2282
    %v2317 = vunpack.c.l.b16 %v2283
    %v2318 = vpack.c.b16 %v2303, %v2302
    %v2319 = vpack.c.b16 %v2305, %v2304
    %v2320 = vpack.c.b16 %v2307, %v2306
    %v2321 = vpack.c.b16 %v2309, %v2308
    %v2322 = vpack.c.b16 %v2311, %v2310
    %v2323 = vpack.c.b16 %v2313, %v2312
    %v2324 = vpack.c.b16 %v2315, %v2314
    %v2325 = vpack.c.b16 %v2317, %v2316
    %2334 = vmatprep.subr.bf16.mxu0 0
    %2335 = vmatpush1.bf16.msra.mxu0 %v2325
    %2336 = vmatprep.subr.bf16.mxu0 0
    %2337 = vmatpush1.bf16.msra.mxu0 %v2324
    %2338 = vmatprep.subr.bf16.mxu0 0
    %2339 = vmatpush1.bf16.msra.mxu0 %v2323
    %2340 = vmatprep.subr.bf16.mxu0 0
    %2341 = vmatpush1.bf16.msra.mxu0 %v2322
    %2342 = vmatprep.subr.bf16.mxu0 0
    %2343 = vmatpush1.bf16.msra.mxu0 %v2321
    %2344 = vmatprep.subr.bf16.mxu0 0
    %2345 = vmatpush1.bf16.msra.mxu0 %v2320
    %2346 = vmatprep.subr.bf16.mxu0 0
    %2347 = vmatpush1.bf16.msra.mxu0 %v2319
    %2348 = vmatprep.subr.bf16.mxu0 0
    %2349 = vmatpush1.bf16.msra.mxu0 %v2318
    %2350 = vmatprep.subr.bf16.mxu0 0
    %2351 = vmatpush2.bf16.msra.mxu0 0
    %2352 = vmatprep.subr.bf16.mxu0 0
    %2353 = vmatpush2.bf16.msra.mxu0 0
    %2354 = vmatprep.subr.bf16.mxu0 0
    %2355 = vmatpush2.bf16.msra.mxu0 0
    %2356 = vmatprep.subr.bf16.mxu0 0
    %2357 = vmatpush2.bf16.msra.mxu0 0
    %2358 = vmatprep.subr.bf16.mxu0 0
    %2359 = vmatpush2.bf16.msra.mxu0 0
    %2360 = vmatprep.subr.bf16.mxu0 0
    %2361 = vmatpush2.bf16.msra.mxu0 0
    %2362 = vmatprep.subr.bf16.mxu0 0
    %2363 = vmatpush2.bf16.msra.mxu0 0
    %2364 = vmatprep.subr.bf16.mxu0 0
    %2365 = vmatpush2.bf16.msra.mxu0 0
    %2366 = vmatprep.mubr.bf16.mxu0 0
    %2367 = vmatmul.mubr.bf16.gmra.mxu0 %v2284
    %v2368 = vpop.f32.mrf.mxu0
    %v2369 = vadd.f32 0.0, %v2368
    %v2370 = vpop.f32.mrf.mxu0
    %v2371 = vpop.f32.mrf.mxu0
    %v2372 = vpop.f32.mrf.mxu0
    %2373 = vdwg.mxu0
    %v2374 = vadd.f32 %v2266, %v2369
    %s2375 = scalar_lea.vmem %s4, 1216
    %v2376 = vld [vmem:[%s2375] sm:$0xf]
    %v2377 = vld [vmem:[%s2375 + $0x4] sm:$0xf]
    %v2378 = vld [vmem:[%s2375 + $0x8] sm:$0xf]
    %v2379 = vld [vmem:[%s2375 + $0xc] sm:$0xf]
    %v2380 = vld [vmem:[%s2375 + $0x10] sm:$0xf]
    %v2381 = vld [vmem:[%s2375 + $0x14] sm:$0xf]
    %v2382 = vld [vmem:[%s2375 + $0x18] sm:$0xf]
    %v2383 = vld [vmem:[%s2375 + $0x1c] sm:$0xf]
    %v2384 = vld [vmem:[%s2375 + $0x20] sm:$0xf]
    %v2385 = vld [vmem:[%s2375 + $0x24] sm:$0xf]
    %v2386 = vld [vmem:[%s2375 + $0x28] sm:$0xf]
    %v2387 = vld [vmem:[%s2375 + $0x2c] sm:$0xf]
    %v2388 = vld [vmem:[%s2375 + $0x30] sm:$0xf]
    %v2389 = vld [vmem:[%s2375 + $0x34] sm:$0xf]
    %v2390 = vld [vmem:[%s2375 + $0x38] sm:$0xf]
    %v2391 = vld [vmem:[%s2375 + $0x3c] sm:$0xf]
    %v2392 = vrot.slane %v2051, 3
    %v2410 = vunpack.c.l.b16 %v2376
    %v2411 = vunpack.c.l.b16 %v2377
    %v2412 = vunpack.c.l.b16 %v2378
    %v2413 = vunpack.c.l.b16 %v2379
    %v2414 = vunpack.c.l.b16 %v2380
    %v2415 = vunpack.c.l.b16 %v2381
    %v2416 = vunpack.c.l.b16 %v2382
    %v2417 = vunpack.c.l.b16 %v2383
    %v2418 = vunpack.c.l.b16 %v2384
    %v2419 = vunpack.c.l.b16 %v2385
    %v2420 = vunpack.c.l.b16 %v2386
    %v2421 = vunpack.c.l.b16 %v2387
    %v2422 = vunpack.c.l.b16 %v2388
    %v2423 = vunpack.c.l.b16 %v2389
    %v2424 = vunpack.c.l.b16 %v2390
    %v2425 = vunpack.c.l.b16 %v2391
    %v2426 = vpack.c.b16 %v2411, %v2410
    %v2427 = vpack.c.b16 %v2413, %v2412
    %v2428 = vpack.c.b16 %v2415, %v2414
    %v2429 = vpack.c.b16 %v2417, %v2416
    %v2430 = vpack.c.b16 %v2419, %v2418
    %v2431 = vpack.c.b16 %v2421, %v2420
    %v2432 = vpack.c.b16 %v2423, %v2422
    %v2433 = vpack.c.b16 %v2425, %v2424
    %2442 = vmatprep.subr.bf16.mxu0 0
    %2443 = vmatpush1.bf16.msra.mxu0 %v2433
    %2444 = vmatprep.subr.bf16.mxu0 0
    %2445 = vmatpush1.bf16.msra.mxu0 %v2432
    %2446 = vmatprep.subr.bf16.mxu0 0
    %2447 = vmatpush1.bf16.msra.mxu0 %v2431
    %2448 = vmatprep.subr.bf16.mxu0 0
    %2449 = vmatpush1.bf16.msra.mxu0 %v2430
    %2450 = vmatprep.subr.bf16.mxu0 0
    %2451 = vmatpush1.bf16.msra.mxu0 %v2429
    %2452 = vmatprep.subr.bf16.mxu0 0
    %2453 = vmatpush1.bf16.msra.mxu0 %v2428
    %2454 = vmatprep.subr.bf16.mxu0 0
    %2455 = vmatpush1.bf16.msra.mxu0 %v2427
    %2456 = vmatprep.subr.bf16.mxu0 0
    %2457 = vmatpush1.bf16.msra.mxu0 %v2426
    %2458 = vmatprep.subr.bf16.mxu0 0
    %2459 = vmatpush2.bf16.msra.mxu0 0
    %2460 = vmatprep.subr.bf16.mxu0 0
    %2461 = vmatpush2.bf16.msra.mxu0 0
    %2462 = vmatprep.subr.bf16.mxu0 0
    %2463 = vmatpush2.bf16.msra.mxu0 0
    %2464 = vmatprep.subr.bf16.mxu0 0
    %2465 = vmatpush2.bf16.msra.mxu0 0
    %2466 = vmatprep.subr.bf16.mxu0 0
    %2467 = vmatpush2.bf16.msra.mxu0 0
    %2468 = vmatprep.subr.bf16.mxu0 0
    %2469 = vmatpush2.bf16.msra.mxu0 0
    %2470 = vmatprep.subr.bf16.mxu0 0
    %2471 = vmatpush2.bf16.msra.mxu0 0
    %2472 = vmatprep.subr.bf16.mxu0 0
    %2473 = vmatpush2.bf16.msra.mxu0 0
    %2474 = vmatprep.mubr.bf16.mxu0 0
    %2475 = vmatmul.mubr.bf16.gmra.mxu0 %v2392
    %v2476 = vpop.f32.mrf.mxu0
    %v2477 = vadd.f32 0.0, %v2476
    %v2478 = vpop.f32.mrf.mxu0
    %v2479 = vpop.f32.mrf.mxu0
    %v2480 = vpop.f32.mrf.mxu0
    %2481 = vdwg.mxu0
    %v2482 = vadd.f32 %v2374, %v2477
    %v2483 = vpack.c.bf16 %v320, %v320
    %s2484 = scalar_lea.vmem %s4, 1280
    %v2485 = vld [vmem:[%s2484] sm:$0xf]
    %v2486 = vld [vmem:[%s2484 + $0x4] sm:$0xf]
    %v2487 = vld [vmem:[%s2484 + $0x8] sm:$0xf]
    %v2488 = vld [vmem:[%s2484 + $0xc] sm:$0xf]
    %v2489 = vld [vmem:[%s2484 + $0x10] sm:$0xf]
    %v2490 = vld [vmem:[%s2484 + $0x14] sm:$0xf]
    %v2491 = vld [vmem:[%s2484 + $0x18] sm:$0xf]
    %v2492 = vld [vmem:[%s2484 + $0x1c] sm:$0xf]
    %v2493 = vld [vmem:[%s2484 + $0x20] sm:$0xf]
    %v2494 = vld [vmem:[%s2484 + $0x24] sm:$0xf]
    %v2495 = vld [vmem:[%s2484 + $0x28] sm:$0xf]
    %v2496 = vld [vmem:[%s2484 + $0x2c] sm:$0xf]
    %v2497 = vld [vmem:[%s2484 + $0x30] sm:$0xf]
    %v2498 = vld [vmem:[%s2484 + $0x34] sm:$0xf]
    %v2499 = vld [vmem:[%s2484 + $0x38] sm:$0xf]
    %v2500 = vld [vmem:[%s2484 + $0x3c] sm:$0xf]
    %v2517 = vunpack.c.l.b16 %v2485
    %v2518 = vunpack.c.l.b16 %v2486
    %v2519 = vunpack.c.l.b16 %v2487
    %v2520 = vunpack.c.l.b16 %v2488
    %v2521 = vunpack.c.l.b16 %v2489
    %v2522 = vunpack.c.l.b16 %v2490
    %v2523 = vunpack.c.l.b16 %v2491
    %v2524 = vunpack.c.l.b16 %v2492
    %v2525 = vunpack.c.l.b16 %v2493
    %v2526 = vunpack.c.l.b16 %v2494
    %v2527 = vunpack.c.l.b16 %v2495
    %v2528 = vunpack.c.l.b16 %v2496
    %v2529 = vunpack.c.l.b16 %v2497
    %v2530 = vunpack.c.l.b16 %v2498
    %v2531 = vunpack.c.l.b16 %v2499
    %v2532 = vunpack.c.l.b16 %v2500
    %v2533 = vpack.c.b16 %v2518, %v2517
    %v2534 = vpack.c.b16 %v2520, %v2519
    %v2535 = vpack.c.b16 %v2522, %v2521
    %v2536 = vpack.c.b16 %v2524, %v2523
    %v2537 = vpack.c.b16 %v2526, %v2525
    %v2538 = vpack.c.b16 %v2528, %v2527
    %v2539 = vpack.c.b16 %v2530, %v2529
    %v2540 = vpack.c.b16 %v2532, %v2531
    %2549 = vmatprep.subr.bf16.mxu0 0
    %2550 = vmatpush1.bf16.msra.mxu0 %v2540
    %2551 = vmatprep.subr.bf16.mxu0 0
    %2552 = vmatpush1.bf16.msra.mxu0 %v2539
    %2553 = vmatprep.subr.bf16.mxu0 0
    %2554 = vmatpush1.bf16.msra.mxu0 %v2538
    %2555 = vmatprep.subr.bf16.mxu0 0
    %2556 = vmatpush1.bf16.msra.mxu0 %v2537
    %2557 = vmatprep.subr.bf16.mxu0 0
    %2558 = vmatpush1.bf16.msra.mxu0 %v2536
    %2559 = vmatprep.subr.bf16.mxu0 0
    %2560 = vmatpush1.bf16.msra.mxu0 %v2535
    %2561 = vmatprep.subr.bf16.mxu0 0
    %2562 = vmatpush1.bf16.msra.mxu0 %v2534
    %2563 = vmatprep.subr.bf16.mxu0 0
    %2564 = vmatpush1.bf16.msra.mxu0 %v2533
    %2565 = vmatprep.subr.bf16.mxu0 0
    %2566 = vmatpush2.bf16.msra.mxu0 0
    %2567 = vmatprep.subr.bf16.mxu0 0
    %2568 = vmatpush2.bf16.msra.mxu0 0
    %2569 = vmatprep.subr.bf16.mxu0 0
    %2570 = vmatpush2.bf16.msra.mxu0 0
    %2571 = vmatprep.subr.bf16.mxu0 0
    %2572 = vmatpush2.bf16.msra.mxu0 0
    %2573 = vmatprep.subr.bf16.mxu0 0
    %2574 = vmatpush2.bf16.msra.mxu0 0
    %2575 = vmatprep.subr.bf16.mxu0 0
    %2576 = vmatpush2.bf16.msra.mxu0 0
    %2577 = vmatprep.subr.bf16.mxu0 0
    %2578 = vmatpush2.bf16.msra.mxu0 0
    %2579 = vmatprep.subr.bf16.mxu0 0
    %2580 = vmatpush2.bf16.msra.mxu0 0
    %2581 = vmatprep.mubr.bf16.mxu0 0
    %2582 = vmatmul.mubr.bf16.gmra.mxu0 %v2483
    %v2583 = vpop.f32.mrf.mxu0
    %v2584 = vadd.f32 0.0, %v2583
    %v2585 = vpop.f32.mrf.mxu0
    %v2586 = vpop.f32.mrf.mxu0
    %v2587 = vpop.f32.mrf.mxu0
    %2588 = vdwg.mxu0
    %v2589 = vadd.f32 %v2482, %v2584
    %s2590 = scalar_lea.vmem %s4, 1344
    %v2591 = vld [vmem:[%s2590] sm:$0xf]
    %v2592 = vld [vmem:[%s2590 + $0x4] sm:$0xf]
    %v2593 = vld [vmem:[%s2590 + $0x8] sm:$0xf]
    %v2594 = vld [vmem:[%s2590 + $0xc] sm:$0xf]
    %v2595 = vld [vmem:[%s2590 + $0x10] sm:$0xf]
    %v2596 = vld [vmem:[%s2590 + $0x14] sm:$0xf]
    %v2597 = vld [vmem:[%s2590 + $0x18] sm:$0xf]
    %v2598 = vld [vmem:[%s2590 + $0x1c] sm:$0xf]
    %v2599 = vld [vmem:[%s2590 + $0x20] sm:$0xf]
    %v2600 = vld [vmem:[%s2590 + $0x24] sm:$0xf]
    %v2601 = vld [vmem:[%s2590 + $0x28] sm:$0xf]
    %v2602 = vld [vmem:[%s2590 + $0x2c] sm:$0xf]
    %v2603 = vld [vmem:[%s2590 + $0x30] sm:$0xf]
    %v2604 = vld [vmem:[%s2590 + $0x34] sm:$0xf]
    %v2605 = vld [vmem:[%s2590 + $0x38] sm:$0xf]
    %v2606 = vld [vmem:[%s2590 + $0x3c] sm:$0xf]
    %v2608 = vrot.slane %v2483, 1
    %v2626 = vunpack.c.l.b16 %v2591
    %v2627 = vunpack.c.l.b16 %v2592
    %v2628 = vunpack.c.l.b16 %v2593
    %v2629 = vunpack.c.l.b16 %v2594
    %v2630 = vunpack.c.l.b16 %v2595
    %v2631 = vunpack.c.l.b16 %v2596
    %v2632 = vunpack.c.l.b16 %v2597
    %v2633 = vunpack.c.l.b16 %v2598
    %v2634 = vunpack.c.l.b16 %v2599
    %v2635 = vunpack.c.l.b16 %v2600
    %v2636 = vunpack.c.l.b16 %v2601
    %v2637 = vunpack.c.l.b16 %v2602
    %v2638 = vunpack.c.l.b16 %v2603
    %v2639 = vunpack.c.l.b16 %v2604
    %v2640 = vunpack.c.l.b16 %v2605
    %v2641 = vunpack.c.l.b16 %v2606
    %v2642 = vpack.c.b16 %v2627, %v2626
    %v2643 = vpack.c.b16 %v2629, %v2628
    %v2644 = vpack.c.b16 %v2631, %v2630
    %v2645 = vpack.c.b16 %v2633, %v2632
    %v2646 = vpack.c.b16 %v2635, %v2634
    %v2647 = vpack.c.b16 %v2637, %v2636
    %v2648 = vpack.c.b16 %v2639, %v2638
    %v2649 = vpack.c.b16 %v2641, %v2640
    %2658 = vmatprep.subr.bf16.mxu0 0
    %2659 = vmatpush1.bf16.msra.mxu0 %v2649
    %2660 = vmatprep.subr.bf16.mxu0 0
    %2661 = vmatpush1.bf16.msra.mxu0 %v2648
    %2662 = vmatprep.subr.bf16.mxu0 0
    %2663 = vmatpush1.bf16.msra.mxu0 %v2647
    %2664 = vmatprep.subr.bf16.mxu0 0
    %2665 = vmatpush1.bf16.msra.mxu0 %v2646
    %2666 = vmatprep.subr.bf16.mxu0 0
    %2667 = vmatpush1.bf16.msra.mxu0 %v2645
    %2668 = vmatprep.subr.bf16.mxu0 0
    %2669 = vmatpush1.bf16.msra.mxu0 %v2644
    %2670 = vmatprep.subr.bf16.mxu0 0
    %2671 = vmatpush1.bf16.msra.mxu0 %v2643
    %2672 = vmatprep.subr.bf16.mxu0 0
    %2673 = vmatpush1.bf16.msra.mxu0 %v2642
    %2674 = vmatprep.subr.bf16.mxu0 0
    %2675 = vmatpush2.bf16.msra.mxu0 0
    %2676 = vmatprep.subr.bf16.mxu0 0
    %2677 = vmatpush2.bf16.msra.mxu0 0
    %2678 = vmatprep.subr.bf16.mxu0 0
    %2679 = vmatpush2.bf16.msra.mxu0 0
    %2680 = vmatprep.subr.bf16.mxu0 0
    %2681 = vmatpush2.bf16.msra.mxu0 0
    %2682 = vmatprep.subr.bf16.mxu0 0
    %2683 = vmatpush2.bf16.msra.mxu0 0
    %2684 = vmatprep.subr.bf16.mxu0 0
    %2685 = vmatpush2.bf16.msra.mxu0 0
    %2686 = vmatprep.subr.bf16.mxu0 0
    %2687 = vmatpush2.bf16.msra.mxu0 0
    %2688 = vmatprep.subr.bf16.mxu0 0
    %2689 = vmatpush2.bf16.msra.mxu0 0
    %2690 = vmatprep.mubr.bf16.mxu0 0
    %2691 = vmatmul.mubr.bf16.gmra.mxu0 %v2608
    %v2692 = vpop.f32.mrf.mxu0
    %v2693 = vadd.f32 0.0, %v2692
    %v2694 = vpop.f32.mrf.mxu0
    %v2695 = vpop.f32.mrf.mxu0
    %v2696 = vpop.f32.mrf.mxu0
    %2697 = vdwg.mxu0
    %v2698 = vadd.f32 %v2589, %v2693
    %s2699 = scalar_lea.vmem %s4, 1408
    %v2700 = vld [vmem:[%s2699] sm:$0xf]
    %v2701 = vld [vmem:[%s2699 + $0x4] sm:$0xf]
    %v2702 = vld [vmem:[%s2699 + $0x8] sm:$0xf]
    %v2703 = vld [vmem:[%s2699 + $0xc] sm:$0xf]
    %v2704 = vld [vmem:[%s2699 + $0x10] sm:$0xf]
    %v2705 = vld [vmem:[%s2699 + $0x14] sm:$0xf]
    %v2706 = vld [vmem:[%s2699 + $0x18] sm:$0xf]
    %v2707 = vld [vmem:[%s2699 + $0x1c] sm:$0xf]
    %v2708 = vld [vmem:[%s2699 + $0x20] sm:$0xf]
    %v2709 = vld [vmem:[%s2699 + $0x24] sm:$0xf]
    %v2710 = vld [vmem:[%s2699 + $0x28] sm:$0xf]
    %v2711 = vld [vmem:[%s2699 + $0x2c] sm:$0xf]
    %v2712 = vld [vmem:[%s2699 + $0x30] sm:$0xf]
    %v2713 = vld [vmem:[%s2699 + $0x34] sm:$0xf]
    %v2714 = vld [vmem:[%s2699 + $0x38] sm:$0xf]
    %v2715 = vld [vmem:[%s2699 + $0x3c] sm:$0xf]
    %v2716 = vrot.slane %v2483, 2
    %v2734 = vunpack.c.l.b16 %v2700
    %v2735 = vunpack.c.l.b16 %v2701
    %v2736 = vunpack.c.l.b16 %v2702
    %v2737 = vunpack.c.l.b16 %v2703
    %v2738 = vunpack.c.l.b16 %v2704
    %v2739 = vunpack.c.l.b16 %v2705
    %v2740 = vunpack.c.l.b16 %v2706
    %v2741 = vunpack.c.l.b16 %v2707
    %v2742 = vunpack.c.l.b16 %v2708
    %v2743 = vunpack.c.l.b16 %v2709
    %v2744 = vunpack.c.l.b16 %v2710
    %v2745 = vunpack.c.l.b16 %v2711
    %v2746 = vunpack.c.l.b16 %v2712
    %v2747 = vunpack.c.l.b16 %v2713
    %v2748 = vunpack.c.l.b16 %v2714
    %v2749 = vunpack.c.l.b16 %v2715
    %v2750 = vpack.c.b16 %v2735, %v2734
    %v2751 = vpack.c.b16 %v2737, %v2736
    %v2752 = vpack.c.b16 %v2739, %v2738
    %v2753 = vpack.c.b16 %v2741, %v2740
    %v2754 = vpack.c.b16 %v2743, %v2742
    %v2755 = vpack.c.b16 %v2745, %v2744
    %v2756 = vpack.c.b16 %v2747, %v2746
    %v2757 = vpack.c.b16 %v2749, %v2748
    %2766 = vmatprep.subr.bf16.mxu0 0
    %2767 = vmatpush1.bf16.msra.mxu0 %v2757
    %2768 = vmatprep.subr.bf16.mxu0 0
    %2769 = vmatpush1.bf16.msra.mxu0 %v2756
    %2770 = vmatprep.subr.bf16.mxu0 0
    %2771 = vmatpush1.bf16.msra.mxu0 %v2755
    %2772 = vmatprep.subr.bf16.mxu0 0
    %2773 = vmatpush1.bf16.msra.mxu0 %v2754
    %2774 = vmatprep.subr.bf16.mxu0 0
    %2775 = vmatpush1.bf16.msra.mxu0 %v2753
    %2776 = vmatprep.subr.bf16.mxu0 0
    %2777 = vmatpush1.bf16.msra.mxu0 %v2752
    %2778 = vmatprep.subr.bf16.mxu0 0
    %2779 = vmatpush1.bf16.msra.mxu0 %v2751
    %2780 = vmatprep.subr.bf16.mxu0 0
    %2781 = vmatpush1.bf16.msra.mxu0 %v2750
    %2782 = vmatprep.subr.bf16.mxu0 0
    %2783 = vmatpush2.bf16.msra.mxu0 0
    %2784 = vmatprep.subr.bf16.mxu0 0
    %2785 = vmatpush2.bf16.msra.mxu0 0
    %2786 = vmatprep.subr.bf16.mxu0 0
    %2787 = vmatpush2.bf16.msra.mxu0 0
    %2788 = vmatprep.subr.bf16.mxu0 0
    %2789 = vmatpush2.bf16.msra.mxu0 0
    %2790 = vmatprep.subr.bf16.mxu0 0
    %2791 = vmatpush2.bf16.msra.mxu0 0
    %2792 = vmatprep.subr.bf16.mxu0 0
    %2793 = vmatpush2.bf16.msra.mxu0 0
    %2794 = vmatprep.subr.bf16.mxu0 0
    %2795 = vmatpush2.bf16.msra.mxu0 0
    %2796 = vmatprep.subr.bf16.mxu0 0
    %2797 = vmatpush2.bf16.msra.mxu0 0
    %2798 = vmatprep.mubr.bf16.mxu0 0
    %2799 = vmatmul.mubr.bf16.gmra.mxu0 %v2716
    %v2800 = vpop.f32.mrf.mxu0
    %v2801 = vadd.f32 0.0, %v2800
    %v2802 = vpop.f32.mrf.mxu0
    %v2803 = vpop.f32.mrf.mxu0
    %v2804 = vpop.f32.mrf.mxu0
    %2805 = vdwg.mxu0
    %v2806 = vadd.f32 %v2698, %v2801
    %s2807 = scalar_lea.vmem %s4, 1472
    %v2808 = vld [vmem:[%s2807] sm:$0xf]
    %v2809 = vld [vmem:[%s2807 + $0x4] sm:$0xf]
    %v2810 = vld [vmem:[%s2807 + $0x8] sm:$0xf]
    %v2811 = vld [vmem:[%s2807 + $0xc] sm:$0xf]
    %v2812 = vld [vmem:[%s2807 + $0x10] sm:$0xf]
    %v2813 = vld [vmem:[%s2807 + $0x14] sm:$0xf]
    %v2814 = vld [vmem:[%s2807 + $0x18] sm:$0xf]
    %v2815 = vld [vmem:[%s2807 + $0x1c] sm:$0xf]
    %v2816 = vld [vmem:[%s2807 + $0x20] sm:$0xf]
    %v2817 = vld [vmem:[%s2807 + $0x24] sm:$0xf]
    %v2818 = vld [vmem:[%s2807 + $0x28] sm:$0xf]
    %v2819 = vld [vmem:[%s2807 + $0x2c] sm:$0xf]
    %v2820 = vld [vmem:[%s2807 + $0x30] sm:$0xf]
    %v2821 = vld [vmem:[%s2807 + $0x34] sm:$0xf]
    %v2822 = vld [vmem:[%s2807 + $0x38] sm:$0xf]
    %v2823 = vld [vmem:[%s2807 + $0x3c] sm:$0xf]
    %v2824 = vrot.slane %v2483, 3
    %v2842 = vunpack.c.l.b16 %v2808
    %v2843 = vunpack.c.l.b16 %v2809
    %v2844 = vunpack.c.l.b16 %v2810
    %v2845 = vunpack.c.l.b16 %v2811
    %v2846 = vunpack.c.l.b16 %v2812
    %v2847 = vunpack.c.l.b16 %v2813
    %v2848 = vunpack.c.l.b16 %v2814
    %v2849 = vunpack.c.l.b16 %v2815
    %v2850 = vunpack.c.l.b16 %v2816
    %v2851 = vunpack.c.l.b16 %v2817
    %v2852 = vunpack.c.l.b16 %v2818
    %v2853 = vunpack.c.l.b16 %v2819
    %v2854 = vunpack.c.l.b16 %v2820
    %v2855 = vunpack.c.l.b16 %v2821
    %v2856 = vunpack.c.l.b16 %v2822
    %v2857 = vunpack.c.l.b16 %v2823
    %v2858 = vpack.c.b16 %v2843, %v2842
    %v2859 = vpack.c.b16 %v2845, %v2844
    %v2860 = vpack.c.b16 %v2847, %v2846
    %v2861 = vpack.c.b16 %v2849, %v2848
    %v2862 = vpack.c.b16 %v2851, %v2850
    %v2863 = vpack.c.b16 %v2853, %v2852
    %v2864 = vpack.c.b16 %v2855, %v2854
    %v2865 = vpack.c.b16 %v2857, %v2856
    %2874 = vmatprep.subr.bf16.mxu0 0
    %2875 = vmatpush1.bf16.msra.mxu0 %v2865
    %2876 = vmatprep.subr.bf16.mxu0 0
    %2877 = vmatpush1.bf16.msra.mxu0 %v2864
    %2878 = vmatprep.subr.bf16.mxu0 0
    %2879 = vmatpush1.bf16.msra.mxu0 %v2863
    %2880 = vmatprep.subr.bf16.mxu0 0
    %2881 = vmatpush1.bf16.msra.mxu0 %v2862
    %2882 = vmatprep.subr.bf16.mxu0 0
    %2883 = vmatpush1.bf16.msra.mxu0 %v2861
    %2884 = vmatprep.subr.bf16.mxu0 0
    %2885 = vmatpush1.bf16.msra.mxu0 %v2860
    %2886 = vmatprep.subr.bf16.mxu0 0
    %2887 = vmatpush1.bf16.msra.mxu0 %v2859
    %2888 = vmatprep.subr.bf16.mxu0 0
    %2889 = vmatpush1.bf16.msra.mxu0 %v2858
    %2890 = vmatprep.subr.bf16.mxu0 0
    %2891 = vmatpush2.bf16.msra.mxu0 0
    %2892 = vmatprep.subr.bf16.mxu0 0
    %2893 = vmatpush2.bf16.msra.mxu0 0
    %2894 = vmatprep.subr.bf16.mxu0 0
    %2895 = vmatpush2.bf16.msra.mxu0 0
    %2896 = vmatprep.subr.bf16.mxu0 0
    %2897 = vmatpush2.bf16.msra.mxu0 0
    %2898 = vmatprep.subr.bf16.mxu0 0
    %2899 = vmatpush2.bf16.msra.mxu0 0
    %2900 = vmatprep.subr.bf16.mxu0 0
    %2901 = vmatpush2.bf16.msra.mxu0 0
    %2902 = vmatprep.subr.bf16.mxu0 0
    %2903 = vmatpush2.bf16.msra.mxu0 0
    %2904 = vmatprep.subr.bf16.mxu0 0
    %2905 = vmatpush2.bf16.msra.mxu0 0
    %2906 = vmatprep.mubr.bf16.mxu0 0
    %2907 = vmatmul.mubr.bf16.gmra.mxu0 %v2824
    %v2908 = vpop.f32.mrf.mxu0
    %v2909 = vadd.f32 0.0, %v2908
    %v2910 = vpop.f32.mrf.mxu0
    %v2911 = vpop.f32.mrf.mxu0
    %v2912 = vpop.f32.mrf.mxu0
    %2913 = vdwg.mxu0
    %v2914 = vadd.f32 %v2806, %v2909
    %v2915 = vpack.c.bf16 %v321, %v321
    %s2916 = scalar_lea.vmem %s4, 1536
    %v2917 = vld [vmem:[%s2916] sm:$0xf]
    %v2918 = vld [vmem:[%s2916 + $0x4] sm:$0xf]
    %v2919 = vld [vmem:[%s2916 + $0x8] sm:$0xf]
    %v2920 = vld [vmem:[%s2916 + $0xc] sm:$0xf]
    %v2921 = vld [vmem:[%s2916 + $0x10] sm:$0xf]
    %v2922 = vld [vmem:[%s2916 + $0x14] sm:$0xf]
    %v2923 = vld [vmem:[%s2916 + $0x18] sm:$0xf]
    %v2924 = vld [vmem:[%s2916 + $0x1c] sm:$0xf]
    %v2925 = vld [vmem:[%s2916 + $0x20] sm:$0xf]
    %v2926 = vld [vmem:[%s2916 + $0x24] sm:$0xf]
    %v2927 = vld [vmem:[%s2916 + $0x28] sm:$0xf]
    %v2928 = vld [vmem:[%s2916 + $0x2c] sm:$0xf]
    %v2929 = vld [vmem:[%s2916 + $0x30] sm:$0xf]
    %v2930 = vld [vmem:[%s2916 + $0x34] sm:$0xf]
    %v2931 = vld [vmem:[%s2916 + $0x38] sm:$0xf]
    %v2932 = vld [vmem:[%s2916 + $0x3c] sm:$0xf]
    %v2949 = vunpack.c.l.b16 %v2917
    %v2950 = vunpack.c.l.b16 %v2918
    %v2951 = vunpack.c.l.b16 %v2919
    %v2952 = vunpack.c.l.b16 %v2920
    %v2953 = vunpack.c.l.b16 %v2921
    %v2954 = vunpack.c.l.b16 %v2922
    %v2955 = vunpack.c.l.b16 %v2923
    %v2956 = vunpack.c.l.b16 %v2924
    %v2957 = vunpack.c.l.b16 %v2925
    %v2958 = vunpack.c.l.b16 %v2926
    %v2959 = vunpack.c.l.b16 %v2927
    %v2960 = vunpack.c.l.b16 %v2928
    %v2961 = vunpack.c.l.b16 %v2929
    %v2962 = vunpack.c.l.b16 %v2930
    %v2963 = vunpack.c.l.b16 %v2931
    %v2964 = vunpack.c.l.b16 %v2932
    %v2965 = vpack.c.b16 %v2950, %v2949
    %v2966 = vpack.c.b16 %v2952, %v2951
    %v2967 = vpack.c.b16 %v2954, %v2953
    %v2968 = vpack.c.b16 %v2956, %v2955
    %v2969 = vpack.c.b16 %v2958, %v2957
    %v2970 = vpack.c.b16 %v2960, %v2959
    %v2971 = vpack.c.b16 %v2962, %v2961
    %v2972 = vpack.c.b16 %v2964, %v2963
    %2981 = vmatprep.subr.bf16.mxu0 0
    %2982 = vmatpush1.bf16.msra.mxu0 %v2972
    %2983 = vmatprep.subr.bf16.mxu0 0
    %2984 = vmatpush1.bf16.msra.mxu0 %v2971
    %2985 = vmatprep.subr.bf16.mxu0 0
    %2986 = vmatpush1.bf16.msra.mxu0 %v2970
    %2987 = vmatprep.subr.bf16.mxu0 0
    %2988 = vmatpush1.bf16.msra.mxu0 %v2969
    %2989 = vmatprep.subr.bf16.mxu0 0
    %2990 = vmatpush1.bf16.msra.mxu0 %v2968
    %2991 = vmatprep.subr.bf16.mxu0 0
    %2992 = vmatpush1.bf16.msra.mxu0 %v2967
    %2993 = vmatprep.subr.bf16.mxu0 0
    %2994 = vmatpush1.bf16.msra.mxu0 %v2966
    %2995 = vmatprep.subr.bf16.mxu0 0
    %2996 = vmatpush1.bf16.msra.mxu0 %v2965
    %2997 = vmatprep.subr.bf16.mxu0 0
    %2998 = vmatpush2.bf16.msra.mxu0 0
    %2999 = vmatprep.subr.bf16.mxu0 0
    %3000 = vmatpush2.bf16.msra.mxu0 0
    %3001 = vmatprep.subr.bf16.mxu0 0
    %3002 = vmatpush2.bf16.msra.mxu0 0
    %3003 = vmatprep.subr.bf16.mxu0 0
    %3004 = vmatpush2.bf16.msra.mxu0 0
    %3005 = vmatprep.subr.bf16.mxu0 0
    %3006 = vmatpush2.bf16.msra.mxu0 0
    %3007 = vmatprep.subr.bf16.mxu0 0
    %3008 = vmatpush2.bf16.msra.mxu0 0
    %3009 = vmatprep.subr.bf16.mxu0 0
    %3010 = vmatpush2.bf16.msra.mxu0 0
    %3011 = vmatprep.subr.bf16.mxu0 0
    %3012 = vmatpush2.bf16.msra.mxu0 0
    %3013 = vmatprep.mubr.bf16.mxu0 0
    %3014 = vmatmul.mubr.bf16.gmra.mxu0 %v2915
    %v3015 = vpop.f32.mrf.mxu0
    %v3016 = vadd.f32 0.0, %v3015
    %v3017 = vpop.f32.mrf.mxu0
    %v3018 = vpop.f32.mrf.mxu0
    %v3019 = vpop.f32.mrf.mxu0
    %3020 = vdwg.mxu0
    %v3021 = vadd.f32 %v2914, %v3016
    %s3022 = scalar_lea.vmem %s4, 1600
    %v3023 = vld [vmem:[%s3022] sm:$0xf]
    %v3024 = vld [vmem:[%s3022 + $0x4] sm:$0xf]
    %v3025 = vld [vmem:[%s3022 + $0x8] sm:$0xf]
    %v3026 = vld [vmem:[%s3022 + $0xc] sm:$0xf]
    %v3027 = vld [vmem:[%s3022 + $0x10] sm:$0xf]
    %v3028 = vld [vmem:[%s3022 + $0x14] sm:$0xf]
    %v3029 = vld [vmem:[%s3022 + $0x18] sm:$0xf]
    %v3030 = vld [vmem:[%s3022 + $0x1c] sm:$0xf]
    %v3031 = vld [vmem:[%s3022 + $0x20] sm:$0xf]
    %v3032 = vld [vmem:[%s3022 + $0x24] sm:$0xf]
    %v3033 = vld [vmem:[%s3022 + $0x28] sm:$0xf]
    %v3034 = vld [vmem:[%s3022 + $0x2c] sm:$0xf]
    %v3035 = vld [vmem:[%s3022 + $0x30] sm:$0xf]
    %v3036 = vld [vmem:[%s3022 + $0x34] sm:$0xf]
    %v3037 = vld [vmem:[%s3022 + $0x38] sm:$0xf]
    %v3038 = vld [vmem:[%s3022 + $0x3c] sm:$0xf]
    %v3040 = vrot.slane %v2915, 1
    %v3058 = vunpack.c.l.b16 %v3023
    %v3059 = vunpack.c.l.b16 %v3024
    %v3060 = vunpack.c.l.b16 %v3025
    %v3061 = vunpack.c.l.b16 %v3026
    %v3062 = vunpack.c.l.b16 %v3027
    %v3063 = vunpack.c.l.b16 %v3028
    %v3064 = vunpack.c.l.b16 %v3029
    %v3065 = vunpack.c.l.b16 %v3030
    %v3066 = vunpack.c.l.b16 %v3031
    %v3067 = vunpack.c.l.b16 %v3032
    %v3068 = vunpack.c.l.b16 %v3033
    %v3069 = vunpack.c.l.b16 %v3034
    %v3070 = vunpack.c.l.b16 %v3035
    %v3071 = vunpack.c.l.b16 %v3036
    %v3072 = vunpack.c.l.b16 %v3037
    %v3073 = vunpack.c.l.b16 %v3038
    %v3074 = vpack.c.b16 %v3059, %v3058
    %v3075 = vpack.c.b16 %v3061, %v3060
    %v3076 = vpack.c.b16 %v3063, %v3062
    %v3077 = vpack.c.b16 %v3065, %v3064
    %v3078 = vpack.c.b16 %v3067, %v3066
    %v3079 = vpack.c.b16 %v3069, %v3068
    %v3080 = vpack.c.b16 %v3071, %v3070
    %v3081 = vpack.c.b16 %v3073, %v3072
    %3090 = vmatprep.subr.bf16.mxu0 0
    %3091 = vmatpush1.bf16.msra.mxu0 %v3081
    %3092 = vmatprep.subr.bf16.mxu0 0
    %3093 = vmatpush1.bf16.msra.mxu0 %v3080
    %3094 = vmatprep.subr.bf16.mxu0 0
    %3095 = vmatpush1.bf16.msra.mxu0 %v3079
    %3096 = vmatprep.subr.bf16.mxu0 0
    %3097 = vmatpush1.bf16.msra.mxu0 %v3078
    %3098 = vmatprep.subr.bf16.mxu0 0
    %3099 = vmatpush1.bf16.msra.mxu0 %v3077
    %3100 = vmatprep.subr.bf16.mxu0 0
    %3101 = vmatpush1.bf16.msra.mxu0 %v3076
    %3102 = vmatprep.subr.bf16.mxu0 0
    %3103 = vmatpush1.bf16.msra.mxu0 %v3075
    %3104 = vmatprep.subr.bf16.mxu0 0
    %3105 = vmatpush1.bf16.msra.mxu0 %v3074
    %3106 = vmatprep.subr.bf16.mxu0 0
    %3107 = vmatpush2.bf16.msra.mxu0 0
    %3108 = vmatprep.subr.bf16.mxu0 0
    %3109 = vmatpush2.bf16.msra.mxu0 0
    %3110 = vmatprep.subr.bf16.mxu0 0
    %3111 = vmatpush2.bf16.msra.mxu0 0
    %3112 = vmatprep.subr.bf16.mxu0 0
    %3113 = vmatpush2.bf16.msra.mxu0 0
    %3114 = vmatprep.subr.bf16.mxu0 0
    %3115 = vmatpush2.bf16.msra.mxu0 0
    %3116 = vmatprep.subr.bf16.mxu0 0
    %3117 = vmatpush2.bf16.msra.mxu0 0
    %3118 = vmatprep.subr.bf16.mxu0 0
    %3119 = vmatpush2.bf16.msra.mxu0 0
    %3120 = vmatprep.subr.bf16.mxu0 0
    %3121 = vmatpush2.bf16.msra.mxu0 0
    %3122 = vmatprep.mubr.bf16.mxu0 0
    %3123 = vmatmul.mubr.bf16.gmra.mxu0 %v3040
    %v3124 = vpop.f32.mrf.mxu0
    %v3125 = vadd.f32 0.0, %v3124
    %v3126 = vpop.f32.mrf.mxu0
    %v3127 = vpop.f32.mrf.mxu0
    %v3128 = vpop.f32.mrf.mxu0
    %3129 = vdwg.mxu0
    %v3130 = vadd.f32 %v3021, %v3125
    %s3131 = scalar_lea.vmem %s4, 1664
    %v3132 = vld [vmem:[%s3131] sm:$0xf]
    %v3133 = vld [vmem:[%s3131 + $0x4] sm:$0xf]
    %v3134 = vld [vmem:[%s3131 + $0x8] sm:$0xf]
    %v3135 = vld [vmem:[%s3131 + $0xc] sm:$0xf]
    %v3136 = vld [vmem:[%s3131 + $0x10] sm:$0xf]
    %v3137 = vld [vmem:[%s3131 + $0x14] sm:$0xf]
    %v3138 = vld [vmem:[%s3131 + $0x18] sm:$0xf]
    %v3139 = vld [vmem:[%s3131 + $0x1c] sm:$0xf]
    %v3140 = vld [vmem:[%s3131 + $0x20] sm:$0xf]
    %v3141 = vld [vmem:[%s3131 + $0x24] sm:$0xf]
    %v3142 = vld [vmem:[%s3131 + $0x28] sm:$0xf]
    %v3143 = vld [vmem:[%s3131 + $0x2c] sm:$0xf]
    %v3144 = vld [vmem:[%s3131 + $0x30] sm:$0xf]
    %v3145 = vld [vmem:[%s3131 + $0x34] sm:$0xf]
    %v3146 = vld [vmem:[%s3131 + $0x38] sm:$0xf]
    %v3147 = vld [vmem:[%s3131 + $0x3c] sm:$0xf]
    %v3148 = vrot.slane %v2915, 2
    %v3166 = vunpack.c.l.b16 %v3132
    %v3167 = vunpack.c.l.b16 %v3133
    %v3168 = vunpack.c.l.b16 %v3134
    %v3169 = vunpack.c.l.b16 %v3135
    %v3170 = vunpack.c.l.b16 %v3136
    %v3171 = vunpack.c.l.b16 %v3137
    %v3172 = vunpack.c.l.b16 %v3138
    %v3173 = vunpack.c.l.b16 %v3139
    %v3174 = vunpack.c.l.b16 %v3140
    %v3175 = vunpack.c.l.b16 %v3141
    %v3176 = vunpack.c.l.b16 %v3142
    %v3177 = vunpack.c.l.b16 %v3143
    %v3178 = vunpack.c.l.b16 %v3144
    %v3179 = vunpack.c.l.b16 %v3145
    %v3180 = vunpack.c.l.b16 %v3146
    %v3181 = vunpack.c.l.b16 %v3147
    %v3182 = vpack.c.b16 %v3167, %v3166
    %v3183 = vpack.c.b16 %v3169, %v3168
    %v3184 = vpack.c.b16 %v3171, %v3170
    %v3185 = vpack.c.b16 %v3173, %v3172
    %v3186 = vpack.c.b16 %v3175, %v3174
    %v3187 = vpack.c.b16 %v3177, %v3176
    %v3188 = vpack.c.b16 %v3179, %v3178
    %v3189 = vpack.c.b16 %v3181, %v3180
    %3198 = vmatprep.subr.bf16.mxu0 0
    %3199 = vmatpush1.bf16.msra.mxu0 %v3189
    %3200 = vmatprep.subr.bf16.mxu0 0
    %3201 = vmatpush1.bf16.msra.mxu0 %v3188
    %3202 = vmatprep.subr.bf16.mxu0 0
    %3203 = vmatpush1.bf16.msra.mxu0 %v3187
    %3204 = vmatprep.subr.bf16.mxu0 0
    %3205 = vmatpush1.bf16.msra.mxu0 %v3186
    %3206 = vmatprep.subr.bf16.mxu0 0
    %3207 = vmatpush1.bf16.msra.mxu0 %v3185
    %3208 = vmatprep.subr.bf16.mxu0 0
    %3209 = vmatpush1.bf16.msra.mxu0 %v3184
    %3210 = vmatprep.subr.bf16.mxu0 0
    %3211 = vmatpush1.bf16.msra.mxu0 %v3183
    %3212 = vmatprep.subr.bf16.mxu0 0
    %3213 = vmatpush1.bf16.msra.mxu0 %v3182
    %3214 = vmatprep.subr.bf16.mxu0 0
    %3215 = vmatpush2.bf16.msra.mxu0 0
    %3216 = vmatprep.subr.bf16.mxu0 0
    %3217 = vmatpush2.bf16.msra.mxu0 0
    %3218 = vmatprep.subr.bf16.mxu0 0
    %3219 = vmatpush2.bf16.msra.mxu0 0
    %3220 = vmatprep.subr.bf16.mxu0 0
    %3221 = vmatpush2.bf16.msra.mxu0 0
    %3222 = vmatprep.subr.bf16.mxu0 0
    %3223 = vmatpush2.bf16.msra.mxu0 0
    %3224 = vmatprep.subr.bf16.mxu0 0
    %3225 = vmatpush2.bf16.msra.mxu0 0
    %3226 = vmatprep.subr.bf16.mxu0 0
    %3227 = vmatpush2.bf16.msra.mxu0 0
    %3228 = vmatprep.subr.bf16.mxu0 0
    %3229 = vmatpush2.bf16.msra.mxu0 0
    %3230 = vmatprep.mubr.bf16.mxu0 0
    %3231 = vmatmul.mubr.bf16.gmra.mxu0 %v3148
    %v3232 = vpop.f32.mrf.mxu0
    %v3233 = vadd.f32 0.0, %v3232
    %v3234 = vpop.f32.mrf.mxu0
    %v3235 = vpop.f32.mrf.mxu0
    %v3236 = vpop.f32.mrf.mxu0
    %3237 = vdwg.mxu0
    %v3238 = vadd.f32 %v3130, %v3233
    %s3239 = scalar_lea.vmem %s4, 1728
    %v3240 = vld [vmem:[%s3239] sm:$0xf]
    %v3241 = vld [vmem:[%s3239 + $0x4] sm:$0xf]
    %v3242 = vld [vmem:[%s3239 + $0x8] sm:$0xf]
    %v3243 = vld [vmem:[%s3239 + $0xc] sm:$0xf]
    %v3244 = vld [vmem:[%s3239 + $0x10] sm:$0xf]
    %v3245 = vld [vmem:[%s3239 + $0x14] sm:$0xf]
    %v3246 = vld [vmem:[%s3239 + $0x18] sm:$0xf]
    %v3247 = vld [vmem:[%s3239 + $0x1c] sm:$0xf]
    %v3248 = vld [vmem:[%s3239 + $0x20] sm:$0xf]
    %v3249 = vld [vmem:[%s3239 + $0x24] sm:$0xf]
    %v3250 = vld [vmem:[%s3239 + $0x28] sm:$0xf]
    %v3251 = vld [vmem:[%s3239 + $0x2c] sm:$0xf]
    %v3252 = vld [vmem:[%s3239 + $0x30] sm:$0xf]
    %v3253 = vld [vmem:[%s3239 + $0x34] sm:$0xf]
    %v3254 = vld [vmem:[%s3239 + $0x38] sm:$0xf]
    %v3255 = vld [vmem:[%s3239 + $0x3c] sm:$0xf]
    %v3256 = vrot.slane %v2915, 3
    %v3274 = vunpack.c.l.b16 %v3240
    %v3275 = vunpack.c.l.b16 %v3241
    %v3276 = vunpack.c.l.b16 %v3242
    %v3277 = vunpack.c.l.b16 %v3243
    %v3278 = vunpack.c.l.b16 %v3244
    %v3279 = vunpack.c.l.b16 %v3245
    %v3280 = vunpack.c.l.b16 %v3246
    %v3281 = vunpack.c.l.b16 %v3247
    %v3282 = vunpack.c.l.b16 %v3248
    %v3283 = vunpack.c.l.b16 %v3249
    %v3284 = vunpack.c.l.b16 %v3250
    %v3285 = vunpack.c.l.b16 %v3251
    %v3286 = vunpack.c.l.b16 %v3252
    %v3287 = vunpack.c.l.b16 %v3253
    %v3288 = vunpack.c.l.b16 %v3254
    %v3289 = vunpack.c.l.b16 %v3255
    %v3290 = vpack.c.b16 %v3275, %v3274
    %v3291 = vpack.c.b16 %v3277, %v3276
    %v3292 = vpack.c.b16 %v3279, %v3278
    %v3293 = vpack.c.b16 %v3281, %v3280
    %v3294 = vpack.c.b16 %v3283, %v3282
    %v3295 = vpack.c.b16 %v3285, %v3284
    %v3296 = vpack.c.b16 %v3287, %v3286
    %v3297 = vpack.c.b16 %v3289, %v3288
    %3306 = vmatprep.subr.bf16.mxu0 0
    %3307 = vmatpush1.bf16.msra.mxu0 %v3297
    %3308 = vmatprep.subr.bf16.mxu0 0
    %3309 = vmatpush1.bf16.msra.mxu0 %v3296
    %3310 = vmatprep.subr.bf16.mxu0 0
    %3311 = vmatpush1.bf16.msra.mxu0 %v3295
    %3312 = vmatprep.subr.bf16.mxu0 0
    %3313 = vmatpush1.bf16.msra.mxu0 %v3294
    %3314 = vmatprep.subr.bf16.mxu0 0
    %3315 = vmatpush1.bf16.msra.mxu0 %v3293
    %3316 = vmatprep.subr.bf16.mxu0 0
    %3317 = vmatpush1.bf16.msra.mxu0 %v3292
    %3318 = vmatprep.subr.bf16.mxu0 0
    %3319 = vmatpush1.bf16.msra.mxu0 %v3291
    %3320 = vmatprep.subr.bf16.mxu0 0
    %3321 = vmatpush1.bf16.msra.mxu0 %v3290
    %3322 = vmatprep.subr.bf16.mxu0 0
    %3323 = vmatpush2.bf16.msra.mxu0 0
    %3324 = vmatprep.subr.bf16.mxu0 0
    %3325 = vmatpush2.bf16.msra.mxu0 0
    %3326 = vmatprep.subr.bf16.mxu0 0
    %3327 = vmatpush2.bf16.msra.mxu0 0
    %3328 = vmatprep.subr.bf16.mxu0 0
    %3329 = vmatpush2.bf16.msra.mxu0 0
    %3330 = vmatprep.subr.bf16.mxu0 0
    %3331 = vmatpush2.bf16.msra.mxu0 0
    %3332 = vmatprep.subr.bf16.mxu0 0
    %3333 = vmatpush2.bf16.msra.mxu0 0
    %3334 = vmatprep.subr.bf16.mxu0 0
    %3335 = vmatpush2.bf16.msra.mxu0 0
    %3336 = vmatprep.subr.bf16.mxu0 0
    %3337 = vmatpush2.bf16.msra.mxu0 0
    %3338 = vmatprep.mubr.bf16.mxu0 0
    %3339 = vmatmul.mubr.bf16.gmra.mxu0 %v3256
    %v3340 = vpop.f32.mrf.mxu0
    %v3341 = vadd.f32 0.0, %v3340
    %v3342 = vpop.f32.mrf.mxu0
    %v3343 = vpop.f32.mrf.mxu0
    %v3344 = vpop.f32.mrf.mxu0
    %3345 = vdwg.mxu0
    %v3346 = vadd.f32 %v3238, %v3341
    %v3347 = vpack.c.bf16 %v322, %v322
    %s3348 = scalar_lea.vmem %s4, 1792
    %v3349 = vld [vmem:[%s3348] sm:$0xf]
    %v3350 = vld [vmem:[%s3348 + $0x4] sm:$0xf]
    %v3351 = vld [vmem:[%s3348 + $0x8] sm:$0xf]
    %v3352 = vld [vmem:[%s3348 + $0xc] sm:$0xf]
    %v3353 = vld [vmem:[%s3348 + $0x10] sm:$0xf]
    %v3354 = vld [vmem:[%s3348 + $0x14] sm:$0xf]
    %v3355 = vld [vmem:[%s3348 + $0x18] sm:$0xf]
    %v3356 = vld [vmem:[%s3348 + $0x1c] sm:$0xf]
    %v3357 = vld [vmem:[%s3348 + $0x20] sm:$0xf]
    %v3358 = vld [vmem:[%s3348 + $0x24] sm:$0xf]
    %v3359 = vld [vmem:[%s3348 + $0x28] sm:$0xf]
    %v3360 = vld [vmem:[%s3348 + $0x2c] sm:$0xf]
    %v3361 = vld [vmem:[%s3348 + $0x30] sm:$0xf]
    %v3362 = vld [vmem:[%s3348 + $0x34] sm:$0xf]
    %v3363 = vld [vmem:[%s3348 + $0x38] sm:$0xf]
    %v3364 = vld [vmem:[%s3348 + $0x3c] sm:$0xf]
    %v3381 = vunpack.c.l.b16 %v3349
    %v3382 = vunpack.c.l.b16 %v3350
    %v3383 = vunpack.c.l.b16 %v3351
    %v3384 = vunpack.c.l.b16 %v3352
    %v3385 = vunpack.c.l.b16 %v3353
    %v3386 = vunpack.c.l.b16 %v3354
    %v3387 = vunpack.c.l.b16 %v3355
    %v3388 = vunpack.c.l.b16 %v3356
    %v3389 = vunpack.c.l.b16 %v3357
    %v3390 = vunpack.c.l.b16 %v3358
    %v3391 = vunpack.c.l.b16 %v3359
    %v3392 = vunpack.c.l.b16 %v3360
    %v3393 = vunpack.c.l.b16 %v3361
    %v3394 = vunpack.c.l.b16 %v3362
    %v3395 = vunpack.c.l.b16 %v3363
    %v3396 = vunpack.c.l.b16 %v3364
    %v3397 = vpack.c.b16 %v3382, %v3381
    %v3398 = vpack.c.b16 %v3384, %v3383
    %v3399 = vpack.c.b16 %v3386, %v3385
    %v3400 = vpack.c.b16 %v3388, %v3387
    %v3401 = vpack.c.b16 %v3390, %v3389
    %v3402 = vpack.c.b16 %v3392, %v3391
    %v3403 = vpack.c.b16 %v3394, %v3393
    %v3404 = vpack.c.b16 %v3396, %v3395
    %3413 = vmatprep.subr.bf16.mxu0 0
    %3414 = vmatpush1.bf16.msra.mxu0 %v3404
    %3415 = vmatprep.subr.bf16.mxu0 0
    %3416 = vmatpush1.bf16.msra.mxu0 %v3403
    %3417 = vmatprep.subr.bf16.mxu0 0
    %3418 = vmatpush1.bf16.msra.mxu0 %v3402
    %3419 = vmatprep.subr.bf16.mxu0 0
    %3420 = vmatpush1.bf16.msra.mxu0 %v3401
    %3421 = vmatprep.subr.bf16.mxu0 0
    %3422 = vmatpush1.bf16.msra.mxu0 %v3400
    %3423 = vmatprep.subr.bf16.mxu0 0
    %3424 = vmatpush1.bf16.msra.mxu0 %v3399
    %3425 = vmatprep.subr.bf16.mxu0 0
    %3426 = vmatpush1.bf16.msra.mxu0 %v3398
    %3427 = vmatprep.subr.bf16.mxu0 0
    %3428 = vmatpush1.bf16.msra.mxu0 %v3397
    %3429 = vmatprep.subr.bf16.mxu0 0
    %3430 = vmatpush2.bf16.msra.mxu0 0
    %3431 = vmatprep.subr.bf16.mxu0 0
    %3432 = vmatpush2.bf16.msra.mxu0 0
    %3433 = vmatprep.subr.bf16.mxu0 0
    %3434 = vmatpush2.bf16.msra.mxu0 0
    %3435 = vmatprep.subr.bf16.mxu0 0
    %3436 = vmatpush2.bf16.msra.mxu0 0
    %3437 = vmatprep.subr.bf16.mxu0 0
    %3438 = vmatpush2.bf16.msra.mxu0 0
    %3439 = vmatprep.subr.bf16.mxu0 0
    %3440 = vmatpush2.bf16.msra.mxu0 0
    %3441 = vmatprep.subr.bf16.mxu0 0
    %3442 = vmatpush2.bf16.msra.mxu0 0
    %3443 = vmatprep.subr.bf16.mxu0 0
    %3444 = vmatpush2.bf16.msra.mxu0 0
    %3445 = vmatprep.mubr.bf16.mxu0 0
    %3446 = vmatmul.mubr.bf16.gmra.mxu0 %v3347
    %v3447 = vpop.f32.mrf.mxu0
    %v3448 = vadd.f32 0.0, %v3447
    %v3449 = vpop.f32.mrf.mxu0
    %v3450 = vpop.f32.mrf.mxu0
    %v3451 = vpop.f32.mrf.mxu0
    %3452 = vdwg.mxu0
    %v3453 = vadd.f32 %v3346, %v3448
    %s3454 = scalar_lea.vmem %s4, 1856
    %v3455 = vld [vmem:[%s3454] sm:$0xf]
    %v3456 = vld [vmem:[%s3454 + $0x4] sm:$0xf]
    %v3457 = vld [vmem:[%s3454 + $0x8] sm:$0xf]
    %v3458 = vld [vmem:[%s3454 + $0xc] sm:$0xf]
    %v3459 = vld [vmem:[%s3454 + $0x10] sm:$0xf]
    %v3460 = vld [vmem:[%s3454 + $0x14] sm:$0xf]
    %v3461 = vld [vmem:[%s3454 + $0x18] sm:$0xf]
    %v3462 = vld [vmem:[%s3454 + $0x1c] sm:$0xf]
    %v3463 = vld [vmem:[%s3454 + $0x20] sm:$0xf]
    %v3464 = vld [vmem:[%s3454 + $0x24] sm:$0xf]
    %v3465 = vld [vmem:[%s3454 + $0x28] sm:$0xf]
    %v3466 = vld [vmem:[%s3454 + $0x2c] sm:$0xf]
    %v3467 = vld [vmem:[%s3454 + $0x30] sm:$0xf]
    %v3468 = vld [vmem:[%s3454 + $0x34] sm:$0xf]
    %v3469 = vld [vmem:[%s3454 + $0x38] sm:$0xf]
    %v3470 = vld [vmem:[%s3454 + $0x3c] sm:$0xf]
    %v3472 = vrot.slane %v3347, 1
    %v3490 = vunpack.c.l.b16 %v3455
    %v3491 = vunpack.c.l.b16 %v3456
    %v3492 = vunpack.c.l.b16 %v3457
    %v3493 = vunpack.c.l.b16 %v3458
    %v3494 = vunpack.c.l.b16 %v3459
    %v3495 = vunpack.c.l.b16 %v3460
    %v3496 = vunpack.c.l.b16 %v3461
    %v3497 = vunpack.c.l.b16 %v3462
    %v3498 = vunpack.c.l.b16 %v3463
    %v3499 = vunpack.c.l.b16 %v3464
    %v3500 = vunpack.c.l.b16 %v3465
    %v3501 = vunpack.c.l.b16 %v3466
    %v3502 = vunpack.c.l.b16 %v3467
    %v3503 = vunpack.c.l.b16 %v3468
    %v3504 = vunpack.c.l.b16 %v3469
    %v3505 = vunpack.c.l.b16 %v3470
    %v3506 = vpack.c.b16 %v3491, %v3490
    %v3507 = vpack.c.b16 %v3493, %v3492
    %v3508 = vpack.c.b16 %v3495, %v3494
    %v3509 = vpack.c.b16 %v3497, %v3496
    %v3510 = vpack.c.b16 %v3499, %v3498
    %v3511 = vpack.c.b16 %v3501, %v3500
    %v3512 = vpack.c.b16 %v3503, %v3502
    %v3513 = vpack.c.b16 %v3505, %v3504
    %3522 = vmatprep.subr.bf16.mxu0 0
    %3523 = vmatpush1.bf16.msra.mxu0 %v3513
    %3524 = vmatprep.subr.bf16.mxu0 0
    %3525 = vmatpush1.bf16.msra.mxu0 %v3512
    %3526 = vmatprep.subr.bf16.mxu0 0
    %3527 = vmatpush1.bf16.msra.mxu0 %v3511
    %3528 = vmatprep.subr.bf16.mxu0 0
    %3529 = vmatpush1.bf16.msra.mxu0 %v3510
    %3530 = vmatprep.subr.bf16.mxu0 0
    %3531 = vmatpush1.bf16.msra.mxu0 %v3509
    %3532 = vmatprep.subr.bf16.mxu0 0
    %3533 = vmatpush1.bf16.msra.mxu0 %v3508
    %3534 = vmatprep.subr.bf16.mxu0 0
    %3535 = vmatpush1.bf16.msra.mxu0 %v3507
    %3536 = vmatprep.subr.bf16.mxu0 0
    %3537 = vmatpush1.bf16.msra.mxu0 %v3506
    %3538 = vmatprep.subr.bf16.mxu0 0
    %3539 = vmatpush2.bf16.msra.mxu0 0
    %3540 = vmatprep.subr.bf16.mxu0 0
    %3541 = vmatpush2.bf16.msra.mxu0 0
    %3542 = vmatprep.subr.bf16.mxu0 0
    %3543 = vmatpush2.bf16.msra.mxu0 0
    %3544 = vmatprep.subr.bf16.mxu0 0
    %3545 = vmatpush2.bf16.msra.mxu0 0
    %3546 = vmatprep.subr.bf16.mxu0 0
    %3547 = vmatpush2.bf16.msra.mxu0 0
    %3548 = vmatprep.subr.bf16.mxu0 0
    %3549 = vmatpush2.bf16.msra.mxu0 0
    %3550 = vmatprep.subr.bf16.mxu0 0
    %3551 = vmatpush2.bf16.msra.mxu0 0
    %3552 = vmatprep.subr.bf16.mxu0 0
    %3553 = vmatpush2.bf16.msra.mxu0 0
    %3554 = vmatprep.mubr.bf16.mxu0 0
    %3555 = vmatmul.mubr.bf16.gmra.mxu0 %v3472
    %v3556 = vpop.f32.mrf.mxu0
    %v3557 = vadd.f32 0.0, %v3556
    %v3558 = vpop.f32.mrf.mxu0
    %v3559 = vpop.f32.mrf.mxu0
    %v3560 = vpop.f32.mrf.mxu0
    %3561 = vdwg.mxu0
    %v3562 = vadd.f32 %v3453, %v3557
    %s3563 = scalar_lea.vmem %s4, 1920
    %v3564 = vld [vmem:[%s3563] sm:$0xf]
    %v3565 = vld [vmem:[%s3563 + $0x4] sm:$0xf]
    %v3566 = vld [vmem:[%s3563 + $0x8] sm:$0xf]
    %v3567 = vld [vmem:[%s3563 + $0xc] sm:$0xf]
    %v3568 = vld [vmem:[%s3563 + $0x10] sm:$0xf]
    %v3569 = vld [vmem:[%s3563 + $0x14] sm:$0xf]
    %v3570 = vld [vmem:[%s3563 + $0x18] sm:$0xf]
    %v3571 = vld [vmem:[%s3563 + $0x1c] sm:$0xf]
    %v3572 = vld [vmem:[%s3563 + $0x20] sm:$0xf]
    %v3573 = vld [vmem:[%s3563 + $0x24] sm:$0xf]
    %v3574 = vld [vmem:[%s3563 + $0x28] sm:$0xf]
    %v3575 = vld [vmem:[%s3563 + $0x2c] sm:$0xf]
    %v3576 = vld [vmem:[%s3563 + $0x30] sm:$0xf]
    %v3577 = vld [vmem:[%s3563 + $0x34] sm:$0xf]
    %v3578 = vld [vmem:[%s3563 + $0x38] sm:$0xf]
    %v3579 = vld [vmem:[%s3563 + $0x3c] sm:$0xf]
    %v3580 = vrot.slane %v3347, 2
    %v3598 = vunpack.c.l.b16 %v3564
    %v3599 = vunpack.c.l.b16 %v3565
    %v3600 = vunpack.c.l.b16 %v3566
    %v3601 = vunpack.c.l.b16 %v3567
    %v3602 = vunpack.c.l.b16 %v3568
    %v3603 = vunpack.c.l.b16 %v3569
    %v3604 = vunpack.c.l.b16 %v3570
    %v3605 = vunpack.c.l.b16 %v3571
    %v3606 = vunpack.c.l.b16 %v3572
    %v3607 = vunpack.c.l.b16 %v3573
    %v3608 = vunpack.c.l.b16 %v3574
    %v3609 = vunpack.c.l.b16 %v3575
    %v3610 = vunpack.c.l.b16 %v3576
    %v3611 = vunpack.c.l.b16 %v3577
    %v3612 = vunpack.c.l.b16 %v3578
    %v3613 = vunpack.c.l.b16 %v3579
    %v3614 = vpack.c.b16 %v3599, %v3598
    %v3615 = vpack.c.b16 %v3601, %v3600
    %v3616 = vpack.c.b16 %v3603, %v3602
    %v3617 = vpack.c.b16 %v3605, %v3604
    %v3618 = vpack.c.b16 %v3607, %v3606
    %v3619 = vpack.c.b16 %v3609, %v3608
    %v3620 = vpack.c.b16 %v3611, %v3610
    %v3621 = vpack.c.b16 %v3613, %v3612
    %3630 = vmatprep.subr.bf16.mxu0 0
    %3631 = vmatpush1.bf16.msra.mxu0 %v3621
    %3632 = vmatprep.subr.bf16.mxu0 0
    %3633 = vmatpush1.bf16.msra.mxu0 %v3620
    %3634 = vmatprep.subr.bf16.mxu0 0
    %3635 = vmatpush1.bf16.msra.mxu0 %v3619
    %3636 = vmatprep.subr.bf16.mxu0 0
    %3637 = vmatpush1.bf16.msra.mxu0 %v3618
    %3638 = vmatprep.subr.bf16.mxu0 0
    %3639 = vmatpush1.bf16.msra.mxu0 %v3617
    %3640 = vmatprep.subr.bf16.mxu0 0
    %3641 = vmatpush1.bf16.msra.mxu0 %v3616
    %3642 = vmatprep.subr.bf16.mxu0 0
    %3643 = vmatpush1.bf16.msra.mxu0 %v3615
    %3644 = vmatprep.subr.bf16.mxu0 0
    %3645 = vmatpush1.bf16.msra.mxu0 %v3614
    %3646 = vmatprep.subr.bf16.mxu0 0
    %3647 = vmatpush2.bf16.msra.mxu0 0
    %3648 = vmatprep.subr.bf16.mxu0 0
    %3649 = vmatpush2.bf16.msra.mxu0 0
    %3650 = vmatprep.subr.bf16.mxu0 0
    %3651 = vmatpush2.bf16.msra.mxu0 0
    %3652 = vmatprep.subr.bf16.mxu0 0
    %3653 = vmatpush2.bf16.msra.mxu0 0
    %3654 = vmatprep.subr.bf16.mxu0 0
    %3655 = vmatpush2.bf16.msra.mxu0 0
    %3656 = vmatprep.subr.bf16.mxu0 0
    %3657 = vmatpush2.bf16.msra.mxu0 0
    %3658 = vmatprep.subr.bf16.mxu0 0
    %3659 = vmatpush2.bf16.msra.mxu0 0
    %3660 = vmatprep.subr.bf16.mxu0 0
    %3661 = vmatpush2.bf16.msra.mxu0 0
    %3662 = vmatprep.mubr.bf16.mxu0 0
    %3663 = vmatmul.mubr.bf16.gmra.mxu0 %v3580
    %v3664 = vpop.f32.mrf.mxu0
    %v3665 = vadd.f32 0.0, %v3664
    %v3666 = vpop.f32.mrf.mxu0
    %v3667 = vpop.f32.mrf.mxu0
    %v3668 = vpop.f32.mrf.mxu0
    %3669 = vdwg.mxu0
    %v3670 = vadd.f32 %v3562, %v3665
    %s3671 = scalar_lea.vmem %s4, 1984
    %v3672 = vld [vmem:[%s3671] sm:$0xf]
    %v3673 = vld [vmem:[%s3671 + $0x4] sm:$0xf]
    %v3674 = vld [vmem:[%s3671 + $0x8] sm:$0xf]
    %v3675 = vld [vmem:[%s3671 + $0xc] sm:$0xf]
    %v3676 = vld [vmem:[%s3671 + $0x10] sm:$0xf]
    %v3677 = vld [vmem:[%s3671 + $0x14] sm:$0xf]
    %v3678 = vld [vmem:[%s3671 + $0x18] sm:$0xf]
    %v3679 = vld [vmem:[%s3671 + $0x1c] sm:$0xf]
    %v3680 = vld [vmem:[%s3671 + $0x20] sm:$0xf]
    %v3681 = vld [vmem:[%s3671 + $0x24] sm:$0xf]
    %v3682 = vld [vmem:[%s3671 + $0x28] sm:$0xf]
    %v3683 = vld [vmem:[%s3671 + $0x2c] sm:$0xf]
    %v3684 = vld [vmem:[%s3671 + $0x30] sm:$0xf]
    %v3685 = vld [vmem:[%s3671 + $0x34] sm:$0xf]
    %v3686 = vld [vmem:[%s3671 + $0x38] sm:$0xf]
    %v3687 = vld [vmem:[%s3671 + $0x3c] sm:$0xf]
    %v3688 = vrot.slane %v3347, 3
    %v3706 = vunpack.c.l.b16 %v3672
    %v3707 = vunpack.c.l.b16 %v3673
    %v3708 = vunpack.c.l.b16 %v3674
    %v3709 = vunpack.c.l.b16 %v3675
    %v3710 = vunpack.c.l.b16 %v3676
    %v3711 = vunpack.c.l.b16 %v3677
    %v3712 = vunpack.c.l.b16 %v3678
    %v3713 = vunpack.c.l.b16 %v3679
    %v3714 = vunpack.c.l.b16 %v3680
    %v3715 = vunpack.c.l.b16 %v3681
    %v3716 = vunpack.c.l.b16 %v3682
    %v3717 = vunpack.c.l.b16 %v3683
    %v3718 = vunpack.c.l.b16 %v3684
    %v3719 = vunpack.c.l.b16 %v3685
    %v3720 = vunpack.c.l.b16 %v3686
    %v3721 = vunpack.c.l.b16 %v3687
    %v3722 = vpack.c.b16 %v3707, %v3706
    %v3723 = vpack.c.b16 %v3709, %v3708
    %v3724 = vpack.c.b16 %v3711, %v3710
    %v3725 = vpack.c.b16 %v3713, %v3712
    %v3726 = vpack.c.b16 %v3715, %v3714
    %v3727 = vpack.c.b16 %v3717, %v3716
    %v3728 = vpack.c.b16 %v3719, %v3718
    %v3729 = vpack.c.b16 %v3721, %v3720
    %3738 = vmatprep.subr.bf16.mxu0 0
    %3739 = vmatpush1.bf16.msra.mxu0 %v3729
    %3740 = vmatprep.subr.bf16.mxu0 0
    %3741 = vmatpush1.bf16.msra.mxu0 %v3728
    %3742 = vmatprep.subr.bf16.mxu0 0
    %3743 = vmatpush1.bf16.msra.mxu0 %v3727
    %3744 = vmatprep.subr.bf16.mxu0 0
    %3745 = vmatpush1.bf16.msra.mxu0 %v3726
    %3746 = vmatprep.subr.bf16.mxu0 0
    %3747 = vmatpush1.bf16.msra.mxu0 %v3725
    %3748 = vmatprep.subr.bf16.mxu0 0
    %3749 = vmatpush1.bf16.msra.mxu0 %v3724
    %3750 = vmatprep.subr.bf16.mxu0 0
    %3751 = vmatpush1.bf16.msra.mxu0 %v3723
    %3752 = vmatprep.subr.bf16.mxu0 0
    %3753 = vmatpush1.bf16.msra.mxu0 %v3722
    %3754 = vmatprep.subr.bf16.mxu0 0
    %3755 = vmatpush2.bf16.msra.mxu0 0
    %3756 = vmatprep.subr.bf16.mxu0 0
    %3757 = vmatpush2.bf16.msra.mxu0 0
    %3758 = vmatprep.subr.bf16.mxu0 0
    %3759 = vmatpush2.bf16.msra.mxu0 0
    %3760 = vmatprep.subr.bf16.mxu0 0
    %3761 = vmatpush2.bf16.msra.mxu0 0
    %3762 = vmatprep.subr.bf16.mxu0 0
    %3763 = vmatpush2.bf16.msra.mxu0 0
    %3764 = vmatprep.subr.bf16.mxu0 0
    %3765 = vmatpush2.bf16.msra.mxu0 0
    %3766 = vmatprep.subr.bf16.mxu0 0
    %3767 = vmatpush2.bf16.msra.mxu0 0
    %3768 = vmatprep.subr.bf16.mxu0 0
    %3769 = vmatpush2.bf16.msra.mxu0 0
    %3770 = vmatprep.mubr.bf16.mxu0 0
    %3771 = vmatmul.mubr.bf16.gmra.mxu0 %v3688
    %v3772 = vpop.f32.mrf.mxu0
    %v3773 = vadd.f32 0.0, %v3772
    %v3774 = vpop.f32.mrf.mxu0
    %v3775 = vpop.f32.mrf.mxu0
    %v3776 = vpop.f32.mrf.mxu0
    %3777 = vdwg.mxu0
    %v3778 = vadd.f32 %v3670, %v3773
    %v3779 = vpack.c.bf16 %v323, %v323
    %s3780 = scalar_lea.vmem %s4, 2048
    %v3781 = vld [vmem:[%s3780] sm:$0xf]
    %v3782 = vld [vmem:[%s3780 + $0x4] sm:$0xf]
    %v3783 = vld [vmem:[%s3780 + $0x8] sm:$0xf]
    %v3784 = vld [vmem:[%s3780 + $0xc] sm:$0xf]
    %v3785 = vld [vmem:[%s3780 + $0x10] sm:$0xf]
    %v3786 = vld [vmem:[%s3780 + $0x14] sm:$0xf]
    %v3787 = vld [vmem:[%s3780 + $0x18] sm:$0xf]
    %v3788 = vld [vmem:[%s3780 + $0x1c] sm:$0xf]
    %v3789 = vld [vmem:[%s3780 + $0x20] sm:$0xf]
    %v3790 = vld [vmem:[%s3780 + $0x24] sm:$0xf]
    %v3791 = vld [vmem:[%s3780 + $0x28] sm:$0xf]
    %v3792 = vld [vmem:[%s3780 + $0x2c] sm:$0xf]
    %v3793 = vld [vmem:[%s3780 + $0x30] sm:$0xf]
    %v3794 = vld [vmem:[%s3780 + $0x34] sm:$0xf]
    %v3795 = vld [vmem:[%s3780 + $0x38] sm:$0xf]
    %v3796 = vld [vmem:[%s3780 + $0x3c] sm:$0xf]
    %v3813 = vunpack.c.l.b16 %v3781
    %v3814 = vunpack.c.l.b16 %v3782
    %v3815 = vunpack.c.l.b16 %v3783
    %v3816 = vunpack.c.l.b16 %v3784
    %v3817 = vunpack.c.l.b16 %v3785
    %v3818 = vunpack.c.l.b16 %v3786
    %v3819 = vunpack.c.l.b16 %v3787
    %v3820 = vunpack.c.l.b16 %v3788
    %v3821 = vunpack.c.l.b16 %v3789
    %v3822 = vunpack.c.l.b16 %v3790
    %v3823 = vunpack.c.l.b16 %v3791
    %v3824 = vunpack.c.l.b16 %v3792
    %v3825 = vunpack.c.l.b16 %v3793
    %v3826 = vunpack.c.l.b16 %v3794
    %v3827 = vunpack.c.l.b16 %v3795
    %v3828 = vunpack.c.l.b16 %v3796
    %v3829 = vpack.c.b16 %v3814, %v3813
    %v3830 = vpack.c.b16 %v3816, %v3815
    %v3831 = vpack.c.b16 %v3818, %v3817
    %v3832 = vpack.c.b16 %v3820, %v3819
    %v3833 = vpack.c.b16 %v3822, %v3821
    %v3834 = vpack.c.b16 %v3824, %v3823
    %v3835 = vpack.c.b16 %v3826, %v3825
    %v3836 = vpack.c.b16 %v3828, %v3827
    %3845 = vmatprep.subr.bf16.mxu0 0
    %3846 = vmatpush1.bf16.msra.mxu0 %v3836
    %3847 = vmatprep.subr.bf16.mxu0 0
    %3848 = vmatpush1.bf16.msra.mxu0 %v3835
    %3849 = vmatprep.subr.bf16.mxu0 0
    %3850 = vmatpush1.bf16.msra.mxu0 %v3834
    %3851 = vmatprep.subr.bf16.mxu0 0
    %3852 = vmatpush1.bf16.msra.mxu0 %v3833
    %3853 = vmatprep.subr.bf16.mxu0 0
    %3854 = vmatpush1.bf16.msra.mxu0 %v3832
    %3855 = vmatprep.subr.bf16.mxu0 0
    %3856 = vmatpush1.bf16.msra.mxu0 %v3831
    %3857 = vmatprep.subr.bf16.mxu0 0
    %3858 = vmatpush1.bf16.msra.mxu0 %v3830
    %3859 = vmatprep.subr.bf16.mxu0 0
    %3860 = vmatpush1.bf16.msra.mxu0 %v3829
    %3861 = vmatprep.subr.bf16.mxu0 0
    %3862 = vmatpush2.bf16.msra.mxu0 0
    %3863 = vmatprep.subr.bf16.mxu0 0
    %3864 = vmatpush2.bf16.msra.mxu0 0
    %3865 = vmatprep.subr.bf16.mxu0 0
    %3866 = vmatpush2.bf16.msra.mxu0 0
    %3867 = vmatprep.subr.bf16.mxu0 0
    %3868 = vmatpush2.bf16.msra.mxu0 0
    %3869 = vmatprep.subr.bf16.mxu0 0
    %3870 = vmatpush2.bf16.msra.mxu0 0
    %3871 = vmatprep.subr.bf16.mxu0 0
    %3872 = vmatpush2.bf16.msra.mxu0 0
    %3873 = vmatprep.subr.bf16.mxu0 0
    %3874 = vmatpush2.bf16.msra.mxu0 0
    %3875 = vmatprep.subr.bf16.mxu0 0
    %3876 = vmatpush2.bf16.msra.mxu0 0
    %3877 = vmatprep.mubr.bf16.mxu0 0
    %3878 = vmatmul.mubr.bf16.gmra.mxu0 %v3779
    %v3879 = vpop.f32.mrf.mxu0
    %v3880 = vadd.f32 0.0, %v3879
    %v3881 = vpop.f32.mrf.mxu0
    %v3882 = vpop.f32.mrf.mxu0
    %v3883 = vpop.f32.mrf.mxu0
    %3884 = vdwg.mxu0
    %v3885 = vadd.f32 %v3778, %v3880
    %s3886 = scalar_lea.vmem %s4, 2112
    %v3887 = vld [vmem:[%s3886] sm:$0xf]
    %v3888 = vld [vmem:[%s3886 + $0x4] sm:$0xf]
    %v3889 = vld [vmem:[%s3886 + $0x8] sm:$0xf]
    %v3890 = vld [vmem:[%s3886 + $0xc] sm:$0xf]
    %v3891 = vld [vmem:[%s3886 + $0x10] sm:$0xf]
    %v3892 = vld [vmem:[%s3886 + $0x14] sm:$0xf]
    %v3893 = vld [vmem:[%s3886 + $0x18] sm:$0xf]
    %v3894 = vld [vmem:[%s3886 + $0x1c] sm:$0xf]
    %v3895 = vld [vmem:[%s3886 + $0x20] sm:$0xf]
    %v3896 = vld [vmem:[%s3886 + $0x24] sm:$0xf]
    %v3897 = vld [vmem:[%s3886 + $0x28] sm:$0xf]
    %v3898 = vld [vmem:[%s3886 + $0x2c] sm:$0xf]
    %v3899 = vld [vmem:[%s3886 + $0x30] sm:$0xf]
    %v3900 = vld [vmem:[%s3886 + $0x34] sm:$0xf]
    %v3901 = vld [vmem:[%s3886 + $0x38] sm:$0xf]
    %v3902 = vld [vmem:[%s3886 + $0x3c] sm:$0xf]
    %v3904 = vrot.slane %v3779, 1
    %v3922 = vunpack.c.l.b16 %v3887
    %v3923 = vunpack.c.l.b16 %v3888
    %v3924 = vunpack.c.l.b16 %v3889
    %v3925 = vunpack.c.l.b16 %v3890
    %v3926 = vunpack.c.l.b16 %v3891
    %v3927 = vunpack.c.l.b16 %v3892
    %v3928 = vunpack.c.l.b16 %v3893
    %v3929 = vunpack.c.l.b16 %v3894
    %v3930 = vunpack.c.l.b16 %v3895
    %v3931 = vunpack.c.l.b16 %v3896
    %v3932 = vunpack.c.l.b16 %v3897
    %v3933 = vunpack.c.l.b16 %v3898
    %v3934 = vunpack.c.l.b16 %v3899
    %v3935 = vunpack.c.l.b16 %v3900
    %v3936 = vunpack.c.l.b16 %v3901
    %v3937 = vunpack.c.l.b16 %v3902
    %v3938 = vpack.c.b16 %v3923, %v3922
    %v3939 = vpack.c.b16 %v3925, %v3924
    %v3940 = vpack.c.b16 %v3927, %v3926
    %v3941 = vpack.c.b16 %v3929, %v3928
    %v3942 = vpack.c.b16 %v3931, %v3930
    %v3943 = vpack.c.b16 %v3933, %v3932
    %v3944 = vpack.c.b16 %v3935, %v3934
    %v3945 = vpack.c.b16 %v3937, %v3936
    %3954 = vmatprep.subr.bf16.mxu0 0
    %3955 = vmatpush1.bf16.msra.mxu0 %v3945
    %3956 = vmatprep.subr.bf16.mxu0 0
    %3957 = vmatpush1.bf16.msra.mxu0 %v3944
    %3958 = vmatprep.subr.bf16.mxu0 0
    %3959 = vmatpush1.bf16.msra.mxu0 %v3943
    %3960 = vmatprep.subr.bf16.mxu0 0
    %3961 = vmatpush1.bf16.msra.mxu0 %v3942
    %3962 = vmatprep.subr.bf16.mxu0 0
    %3963 = vmatpush1.bf16.msra.mxu0 %v3941
    %3964 = vmatprep.subr.bf16.mxu0 0
    %3965 = vmatpush1.bf16.msra.mxu0 %v3940
    %3966 = vmatprep.subr.bf16.mxu0 0
    %3967 = vmatpush1.bf16.msra.mxu0 %v3939
    %3968 = vmatprep.subr.bf16.mxu0 0
    %3969 = vmatpush1.bf16.msra.mxu0 %v3938
    %3970 = vmatprep.subr.bf16.mxu0 0
    %3971 = vmatpush2.bf16.msra.mxu0 0
    %3972 = vmatprep.subr.bf16.mxu0 0
    %3973 = vmatpush2.bf16.msra.mxu0 0
    %3974 = vmatprep.subr.bf16.mxu0 0
    %3975 = vmatpush2.bf16.msra.mxu0 0
    %3976 = vmatprep.subr.bf16.mxu0 0
    %3977 = vmatpush2.bf16.msra.mxu0 0
    %3978 = vmatprep.subr.bf16.mxu0 0
    %3979 = vmatpush2.bf16.msra.mxu0 0
    %3980 = vmatprep.subr.bf16.mxu0 0
    %3981 = vmatpush2.bf16.msra.mxu0 0
    %3982 = vmatprep.subr.bf16.mxu0 0
    %3983 = vmatpush2.bf16.msra.mxu0 0
    %3984 = vmatprep.subr.bf16.mxu0 0
    %3985 = vmatpush2.bf16.msra.mxu0 0
    %3986 = vmatprep.mubr.bf16.mxu0 0
    %3987 = vmatmul.mubr.bf16.gmra.mxu0 %v3904
    %v3988 = vpop.f32.mrf.mxu0
    %v3989 = vadd.f32 0.0, %v3988
    %v3990 = vpop.f32.mrf.mxu0
    %v3991 = vpop.f32.mrf.mxu0
    %v3992 = vpop.f32.mrf.mxu0
    %3993 = vdwg.mxu0
    %v3994 = vadd.f32 %v3885, %v3989
    %s3995 = scalar_lea.vmem %s4, 2176
    %v3996 = vld [vmem:[%s3995] sm:$0xf]
    %v3997 = vld [vmem:[%s3995 + $0x4] sm:$0xf]
    %v3998 = vld [vmem:[%s3995 + $0x8] sm:$0xf]
    %v3999 = vld [vmem:[%s3995 + $0xc] sm:$0xf]
    %v4000 = vld [vmem:[%s3995 + $0x10] sm:$0xf]
    %v4001 = vld [vmem:[%s3995 + $0x14] sm:$0xf]
    %v4002 = vld [vmem:[%s3995 + $0x18] sm:$0xf]
    %v4003 = vld [vmem:[%s3995 + $0x1c] sm:$0xf]
    %v4004 = vld [vmem:[%s3995 + $0x20] sm:$0xf]
    %v4005 = vld [vmem:[%s3995 + $0x24] sm:$0xf]
    %v4006 = vld [vmem:[%s3995 + $0x28] sm:$0xf]
    %v4007 = vld [vmem:[%s3995 + $0x2c] sm:$0xf]
    %v4008 = vld [vmem:[%s3995 + $0x30] sm:$0xf]
    %v4009 = vld [vmem:[%s3995 + $0x34] sm:$0xf]
    %v4010 = vld [vmem:[%s3995 + $0x38] sm:$0xf]
    %v4011 = vld [vmem:[%s3995 + $0x3c] sm:$0xf]
    %v4012 = vrot.slane %v3779, 2
    %v4030 = vunpack.c.l.b16 %v3996
    %v4031 = vunpack.c.l.b16 %v3997
    %v4032 = vunpack.c.l.b16 %v3998
    %v4033 = vunpack.c.l.b16 %v3999
    %v4034 = vunpack.c.l.b16 %v4000
    %v4035 = vunpack.c.l.b16 %v4001
    %v4036 = vunpack.c.l.b16 %v4002
    %v4037 = vunpack.c.l.b16 %v4003
    %v4038 = vunpack.c.l.b16 %v4004
    %v4039 = vunpack.c.l.b16 %v4005
    %v4040 = vunpack.c.l.b16 %v4006
    %v4041 = vunpack.c.l.b16 %v4007
    %v4042 = vunpack.c.l.b16 %v4008
    %v4043 = vunpack.c.l.b16 %v4009
    %v4044 = vunpack.c.l.b16 %v4010
    %v4045 = vunpack.c.l.b16 %v4011
    %v4046 = vpack.c.b16 %v4031, %v4030
    %v4047 = vpack.c.b16 %v4033, %v4032
    %v4048 = vpack.c.b16 %v4035, %v4034
    %v4049 = vpack.c.b16 %v4037, %v4036
    %v4050 = vpack.c.b16 %v4039, %v4038
    %v4051 = vpack.c.b16 %v4041, %v4040
    %v4052 = vpack.c.b16 %v4043, %v4042
    %v4053 = vpack.c.b16 %v4045, %v4044
    %4062 = vmatprep.subr.bf16.mxu0 0
    %4063 = vmatpush1.bf16.msra.mxu0 %v4053
    %4064 = vmatprep.subr.bf16.mxu0 0
    %4065 = vmatpush1.bf16.msra.mxu0 %v4052
    %4066 = vmatprep.subr.bf16.mxu0 0
    %4067 = vmatpush1.bf16.msra.mxu0 %v4051
    %4068 = vmatprep.subr.bf16.mxu0 0
    %4069 = vmatpush1.bf16.msra.mxu0 %v4050
    %4070 = vmatprep.subr.bf16.mxu0 0
    %4071 = vmatpush1.bf16.msra.mxu0 %v4049
    %4072 = vmatprep.subr.bf16.mxu0 0
    %4073 = vmatpush1.bf16.msra.mxu0 %v4048
    %4074 = vmatprep.subr.bf16.mxu0 0
    %4075 = vmatpush1.bf16.msra.mxu0 %v4047
    %4076 = vmatprep.subr.bf16.mxu0 0
    %4077 = vmatpush1.bf16.msra.mxu0 %v4046
    %4078 = vmatprep.subr.bf16.mxu0 0
    %4079 = vmatpush2.bf16.msra.mxu0 0
    %4080 = vmatprep.subr.bf16.mxu0 0
    %4081 = vmatpush2.bf16.msra.mxu0 0
    %4082 = vmatprep.subr.bf16.mxu0 0
    %4083 = vmatpush2.bf16.msra.mxu0 0
    %4084 = vmatprep.subr.bf16.mxu0 0
    %4085 = vmatpush2.bf16.msra.mxu0 0
    %4086 = vmatprep.subr.bf16.mxu0 0
    %4087 = vmatpush2.bf16.msra.mxu0 0
    %4088 = vmatprep.subr.bf16.mxu0 0
    %4089 = vmatpush2.bf16.msra.mxu0 0
    %4090 = vmatprep.subr.bf16.mxu0 0
    %4091 = vmatpush2.bf16.msra.mxu0 0
    %4092 = vmatprep.subr.bf16.mxu0 0
    %4093 = vmatpush2.bf16.msra.mxu0 0
    %4094 = vmatprep.mubr.bf16.mxu0 0
    %4095 = vmatmul.mubr.bf16.gmra.mxu0 %v4012
    %v4096 = vpop.f32.mrf.mxu0
    %v4097 = vadd.f32 0.0, %v4096
    %v4098 = vpop.f32.mrf.mxu0
    %v4099 = vpop.f32.mrf.mxu0
    %v4100 = vpop.f32.mrf.mxu0
    %4101 = vdwg.mxu0
    %v4102 = vadd.f32 %v3994, %v4097
    %s4103 = scalar_lea.vmem %s4, 2240
    %v4104 = vld [vmem:[%s4103] sm:$0xf]
    %v4105 = vld [vmem:[%s4103 + $0x4] sm:$0xf]
    %v4106 = vld [vmem:[%s4103 + $0x8] sm:$0xf]
    %v4107 = vld [vmem:[%s4103 + $0xc] sm:$0xf]
    %v4108 = vld [vmem:[%s4103 + $0x10] sm:$0xf]
    %v4109 = vld [vmem:[%s4103 + $0x14] sm:$0xf]
    %v4110 = vld [vmem:[%s4103 + $0x18] sm:$0xf]
    %v4111 = vld [vmem:[%s4103 + $0x1c] sm:$0xf]
    %v4112 = vld [vmem:[%s4103 + $0x20] sm:$0xf]
    %v4113 = vld [vmem:[%s4103 + $0x24] sm:$0xf]
    %v4114 = vld [vmem:[%s4103 + $0x28] sm:$0xf]
    %v4115 = vld [vmem:[%s4103 + $0x2c] sm:$0xf]
    %v4116 = vld [vmem:[%s4103 + $0x30] sm:$0xf]
    %v4117 = vld [vmem:[%s4103 + $0x34] sm:$0xf]
    %v4118 = vld [vmem:[%s4103 + $0x38] sm:$0xf]
    %v4119 = vld [vmem:[%s4103 + $0x3c] sm:$0xf]
    %v4120 = vrot.slane %v3779, 3
    %v4138 = vunpack.c.l.b16 %v4104
    %v4139 = vunpack.c.l.b16 %v4105
    %v4140 = vunpack.c.l.b16 %v4106
    %v4141 = vunpack.c.l.b16 %v4107
    %v4142 = vunpack.c.l.b16 %v4108
    %v4143 = vunpack.c.l.b16 %v4109
    %v4144 = vunpack.c.l.b16 %v4110
    %v4145 = vunpack.c.l.b16 %v4111
    %v4146 = vunpack.c.l.b16 %v4112
    %v4147 = vunpack.c.l.b16 %v4113
    %v4148 = vunpack.c.l.b16 %v4114
    %v4149 = vunpack.c.l.b16 %v4115
    %v4150 = vunpack.c.l.b16 %v4116
    %v4151 = vunpack.c.l.b16 %v4117
    %v4152 = vunpack.c.l.b16 %v4118
    %v4153 = vunpack.c.l.b16 %v4119
    %v4154 = vpack.c.b16 %v4139, %v4138
    %v4155 = vpack.c.b16 %v4141, %v4140
    %v4156 = vpack.c.b16 %v4143, %v4142
    %v4157 = vpack.c.b16 %v4145, %v4144
    %v4158 = vpack.c.b16 %v4147, %v4146
    %v4159 = vpack.c.b16 %v4149, %v4148
    %v4160 = vpack.c.b16 %v4151, %v4150
    %v4161 = vpack.c.b16 %v4153, %v4152
    %4170 = vmatprep.subr.bf16.mxu0 0
    %4171 = vmatpush1.bf16.msra.mxu0 %v4161
    %4172 = vmatprep.subr.bf16.mxu0 0
    %4173 = vmatpush1.bf16.msra.mxu0 %v4160
    %4174 = vmatprep.subr.bf16.mxu0 0
    %4175 = vmatpush1.bf16.msra.mxu0 %v4159
    %4176 = vmatprep.subr.bf16.mxu0 0
    %4177 = vmatpush1.bf16.msra.mxu0 %v4158
    %4178 = vmatprep.subr.bf16.mxu0 0
    %4179 = vmatpush1.bf16.msra.mxu0 %v4157
    %4180 = vmatprep.subr.bf16.mxu0 0
    %4181 = vmatpush1.bf16.msra.mxu0 %v4156
    %4182 = vmatprep.subr.bf16.mxu0 0
    %4183 = vmatpush1.bf16.msra.mxu0 %v4155
    %4184 = vmatprep.subr.bf16.mxu0 0
    %4185 = vmatpush1.bf16.msra.mxu0 %v4154
    %4186 = vmatprep.subr.bf16.mxu0 0
    %4187 = vmatpush2.bf16.msra.mxu0 0
    %4188 = vmatprep.subr.bf16.mxu0 0
    %4189 = vmatpush2.bf16.msra.mxu0 0
    %4190 = vmatprep.subr.bf16.mxu0 0
    %4191 = vmatpush2.bf16.msra.mxu0 0
    %4192 = vmatprep.subr.bf16.mxu0 0
    %4193 = vmatpush2.bf16.msra.mxu0 0
    %4194 = vmatprep.subr.bf16.mxu0 0
    %4195 = vmatpush2.bf16.msra.mxu0 0
    %4196 = vmatprep.subr.bf16.mxu0 0
    %4197 = vmatpush2.bf16.msra.mxu0 0
    %4198 = vmatprep.subr.bf16.mxu0 0
    %4199 = vmatpush2.bf16.msra.mxu0 0
    %4200 = vmatprep.subr.bf16.mxu0 0
    %4201 = vmatpush2.bf16.msra.mxu0 0
    %4202 = vmatprep.mubr.bf16.mxu0 0
    %4203 = vmatmul.mubr.bf16.gmra.mxu0 %v4120
    %v4204 = vpop.f32.mrf.mxu0
    %v4205 = vadd.f32 0.0, %v4204
    %v4206 = vpop.f32.mrf.mxu0
    %v4207 = vpop.f32.mrf.mxu0
    %v4208 = vpop.f32.mrf.mxu0
    %4209 = vdwg.mxu0
    %v4210 = vadd.f32 %v4102, %v4205
    %v4211 = vpack.c.bf16 %v324, %v324
    %s4212 = scalar_lea.vmem %s4, 2304
    %v4213 = vld [vmem:[%s4212] sm:$0xf]
    %v4214 = vld [vmem:[%s4212 + $0x4] sm:$0xf]
    %v4215 = vld [vmem:[%s4212 + $0x8] sm:$0xf]
    %v4216 = vld [vmem:[%s4212 + $0xc] sm:$0xf]
    %v4217 = vld [vmem:[%s4212 + $0x10] sm:$0xf]
    %v4218 = vld [vmem:[%s4212 + $0x14] sm:$0xf]
    %v4219 = vld [vmem:[%s4212 + $0x18] sm:$0xf]
    %v4220 = vld [vmem:[%s4212 + $0x1c] sm:$0xf]
    %v4221 = vld [vmem:[%s4212 + $0x20] sm:$0xf]
    %v4222 = vld [vmem:[%s4212 + $0x24] sm:$0xf]
    %v4223 = vld [vmem:[%s4212 + $0x28] sm:$0xf]
    %v4224 = vld [vmem:[%s4212 + $0x2c] sm:$0xf]
    %v4225 = vld [vmem:[%s4212 + $0x30] sm:$0xf]
    %v4226 = vld [vmem:[%s4212 + $0x34] sm:$0xf]
    %v4227 = vld [vmem:[%s4212 + $0x38] sm:$0xf]
    %v4228 = vld [vmem:[%s4212 + $0x3c] sm:$0xf]
    %v4245 = vunpack.c.l.b16 %v4213
    %v4246 = vunpack.c.l.b16 %v4214
    %v4247 = vunpack.c.l.b16 %v4215
    %v4248 = vunpack.c.l.b16 %v4216
    %v4249 = vunpack.c.l.b16 %v4217
    %v4250 = vunpack.c.l.b16 %v4218
    %v4251 = vunpack.c.l.b16 %v4219
    %v4252 = vunpack.c.l.b16 %v4220
    %v4253 = vunpack.c.l.b16 %v4221
    %v4254 = vunpack.c.l.b16 %v4222
    %v4255 = vunpack.c.l.b16 %v4223
    %v4256 = vunpack.c.l.b16 %v4224
    %v4257 = vunpack.c.l.b16 %v4225
    %v4258 = vunpack.c.l.b16 %v4226
    %v4259 = vunpack.c.l.b16 %v4227
    %v4260 = vunpack.c.l.b16 %v4228
    %v4261 = vpack.c.b16 %v4246, %v4245
    %v4262 = vpack.c.b16 %v4248, %v4247
    %v4263 = vpack.c.b16 %v4250, %v4249
    %v4264 = vpack.c.b16 %v4252, %v4251
    %v4265 = vpack.c.b16 %v4254, %v4253
    %v4266 = vpack.c.b16 %v4256, %v4255
    %v4267 = vpack.c.b16 %v4258, %v4257
    %v4268 = vpack.c.b16 %v4260, %v4259
    %4277 = vmatprep.subr.bf16.mxu0 0
    %4278 = vmatpush1.bf16.msra.mxu0 %v4268
    %4279 = vmatprep.subr.bf16.mxu0 0
    %4280 = vmatpush1.bf16.msra.mxu0 %v4267
    %4281 = vmatprep.subr.bf16.mxu0 0
    %4282 = vmatpush1.bf16.msra.mxu0 %v4266
    %4283 = vmatprep.subr.bf16.mxu0 0
    %4284 = vmatpush1.bf16.msra.mxu0 %v4265
    %4285 = vmatprep.subr.bf16.mxu0 0
    %4286 = vmatpush1.bf16.msra.mxu0 %v4264
    %4287 = vmatprep.subr.bf16.mxu0 0
    %4288 = vmatpush1.bf16.msra.mxu0 %v4263
    %4289 = vmatprep.subr.bf16.mxu0 0
    %4290 = vmatpush1.bf16.msra.mxu0 %v4262
    %4291 = vmatprep.subr.bf16.mxu0 0
    %4292 = vmatpush1.bf16.msra.mxu0 %v4261
    %4293 = vmatprep.subr.bf16.mxu0 0
    %4294 = vmatpush2.bf16.msra.mxu0 0
    %4295 = vmatprep.subr.bf16.mxu0 0
    %4296 = vmatpush2.bf16.msra.mxu0 0
    %4297 = vmatprep.subr.bf16.mxu0 0
    %4298 = vmatpush2.bf16.msra.mxu0 0
    %4299 = vmatprep.subr.bf16.mxu0 0
    %4300 = vmatpush2.bf16.msra.mxu0 0
    %4301 = vmatprep.subr.bf16.mxu0 0
    %4302 = vmatpush2.bf16.msra.mxu0 0
    %4303 = vmatprep.subr.bf16.mxu0 0
    %4304 = vmatpush2.bf16.msra.mxu0 0
    %4305 = vmatprep.subr.bf16.mxu0 0
    %4306 = vmatpush2.bf16.msra.mxu0 0
    %4307 = vmatprep.subr.bf16.mxu0 0
    %4308 = vmatpush2.bf16.msra.mxu0 0
    %4309 = vmatprep.mubr.bf16.mxu0 0
    %4310 = vmatmul.mubr.bf16.gmra.mxu0 %v4211
    %v4311 = vpop.f32.mrf.mxu0
    %v4312 = vadd.f32 0.0, %v4311
    %v4313 = vpop.f32.mrf.mxu0
    %v4314 = vpop.f32.mrf.mxu0
    %v4315 = vpop.f32.mrf.mxu0
    %4316 = vdwg.mxu0
    %v4317 = vadd.f32 %v4210, %v4312
    %s4318 = scalar_lea.vmem %s4, 2368
    %v4319 = vld [vmem:[%s4318] sm:$0xf]
    %v4320 = vld [vmem:[%s4318 + $0x4] sm:$0xf]
    %v4321 = vld [vmem:[%s4318 + $0x8] sm:$0xf]
    %v4322 = vld [vmem:[%s4318 + $0xc] sm:$0xf]
    %v4323 = vld [vmem:[%s4318 + $0x10] sm:$0xf]
    %v4324 = vld [vmem:[%s4318 + $0x14] sm:$0xf]
    %v4325 = vld [vmem:[%s4318 + $0x18] sm:$0xf]
    %v4326 = vld [vmem:[%s4318 + $0x1c] sm:$0xf]
    %v4327 = vld [vmem:[%s4318 + $0x20] sm:$0xf]
    %v4328 = vld [vmem:[%s4318 + $0x24] sm:$0xf]
    %v4329 = vld [vmem:[%s4318 + $0x28] sm:$0xf]
    %v4330 = vld [vmem:[%s4318 + $0x2c] sm:$0xf]
    %v4331 = vld [vmem:[%s4318 + $0x30] sm:$0xf]
    %v4332 = vld [vmem:[%s4318 + $0x34] sm:$0xf]
    %v4333 = vld [vmem:[%s4318 + $0x38] sm:$0xf]
    %v4334 = vld [vmem:[%s4318 + $0x3c] sm:$0xf]
    %v4336 = vrot.slane %v4211, 1
    %v4354 = vunpack.c.l.b16 %v4319
    %v4355 = vunpack.c.l.b16 %v4320
    %v4356 = vunpack.c.l.b16 %v4321
    %v4357 = vunpack.c.l.b16 %v4322
    %v4358 = vunpack.c.l.b16 %v4323
    %v4359 = vunpack.c.l.b16 %v4324
    %v4360 = vunpack.c.l.b16 %v4325
    %v4361 = vunpack.c.l.b16 %v4326
    %v4362 = vunpack.c.l.b16 %v4327
    %v4363 = vunpack.c.l.b16 %v4328
    %v4364 = vunpack.c.l.b16 %v4329
    %v4365 = vunpack.c.l.b16 %v4330
    %v4366 = vunpack.c.l.b16 %v4331
    %v4367 = vunpack.c.l.b16 %v4332
    %v4368 = vunpack.c.l.b16 %v4333
    %v4369 = vunpack.c.l.b16 %v4334
    %v4370 = vpack.c.b16 %v4355, %v4354
    %v4371 = vpack.c.b16 %v4357, %v4356
    %v4372 = vpack.c.b16 %v4359, %v4358
    %v4373 = vpack.c.b16 %v4361, %v4360
    %v4374 = vpack.c.b16 %v4363, %v4362
    %v4375 = vpack.c.b16 %v4365, %v4364
    %v4376 = vpack.c.b16 %v4367, %v4366
    %v4377 = vpack.c.b16 %v4369, %v4368
    %4386 = vmatprep.subr.bf16.mxu0 0
    %4387 = vmatpush1.bf16.msra.mxu0 %v4377
    %4388 = vmatprep.subr.bf16.mxu0 0
    %4389 = vmatpush1.bf16.msra.mxu0 %v4376
    %4390 = vmatprep.subr.bf16.mxu0 0
    %4391 = vmatpush1.bf16.msra.mxu0 %v4375
    %4392 = vmatprep.subr.bf16.mxu0 0
    %4393 = vmatpush1.bf16.msra.mxu0 %v4374
    %4394 = vmatprep.subr.bf16.mxu0 0
    %4395 = vmatpush1.bf16.msra.mxu0 %v4373
    %4396 = vmatprep.subr.bf16.mxu0 0
    %4397 = vmatpush1.bf16.msra.mxu0 %v4372
    %4398 = vmatprep.subr.bf16.mxu0 0
    %4399 = vmatpush1.bf16.msra.mxu0 %v4371
    %4400 = vmatprep.subr.bf16.mxu0 0
    %4401 = vmatpush1.bf16.msra.mxu0 %v4370
    %4402 = vmatprep.subr.bf16.mxu0 0
    %4403 = vmatpush2.bf16.msra.mxu0 0
    %4404 = vmatprep.subr.bf16.mxu0 0
    %4405 = vmatpush2.bf16.msra.mxu0 0
    %4406 = vmatprep.subr.bf16.mxu0 0
    %4407 = vmatpush2.bf16.msra.mxu0 0
    %4408 = vmatprep.subr.bf16.mxu0 0
    %4409 = vmatpush2.bf16.msra.mxu0 0
    %4410 = vmatprep.subr.bf16.mxu0 0
    %4411 = vmatpush2.bf16.msra.mxu0 0
    %4412 = vmatprep.subr.bf16.mxu0 0
    %4413 = vmatpush2.bf16.msra.mxu0 0
    %4414 = vmatprep.subr.bf16.mxu0 0
    %4415 = vmatpush2.bf16.msra.mxu0 0
    %4416 = vmatprep.subr.bf16.mxu0 0
    %4417 = vmatpush2.bf16.msra.mxu0 0
    %4418 = vmatprep.mubr.bf16.mxu0 0
    %4419 = vmatmul.mubr.bf16.gmra.mxu0 %v4336
    %v4420 = vpop.f32.mrf.mxu0
    %v4421 = vadd.f32 0.0, %v4420
    %v4422 = vpop.f32.mrf.mxu0
    %v4423 = vpop.f32.mrf.mxu0
    %v4424 = vpop.f32.mrf.mxu0
    %4425 = vdwg.mxu0
    %v4426 = vadd.f32 %v4317, %v4421
    %s4427 = scalar_lea.vmem %s4, 2432
    %v4428 = vld [vmem:[%s4427] sm:$0xf]
    %v4429 = vld [vmem:[%s4427 + $0x4] sm:$0xf]
    %v4430 = vld [vmem:[%s4427 + $0x8] sm:$0xf]
    %v4431 = vld [vmem:[%s4427 + $0xc] sm:$0xf]
    %v4432 = vld [vmem:[%s4427 + $0x10] sm:$0xf]
    %v4433 = vld [vmem:[%s4427 + $0x14] sm:$0xf]
    %v4434 = vld [vmem:[%s4427 + $0x18] sm:$0xf]
    %v4435 = vld [vmem:[%s4427 + $0x1c] sm:$0xf]
    %v4436 = vld [vmem:[%s4427 + $0x20] sm:$0xf]
    %v4437 = vld [vmem:[%s4427 + $0x24] sm:$0xf]
    %v4438 = vld [vmem:[%s4427 + $0x28] sm:$0xf]
    %v4439 = vld [vmem:[%s4427 + $0x2c] sm:$0xf]
    %v4440 = vld [vmem:[%s4427 + $0x30] sm:$0xf]
    %v4441 = vld [vmem:[%s4427 + $0x34] sm:$0xf]
    %v4442 = vld [vmem:[%s4427 + $0x38] sm:$0xf]
    %v4443 = vld [vmem:[%s4427 + $0x3c] sm:$0xf]
    %v4444 = vrot.slane %v4211, 2
    %v4462 = vunpack.c.l.b16 %v4428
    %v4463 = vunpack.c.l.b16 %v4429
    %v4464 = vunpack.c.l.b16 %v4430
    %v4465 = vunpack.c.l.b16 %v4431
    %v4466 = vunpack.c.l.b16 %v4432
    %v4467 = vunpack.c.l.b16 %v4433
    %v4468 = vunpack.c.l.b16 %v4434
    %v4469 = vunpack.c.l.b16 %v4435
    %v4470 = vunpack.c.l.b16 %v4436
    %v4471 = vunpack.c.l.b16 %v4437
    %v4472 = vunpack.c.l.b16 %v4438
    %v4473 = vunpack.c.l.b16 %v4439
    %v4474 = vunpack.c.l.b16 %v4440
    %v4475 = vunpack.c.l.b16 %v4441
    %v4476 = vunpack.c.l.b16 %v4442
    %v4477 = vunpack.c.l.b16 %v4443
    %v4478 = vpack.c.b16 %v4463, %v4462
    %v4479 = vpack.c.b16 %v4465, %v4464
    %v4480 = vpack.c.b16 %v4467, %v4466
    %v4481 = vpack.c.b16 %v4469, %v4468
    %v4482 = vpack.c.b16 %v4471, %v4470
    %v4483 = vpack.c.b16 %v4473, %v4472
    %v4484 = vpack.c.b16 %v4475, %v4474
    %v4485 = vpack.c.b16 %v4477, %v4476
    %4494 = vmatprep.subr.bf16.mxu0 0
    %4495 = vmatpush1.bf16.msra.mxu0 %v4485
    %4496 = vmatprep.subr.bf16.mxu0 0
    %4497 = vmatpush1.bf16.msra.mxu0 %v4484
    %4498 = vmatprep.subr.bf16.mxu0 0
    %4499 = vmatpush1.bf16.msra.mxu0 %v4483
    %4500 = vmatprep.subr.bf16.mxu0 0
    %4501 = vmatpush1.bf16.msra.mxu0 %v4482
    %4502 = vmatprep.subr.bf16.mxu0 0
    %4503 = vmatpush1.bf16.msra.mxu0 %v4481
    %4504 = vmatprep.subr.bf16.mxu0 0
    %4505 = vmatpush1.bf16.msra.mxu0 %v4480
    %4506 = vmatprep.subr.bf16.mxu0 0
    %4507 = vmatpush1.bf16.msra.mxu0 %v4479
    %4508 = vmatprep.subr.bf16.mxu0 0
    %4509 = vmatpush1.bf16.msra.mxu0 %v4478
    %4510 = vmatprep.subr.bf16.mxu0 0
    %4511 = vmatpush2.bf16.msra.mxu0 0
    %4512 = vmatprep.subr.bf16.mxu0 0
    %4513 = vmatpush2.bf16.msra.mxu0 0
    %4514 = vmatprep.subr.bf16.mxu0 0
    %4515 = vmatpush2.bf16.msra.mxu0 0
    %4516 = vmatprep.subr.bf16.mxu0 0
    %4517 = vmatpush2.bf16.msra.mxu0 0
    %4518 = vmatprep.subr.bf16.mxu0 0
    %4519 = vmatpush2.bf16.msra.mxu0 0
    %4520 = vmatprep.subr.bf16.mxu0 0
    %4521 = vmatpush2.bf16.msra.mxu0 0
    %4522 = vmatprep.subr.bf16.mxu0 0
    %4523 = vmatpush2.bf16.msra.mxu0 0
    %4524 = vmatprep.subr.bf16.mxu0 0
    %4525 = vmatpush2.bf16.msra.mxu0 0
    %4526 = vmatprep.mubr.bf16.mxu0 0
    %4527 = vmatmul.mubr.bf16.gmra.mxu0 %v4444
    %v4528 = vpop.f32.mrf.mxu0
    %v4529 = vadd.f32 0.0, %v4528
    %v4530 = vpop.f32.mrf.mxu0
    %v4531 = vpop.f32.mrf.mxu0
    %v4532 = vpop.f32.mrf.mxu0
    %4533 = vdwg.mxu0
    %v4534 = vadd.f32 %v4426, %v4529
    %s4535 = scalar_lea.vmem %s4, 2496
    %v4536 = vld [vmem:[%s4535] sm:$0xf]
    %v4537 = vld [vmem:[%s4535 + $0x4] sm:$0xf]
    %v4538 = vld [vmem:[%s4535 + $0x8] sm:$0xf]
    %v4539 = vld [vmem:[%s4535 + $0xc] sm:$0xf]
    %v4540 = vld [vmem:[%s4535 + $0x10] sm:$0xf]
    %v4541 = vld [vmem:[%s4535 + $0x14] sm:$0xf]
    %v4542 = vld [vmem:[%s4535 + $0x18] sm:$0xf]
    %v4543 = vld [vmem:[%s4535 + $0x1c] sm:$0xf]
    %v4544 = vld [vmem:[%s4535 + $0x20] sm:$0xf]
    %v4545 = vld [vmem:[%s4535 + $0x24] sm:$0xf]
    %v4546 = vld [vmem:[%s4535 + $0x28] sm:$0xf]
    %v4547 = vld [vmem:[%s4535 + $0x2c] sm:$0xf]
    %v4548 = vld [vmem:[%s4535 + $0x30] sm:$0xf]
    %v4549 = vld [vmem:[%s4535 + $0x34] sm:$0xf]
    %v4550 = vld [vmem:[%s4535 + $0x38] sm:$0xf]
    %v4551 = vld [vmem:[%s4535 + $0x3c] sm:$0xf]
    %v4552 = vrot.slane %v4211, 3
    %v4570 = vunpack.c.l.b16 %v4536
    %v4571 = vunpack.c.l.b16 %v4537
    %v4572 = vunpack.c.l.b16 %v4538
    %v4573 = vunpack.c.l.b16 %v4539
    %v4574 = vunpack.c.l.b16 %v4540
    %v4575 = vunpack.c.l.b16 %v4541
    %v4576 = vunpack.c.l.b16 %v4542
    %v4577 = vunpack.c.l.b16 %v4543
    %v4578 = vunpack.c.l.b16 %v4544
    %v4579 = vunpack.c.l.b16 %v4545
    %v4580 = vunpack.c.l.b16 %v4546
    %v4581 = vunpack.c.l.b16 %v4547
    %v4582 = vunpack.c.l.b16 %v4548
    %v4583 = vunpack.c.l.b16 %v4549
    %v4584 = vunpack.c.l.b16 %v4550
    %v4585 = vunpack.c.l.b16 %v4551
    %v4586 = vpack.c.b16 %v4571, %v4570
    %v4587 = vpack.c.b16 %v4573, %v4572
    %v4588 = vpack.c.b16 %v4575, %v4574
    %v4589 = vpack.c.b16 %v4577, %v4576
    %v4590 = vpack.c.b16 %v4579, %v4578
    %v4591 = vpack.c.b16 %v4581, %v4580
    %v4592 = vpack.c.b16 %v4583, %v4582
    %v4593 = vpack.c.b16 %v4585, %v4584
    %4602 = vmatprep.subr.bf16.mxu0 0
    %4603 = vmatpush1.bf16.msra.mxu0 %v4593
    %4604 = vmatprep.subr.bf16.mxu0 0
    %4605 = vmatpush1.bf16.msra.mxu0 %v4592
    %4606 = vmatprep.subr.bf16.mxu0 0
    %4607 = vmatpush1.bf16.msra.mxu0 %v4591
    %4608 = vmatprep.subr.bf16.mxu0 0
    %4609 = vmatpush1.bf16.msra.mxu0 %v4590
    %4610 = vmatprep.subr.bf16.mxu0 0
    %4611 = vmatpush1.bf16.msra.mxu0 %v4589
    %4612 = vmatprep.subr.bf16.mxu0 0
    %4613 = vmatpush1.bf16.msra.mxu0 %v4588
    %4614 = vmatprep.subr.bf16.mxu0 0
    %4615 = vmatpush1.bf16.msra.mxu0 %v4587
    %4616 = vmatprep.subr.bf16.mxu0 0
    %4617 = vmatpush1.bf16.msra.mxu0 %v4586
    %4618 = vmatprep.subr.bf16.mxu0 0
    %4619 = vmatpush2.bf16.msra.mxu0 0
    %4620 = vmatprep.subr.bf16.mxu0 0
    %4621 = vmatpush2.bf16.msra.mxu0 0
    %4622 = vmatprep.subr.bf16.mxu0 0
    %4623 = vmatpush2.bf16.msra.mxu0 0
    %4624 = vmatprep.subr.bf16.mxu0 0
    %4625 = vmatpush2.bf16.msra.mxu0 0
    %4626 = vmatprep.subr.bf16.mxu0 0
    %4627 = vmatpush2.bf16.msra.mxu0 0
    %4628 = vmatprep.subr.bf16.mxu0 0
    %4629 = vmatpush2.bf16.msra.mxu0 0
    %4630 = vmatprep.subr.bf16.mxu0 0
    %4631 = vmatpush2.bf16.msra.mxu0 0
    %4632 = vmatprep.subr.bf16.mxu0 0
    %4633 = vmatpush2.bf16.msra.mxu0 0
    %4634 = vmatprep.mubr.bf16.mxu0 0
    %4635 = vmatmul.mubr.bf16.gmra.mxu0 %v4552
    %v4636 = vpop.f32.mrf.mxu0
    %v4637 = vadd.f32 0.0, %v4636
    %v4638 = vpop.f32.mrf.mxu0
    %v4639 = vpop.f32.mrf.mxu0
    %v4640 = vpop.f32.mrf.mxu0
    %4641 = vdwg.mxu0
    %v4642 = vadd.f32 %v4534, %v4637
    %v4643 = vpack.c.bf16 %v325, %v325
    %s4644 = scalar_lea.vmem %s4, 2560
    %v4645 = vld [vmem:[%s4644] sm:$0xf]
    %v4646 = vld [vmem:[%s4644 + $0x4] sm:$0xf]
    %v4647 = vld [vmem:[%s4644 + $0x8] sm:$0xf]
    %v4648 = vld [vmem:[%s4644 + $0xc] sm:$0xf]
    %v4649 = vld [vmem:[%s4644 + $0x10] sm:$0xf]
    %v4650 = vld [vmem:[%s4644 + $0x14] sm:$0xf]
    %v4651 = vld [vmem:[%s4644 + $0x18] sm:$0xf]
    %v4652 = vld [vmem:[%s4644 + $0x1c] sm:$0xf]
    %v4653 = vld [vmem:[%s4644 + $0x20] sm:$0xf]
    %v4654 = vld [vmem:[%s4644 + $0x24] sm:$0xf]
    %v4655 = vld [vmem:[%s4644 + $0x28] sm:$0xf]
    %v4656 = vld [vmem:[%s4644 + $0x2c] sm:$0xf]
    %v4657 = vld [vmem:[%s4644 + $0x30] sm:$0xf]
    %v4658 = vld [vmem:[%s4644 + $0x34] sm:$0xf]
    %v4659 = vld [vmem:[%s4644 + $0x38] sm:$0xf]
    %v4660 = vld [vmem:[%s4644 + $0x3c] sm:$0xf]
    %v4677 = vunpack.c.l.b16 %v4645
    %v4678 = vunpack.c.l.b16 %v4646
    %v4679 = vunpack.c.l.b16 %v4647
    %v4680 = vunpack.c.l.b16 %v4648
    %v4681 = vunpack.c.l.b16 %v4649
    %v4682 = vunpack.c.l.b16 %v4650
    %v4683 = vunpack.c.l.b16 %v4651
    %v4684 = vunpack.c.l.b16 %v4652
    %v4685 = vunpack.c.l.b16 %v4653
    %v4686 = vunpack.c.l.b16 %v4654
    %v4687 = vunpack.c.l.b16 %v4655
    %v4688 = vunpack.c.l.b16 %v4656
    %v4689 = vunpack.c.l.b16 %v4657
    %v4690 = vunpack.c.l.b16 %v4658
    %v4691 = vunpack.c.l.b16 %v4659
    %v4692 = vunpack.c.l.b16 %v4660
    %v4693 = vpack.c.b16 %v4678, %v4677
    %v4694 = vpack.c.b16 %v4680, %v4679
    %v4695 = vpack.c.b16 %v4682, %v4681
    %v4696 = vpack.c.b16 %v4684, %v4683
    %v4697 = vpack.c.b16 %v4686, %v4685
    %v4698 = vpack.c.b16 %v4688, %v4687
    %v4699 = vpack.c.b16 %v4690, %v4689
    %v4700 = vpack.c.b16 %v4692, %v4691
    %4709 = vmatprep.subr.bf16.mxu0 0
    %4710 = vmatpush1.bf16.msra.mxu0 %v4700
    %4711 = vmatprep.subr.bf16.mxu0 0
    %4712 = vmatpush1.bf16.msra.mxu0 %v4699
    %4713 = vmatprep.subr.bf16.mxu0 0
    %4714 = vmatpush1.bf16.msra.mxu0 %v4698
    %4715 = vmatprep.subr.bf16.mxu0 0
    %4716 = vmatpush1.bf16.msra.mxu0 %v4697
    %4717 = vmatprep.subr.bf16.mxu0 0
    %4718 = vmatpush1.bf16.msra.mxu0 %v4696
    %4719 = vmatprep.subr.bf16.mxu0 0
    %4720 = vmatpush1.bf16.msra.mxu0 %v4695
    %4721 = vmatprep.subr.bf16.mxu0 0
    %4722 = vmatpush1.bf16.msra.mxu0 %v4694
    %4723 = vmatprep.subr.bf16.mxu0 0
    %4724 = vmatpush1.bf16.msra.mxu0 %v4693
    %4725 = vmatprep.subr.bf16.mxu0 0
    %4726 = vmatpush2.bf16.msra.mxu0 0
    %4727 = vmatprep.subr.bf16.mxu0 0
    %4728 = vmatpush2.bf16.msra.mxu0 0
    %4729 = vmatprep.subr.bf16.mxu0 0
    %4730 = vmatpush2.bf16.msra.mxu0 0
    %4731 = vmatprep.subr.bf16.mxu0 0
    %4732 = vmatpush2.bf16.msra.mxu0 0
    %4733 = vmatprep.subr.bf16.mxu0 0
    %4734 = vmatpush2.bf16.msra.mxu0 0
    %4735 = vmatprep.subr.bf16.mxu0 0
    %4736 = vmatpush2.bf16.msra.mxu0 0
    %4737 = vmatprep.subr.bf16.mxu0 0
    %4738 = vmatpush2.bf16.msra.mxu0 0
    %4739 = vmatprep.subr.bf16.mxu0 0
    %4740 = vmatpush2.bf16.msra.mxu0 0
    %4741 = vmatprep.mubr.bf16.mxu0 0
    %4742 = vmatmul.mubr.bf16.gmra.mxu0 %v4643
    %v4743 = vpop.f32.mrf.mxu0
    %v4744 = vadd.f32 0.0, %v4743
    %v4745 = vpop.f32.mrf.mxu0
    %v4746 = vpop.f32.mrf.mxu0
    %v4747 = vpop.f32.mrf.mxu0
    %4748 = vdwg.mxu0
    %v4749 = vadd.f32 %v4642, %v4744
    %s4750 = scalar_lea.vmem %s4, 2624
    %v4751 = vld [vmem:[%s4750] sm:$0xf]
    %v4752 = vld [vmem:[%s4750 + $0x4] sm:$0xf]
    %v4753 = vld [vmem:[%s4750 + $0x8] sm:$0xf]
    %v4754 = vld [vmem:[%s4750 + $0xc] sm:$0xf]
    %v4755 = vld [vmem:[%s4750 + $0x10] sm:$0xf]
    %v4756 = vld [vmem:[%s4750 + $0x14] sm:$0xf]
    %v4757 = vld [vmem:[%s4750 + $0x18] sm:$0xf]
    %v4758 = vld [vmem:[%s4750 + $0x1c] sm:$0xf]
    %v4759 = vld [vmem:[%s4750 + $0x20] sm:$0xf]
    %v4760 = vld [vmem:[%s4750 + $0x24] sm:$0xf]
    %v4761 = vld [vmem:[%s4750 + $0x28] sm:$0xf]
    %v4762 = vld [vmem:[%s4750 + $0x2c] sm:$0xf]
    %v4763 = vld [vmem:[%s4750 + $0x30] sm:$0xf]
    %v4764 = vld [vmem:[%s4750 + $0x34] sm:$0xf]
    %v4765 = vld [vmem:[%s4750 + $0x38] sm:$0xf]
    %v4766 = vld [vmem:[%s4750 + $0x3c] sm:$0xf]
    %v4768 = vrot.slane %v4643, 1
    %v4786 = vunpack.c.l.b16 %v4751
    %v4787 = vunpack.c.l.b16 %v4752
    %v4788 = vunpack.c.l.b16 %v4753
    %v4789 = vunpack.c.l.b16 %v4754
    %v4790 = vunpack.c.l.b16 %v4755
    %v4791 = vunpack.c.l.b16 %v4756
    %v4792 = vunpack.c.l.b16 %v4757
    %v4793 = vunpack.c.l.b16 %v4758
    %v4794 = vunpack.c.l.b16 %v4759
    %v4795 = vunpack.c.l.b16 %v4760
    %v4796 = vunpack.c.l.b16 %v4761
    %v4797 = vunpack.c.l.b16 %v4762
    %v4798 = vunpack.c.l.b16 %v4763
    %v4799 = vunpack.c.l.b16 %v4764
    %v4800 = vunpack.c.l.b16 %v4765
    %v4801 = vunpack.c.l.b16 %v4766
    %v4802 = vpack.c.b16 %v4787, %v4786
    %v4803 = vpack.c.b16 %v4789, %v4788
    %v4804 = vpack.c.b16 %v4791, %v4790
    %v4805 = vpack.c.b16 %v4793, %v4792
    %v4806 = vpack.c.b16 %v4795, %v4794
    %v4807 = vpack.c.b16 %v4797, %v4796
    %v4808 = vpack.c.b16 %v4799, %v4798
    %v4809 = vpack.c.b16 %v4801, %v4800
    %4818 = vmatprep.subr.bf16.mxu0 0
    %4819 = vmatpush1.bf16.msra.mxu0 %v4809
    %4820 = vmatprep.subr.bf16.mxu0 0
    %4821 = vmatpush1.bf16.msra.mxu0 %v4808
    %4822 = vmatprep.subr.bf16.mxu0 0
    %4823 = vmatpush1.bf16.msra.mxu0 %v4807
    %4824 = vmatprep.subr.bf16.mxu0 0
    %4825 = vmatpush1.bf16.msra.mxu0 %v4806
    %4826 = vmatprep.subr.bf16.mxu0 0
    %4827 = vmatpush1.bf16.msra.mxu0 %v4805
    %4828 = vmatprep.subr.bf16.mxu0 0
    %4829 = vmatpush1.bf16.msra.mxu0 %v4804
    %4830 = vmatprep.subr.bf16.mxu0 0
    %4831 = vmatpush1.bf16.msra.mxu0 %v4803
    %4832 = vmatprep.subr.bf16.mxu0 0
    %4833 = vmatpush1.bf16.msra.mxu0 %v4802
    %4834 = vmatprep.subr.bf16.mxu0 0
    %4835 = vmatpush2.bf16.msra.mxu0 0
    %4836 = vmatprep.subr.bf16.mxu0 0
    %4837 = vmatpush2.bf16.msra.mxu0 0
    %4838 = vmatprep.subr.bf16.mxu0 0
    %4839 = vmatpush2.bf16.msra.mxu0 0
    %4840 = vmatprep.subr.bf16.mxu0 0
    %4841 = vmatpush2.bf16.msra.mxu0 0
    %4842 = vmatprep.subr.bf16.mxu0 0
    %4843 = vmatpush2.bf16.msra.mxu0 0
    %4844 = vmatprep.subr.bf16.mxu0 0
    %4845 = vmatpush2.bf16.msra.mxu0 0
    %4846 = vmatprep.subr.bf16.mxu0 0
    %4847 = vmatpush2.bf16.msra.mxu0 0
    %4848 = vmatprep.subr.bf16.mxu0 0
    %4849 = vmatpush2.bf16.msra.mxu0 0
    %4850 = vmatprep.mubr.bf16.mxu0 0
    %4851 = vmatmul.mubr.bf16.gmra.mxu0 %v4768
    %v4852 = vpop.f32.mrf.mxu0
    %v4853 = vadd.f32 0.0, %v4852
    %v4854 = vpop.f32.mrf.mxu0
    %v4855 = vpop.f32.mrf.mxu0
    %v4856 = vpop.f32.mrf.mxu0
    %4857 = vdwg.mxu0
    %v4858 = vadd.f32 %v4749, %v4853
    %v4859 = vld [vmem:[%s5] sm:$0x1]
    %v4861 = vlaneseq
    %v4862 = vshrl.u32 %v4861, 7
    %v4863 = vsub.s32 0, %v4862
    %v4864 = vrot.slane %v4859, %v4863
    %v4866 = vadd.f32 %v4858, %v4864
    %v4867 = vmax.f32 %v4866, 0.0
    %v4868 = vld [vmem:[%s6] sm:$0xff]
    %v4869 = vld [vmem:[%s6 + $0x8] sm:$0xff]
    %v4870 = vld [vmem:[%s6 + $0x10] sm:$0xff]
    %v4871 = vld [vmem:[%s6 + $0x18] sm:$0xff]
    %v4872 = vld [vmem:[#allocation2] sm:$0x1]
    %v4874 = vlaneseq
    %v4875 = vshrl.u32 %v4874, 7
    %v4876 = vsub.s32 0, %v4875
    %v4877 = vrot.slane %v4872, %v4876
    %vm4879 = vcmask 261120
    %v4881 = vsel %vm4879, %v4867, 0
    %4883 = vmatprep.subr.mxu0 0.0
    %4884 = vmatpush1.msra.mxu0 0.0
    %4885 = vmatprep.subr.mxu0 0.0
    %4886 = vmatpush1.msra.mxu0 0.0
    %4887 = vmatprep.subr.mxu0 0.0
    %4888 = vmatpush1.msra.mxu0 0.0
    %4889 = vmatprep.subr.mxu0 0.0
    %4890 = vmatpush1.msra.mxu0 0.0
    %4891 = vmatprep.subr.mxu0 0.0
    %4892 = vmatpush1.msra.mxu0 0.0
    %4893 = vmatprep.subr.mxu0 0.0
    %4894 = vmatpush1.msra.mxu0 0.0
    %4895 = vmatprep.subr.mxu0 0.0
    %4896 = vmatpush1.msra.mxu0 0.0
    %4897 = vmatprep.subr.mxu0 0.0
    %4898 = vmatpush1.msra.mxu0 0.0
    %4899 = vmatprep.subr.mxu0 0.0
    %4900 = vmatpush1.msra.mxu0 0.0
    %4901 = vmatprep.subr.mxu0 0.0
    %4902 = vmatpush1.msra.mxu0 0.0
    %4903 = vmatprep.subr.mxu0 0.0
    %4904 = vmatpush1.msra.mxu0 0.0
    %4905 = vmatprep.subr.mxu0 0.0
    %4906 = vmatpush1.msra.mxu0 0.0
    %4907 = vmatprep.subr.mxu0 0.0
    %4908 = vmatpush1.msra.mxu0 %v4871
    %4909 = vmatprep.subr.mxu0 0.0
    %4910 = vmatpush1.msra.mxu0 %v4870
    %4911 = vmatprep.subr.mxu0 0.0
    %4912 = vmatpush1.msra.mxu0 %v4869
    %4913 = vmatprep.subr.mxu0 0.0
    %4914 = vmatpush1.msra.mxu0 %v4868
    %4915 = vmatprep.subr.mxu0 0.0
    %4916 = vmatpush2.msra.mxu0 0.0
    %4917 = vmatprep.subr.mxu0 0.0
    %4918 = vmatpush2.msra.mxu0 0.0
    %4919 = vmatprep.subr.mxu0 0.0
    %4920 = vmatpush2.msra.mxu0 0.0
    %4921 = vmatprep.subr.mxu0 0.0
    %4922 = vmatpush2.msra.mxu0 0.0
    %4923 = vmatprep.subr.mxu0 0.0
    %4924 = vmatpush2.msra.mxu0 0.0
    %4925 = vmatprep.subr.mxu0 0.0
    %4926 = vmatpush2.msra.mxu0 0.0
    %4927 = vmatprep.subr.mxu0 0.0
    %4928 = vmatpush2.msra.mxu0 0.0
    %4929 = vmatprep.subr.mxu0 0.0
    %4930 = vmatpush2.msra.mxu0 0.0
    %4931 = vmatprep.subr.mxu0 0.0
    %4932 = vmatpush2.msra.mxu0 0.0
    %4933 = vmatprep.subr.mxu0 0.0
    %4934 = vmatpush2.msra.mxu0 0.0
    %4935 = vmatprep.subr.mxu0 0.0
    %4936 = vmatpush2.msra.mxu0 0.0
    %4937 = vmatprep.subr.mxu0 0.0
    %4938 = vmatpush2.msra.mxu0 0.0
    %4939 = vmatprep.subr.mxu0 0.0
    %4940 = vmatpush2.msra.mxu0 0.0
    %4941 = vmatprep.subr.mxu0 0.0
    %4942 = vmatpush2.msra.mxu0 0.0
    %4943 = vmatprep.subr.mxu0 0.0
    %4944 = vmatpush2.msra.mxu0 0.0
    %4945 = vmatprep.subr.mxu0 0.0
    %4946 = vmatpush2.msra.mxu0 0.0
    %4947 = vmatprep.mubr.f32.mxu0 0.0
    %4948 = vmatmul.mubr.f32.gmra.mxu0 %v4881
    %v4949 = vpop.f32.mrf.mxu0
    %v4950 = vadd.f32 %v4877, %v4949
    %v4951 = vpop.f32.mrf.mxu0
    %4952 = vdwg.mxu0
    %v4953 = vtanh.pop %v4950
    %vm4954 = vcmask 1024
    %4955 = vst.msk [vmem:[%s9] sm:$0x3] %vm4954, %v4953
    %vm4956 = vcmask 312576
    %v4957 = vsel %vm4956, %v4866, -inf
    %4958 = vmax.xlane.f32.xlu0 %v4957
    %v4959 = vpop.xlane.xlu0 %4958
    %v4960 = vsub.f32 %v4866, %v4959
    %v4961 = vmul.f32 %v4960, 1.442695
    %v4962 = vpow.pop %v4961
    %4964 = vrot.lane.b32.xlu0 %v4962, 96
    %v4965 = vpop.permute.xlu0 %4964
    %vm4967 = vcmask 50176
    %v4968 = vsel %vm4967, %v4965, 0.0
    %4969 = vadd.xlane.f32.xlu0 %v4968
    %v4970 = vpop.xlane.xlu0 %4969
    %v4971 = vrcp.pop %v4970
    %v4972 = vmul.f32 %v4962, %v4971
    %4974 = vrot.lane.b32.xlu0 %v4972, 96
    %v4975 = vpop.permute.xlu0 %4974
    %4977 = vst.msk [vmem:[#allocation3] sm:$0x3] %vm4967, %v4975
    // Predicated region
    $region34: #{output_layer_forward.1} parent=1 // pred_check
      _
    $region35: #{output_layer_forward.1} parent=1 // pred_check_branch
      %4979 = sbr.rel (0) target = $region37
    $region36: #{output_layer_forward.1} parent=1 // pred_region
      %s4981 = ssub.s32 32, 32
      %4982 = vsyncadd [#allocation4], %s4981
      %s4984 = sshll.u32 [#allocation3], 4
      %s4985 = int_to_ptr.vmem [resolvable:$true] %s4984
      %4987 = dma.vmem_to_hbm [thread:$0]  %s4985, 32, %s8, [#allocation4]
    $region37: #{output_layer_forward.1} parent=1 // pred_fallthru
      _
    // Predicated region
    $region38: #{output_layer_forward.1} parent=1 // pred_check
      _
    $region39: #{output_layer_forward.1} parent=1 // pred_check_branch
      %4989 = sbr.rel (0) target = $region41
    $region40: #{output_layer_forward.1} parent=1 // pred_region
      _
    $region41: #{output_layer_forward.1} parent=1 // pred_fallthru
      _
    // Predicated region
    $region42: #{output_layer_forward.1} parent=1 // pred_check
      _
    $region43: #{output_layer_forward.1} parent=1 // pred_check_branch
      %4991 = sbr.rel (0) target = $region45
    $region44: #{output_layer_forward.1} parent=1 // pred_region
      %4992 = dma.done [#allocation4], 32
    $region45: #{output_layer_forward.1} parent=1 // pred_fallthru
      _
    // Predicated region
    $region46: #{output_layer_forward.1} parent=1 // pred_check
      _
    $region47: #{output_layer_forward.1} parent=1 // pred_check_branch
      %4994 = sbr.rel (0) target = $region49
    $region48: #{output_layer_forward.1} parent=1 // pred_region
      _
    $region49: #{output_layer_forward.1} parent=1 // pred_fallthru
      _
    %4995 = vsyncpa [#allocation4], 1

</llo_original>
